<compile_context>
chip_gen: v7x
topology: tpu7x:2x2x1
jax: 0.10.0
libtpu: 0.0.40
codegen_flags: <defaults>
</compile_context>

<pallas_src>
import functools

import jax
import jax.numpy as jnp
from jax.experimental import pallas as pl
from jax.experimental.pallas import tpu as pltpu

BN_EPS = 1e-5


def _round_up(x, m):
    return (x + m - 1) // m * m


# --------------------------------------------------------------------------------------
# Fused Bottleneck kernel
# --------------------------------------------------------------------------------------
def _bottleneck_kernel(*refs, H, W, Wrow, stride, has_downsample):
    if has_downsample:
        (x_ref, w1_ref, w2_ref, w3_ref, wd_ref,
         b1_ref, b2_ref, b3_ref, bd_ref, o_ref, p1_ref) = refs
    else:
        (x_ref, w1_ref, w2_ref, w3_ref,
         b1_ref, b2_ref, b3_ref, o_ref, p1_ref) = refs
        wd_ref = bd_ref = None

    Cin = x_ref.shape[-1]
    P = w1_ref.shape[-1]
    Cout = w3_ref.shape[-1]
    Ho, Wo = H // stride, W // stride
    R = p1_ref.shape[0]
    top = 2 * Wrow                      # first flat row group holding image data
    interior_end = (H + 2) * Wrow       # one past the last data row group

    # bf16 cast happens in VMEM (no separate XLA cast pass over HBM).
    x = x_ref[...].astype(jnp.bfloat16).reshape(H, W, Cin)
    x2d = x.reshape(H * W, Cin)

    # ---- conv1 (1x1) + folded BN + ReLU ----------------------------------------------
    a1 = jnp.dot(x2d, w1_ref[...], preferred_element_type=jnp.float32)
    a1 = jnp.maximum(a1 + b1_ref[...], 0.0).astype(jnp.bfloat16)

    # ---- lay the conv1 activation into the flat, spatially padded scratch -------------
    # Flat row (oh + 2) * Wrow + ow holds image pixel (oh, ow); columns [W, Wrow) of
    # each row group and the top/bottom halo row groups are conv2's zero padding.
    # Invariant: the interior [top, interior_end) (data + its zero gap columns) is fully
    # rewritten every grid step by one dense aligned store; only the small halos are
    # re-zeroed here.
    p1_ref[0:top, :] = jnp.zeros((top, P), jnp.bfloat16)
    p1_ref[interior_end:R, :] = jnp.zeros((R - interior_end, P), jnp.bfloat16)
    a1_pad = jnp.concatenate(
        [a1.reshape(H, W, P), jnp.zeros((H, Wrow - W, P), jnp.bfloat16)], axis=1)
    p1_ref[top:interior_end, :] = a1_pad.reshape(H * Wrow, P)

    # ---- conv2 (3x3, pad=1) + folded BN + ReLU ----------------------------------------
    # Output pixel (i, j) accumulates scratch row (kh+1)*Wrow + (kw-1) + (i*Wrow + j),
    # so every tap is a single contiguous 2-D slice of the scratch; accumulator rows
    # whose column index lands in [W, Wrow) are garbage and are dropped afterwards.
    acc2 = jnp.zeros((H * Wrow, P), jnp.float32)
    for kh in range(3):
        for kw in range(3):
            base = (kh + 1) * Wrow + (kw - 1)
            tap = p1_ref[base:base + H * Wrow, :]
            acc2 = acc2 + jnp.dot(tap, w2_ref[3 * kh + kw],
                                  preferred_element_type=jnp.float32)
    a2 = jnp.maximum(acc2 + b2_ref[...], 0.0)
    a2 = a2.reshape(H, Wrow, P)[:, :W, :]              # drop garbage / halo columns
    if stride > 1:
        # conv2's stride applied here, so everything downstream (conv3, residual,
        # epilogue, output store) only touches Ho*Wo rows.
        a2 = a2.reshape(Ho, stride, Wo, stride, P)[:, 0, :, 0, :]
    a2 = a2.reshape(Ho * Wo, P).astype(jnp.bfloat16)

    # ---- conv3 (1x1) + folded BN -------------------------------------------------------
    a3 = jnp.dot(a2, w3_ref[...], preferred_element_type=jnp.float32) + b3_ref[...]

    # ---- residual branch (identity or strided 1x1 projection) + final ReLU -------------
    if has_downsample:
        xs = x
        if stride > 1:
            xs = xs.reshape(Ho, stride, Wo, stride, Cin)[:, 0, :, 0, :]
        res = jnp.dot(xs.reshape(Ho * Wo, Cin), wd_ref[...],
                      preferred_element_type=jnp.float32) + bd_ref[...]
    else:
        res = x2d.astype(jnp.float32)                  # stride==1 and Cin==Cout (asserted)

    out = jnp.maximum(a3 + res, 0.0)
    o_ref[...] = out.reshape(1, Ho, Wo, Cout).astype(o_ref.dtype)


def _const_spec(shape):
    """Full-array block, constant across the grid, single-buffered (never re-fetched)."""
    zeros = (0,) * len(shape)
    return pl.BlockSpec(shape, lambda b: zeros, pipeline_mode=pl.Buffered(1))


def _fused_bottleneck_call(x_nhwc, prep):
    """x_nhwc: (B, H, W, Cin), any float dtype (cast to bf16 inside the kernel)."""
    B, H, W, Cin = x_nhwc.shape
    stride = prep["stride"]
    has_ds = "wd" in prep
    P = prep["w1"].shape[1]
    Cout = prep["w3"].shape[1]
    assert Cin == prep["cin"], "input channel mismatch"
    if not has_ds:
        assert stride == 1 and Cin == Cout, "identity residual needs matching shapes"
    # TODO(synk): odd spatial extents with stride>1 would need extra padding of the
    #             in-kernel subsample reshape; ResNet stages use even extents.
    assert H % stride == 0 and W % stride == 0
    Ho, Wo = H // stride, W // stride

    Wrow = _round_up(W + 2, 8)            # 8-aligned row pitch of the flat scratch
    R = (H + 3) * Wrow + 8                # top halo + data rows + bottom halo

    in_specs = [pl.BlockSpec((1, H, W, Cin), lambda b: (b, 0, 0, 0)),
                _const_spec((Cin, P)), _const_spec((9, P, P)), _const_spec((P, Cout))]
    args = [x_nhwc, prep["w1"], prep["w2"], prep["w3"]]
    if has_ds:
        in_specs.append(_const_spec((Cin, Cout)))
        args.append(prep["wd"])
    in_specs += [_const_spec((1, P)), _const_spec((1, P)), _const_spec((1, Cout))]
    args += [prep["b1"], prep["b2"], prep["b3"]]
    if has_ds:
        in_specs.append(_const_spec((1, Cout)))
        args.append(prep["bd"])

    kernel = functools.partial(_bottleneck_kernel, H=H, W=W, Wrow=Wrow,
                               stride=stride, has_downsample=has_ds)

    # VMEM budget computed from actual buffer sizes; floored for compiler temporaries
    # and capped generation-safe (v7x: 64 MiB physical per TensorCore).
    itemsize = jnp.dtype(x_nhwc.dtype).itemsize
    est = (2 * H * W * Cin * itemsize                        # input block, double-buffered
           + 2 * Ho * Wo * Cout * 2                          # bf16 output block, double-buffered
           + 2 * (Cin * P + 9 * P * P + P * Cout + (Cin * Cout if has_ds else 0))
           + 4 * 4 * max(P, Cout)                            # biases (f32, single-buffered)
           + 2 * R * P                                       # conv1 activation scratch
           + 4 * (3 * H * Wrow * P + 4 * Ho * Wo * Cout))    # live f32 intermediates
    vmem_limit = int(min(max(3 * est, 16 << 20), 48 << 20))

    return pl.pallas_call(
        kernel,
        out_shape=jax.ShapeDtypeStruct((B, Ho, Wo, Cout), jnp.bfloat16),
        grid=(B,),
        in_specs=in_specs,
        out_specs=pl.BlockSpec((1, Ho, Wo, Cout), lambda b: (b, 0, 0, 0)),
        scratch_shapes=[pltpu.VMEM((R, P), jnp.bfloat16)],
        compiler_params=pltpu.CompilerParams(
            dimension_semantics=("parallel",),   # >=2 batch blocks -> both TCs on v7x
            vmem_limit_bytes=vmem_limit),
    )(*args)


# --------------------------------------------------------------------------------------
# Parameter prep: fold eval-mode BN into weights, lay out for the MXU (once).
# --------------------------------------------------------------------------------------
def _fold_bn(layer):
    bn = layer["bn"]
    s = bn["gamma"] * jax.lax.rsqrt(bn["var"] + BN_EPS)
    w = layer["w"] * s[:, None, None, None]
    b = bn["beta"] - bn["mean"] * s
    return w, b


def prepare_bottleneck(params):
    """Fold BN and transpose/reshape weights to matmul layout.  No channel padding:
    full-array (unpadded) blocks are used, so small channel counts do not multiply or
    move zeros; production ResNet widths (multiples of 128) are lane-dense as-is."""
    w1, b1 = _fold_bn(params["conv1"])   # (P,  Cin, 1, 1)
    w2, b2 = _fold_bn(params["conv2"])   # (P,  P,   3, 3)
    w3, b3 = _fold_bn(params["conv3"])   # (EP, P,   1, 1)
    P, Cin = w1.shape[:2]
    EP = w3.shape[0]

    prep = dict(
        stride=int(params["stride"]), cin=int(Cin), cout=int(EP),
        w1=jnp.transpose(w1[:, :, 0, 0], (1, 0)).astype(jnp.bfloat16),          # (Cin, P)
        w2=jnp.transpose(w2, (2, 3, 1, 0)).reshape(9, P, P).astype(jnp.bfloat16),
        w3=jnp.transpose(w3[:, :, 0, 0], (1, 0)).astype(jnp.bfloat16),          # (P, EP)
        b1=b1.reshape(1, P).astype(jnp.float32),
        b2=b2.reshape(1, P).astype(jnp.float32),
        b3=b3.reshape(1, EP).astype(jnp.float32),
    )
    if "downsample" in params:
        wd, bd = _fold_bn(params["downsample"])                                  # (EP, Cin, 1, 1)
        prep["wd"] = jnp.transpose(wd[:, :, 0, 0], (1, 0)).astype(jnp.bfloat16)  # (Cin, EP)
        prep["bd"] = bd.reshape(1, EP).astype(jnp.float32)
    return prep


# --------------------------------------------------------------------------------------
# Forward passes
# --------------------------------------------------------------------------------------
def bottleneck_forward_nhwc(prep, x_nhwc):
    """Primary path: NHWC input (f32 or bf16), NHWC bf16 output, no wrapper passes."""
    return _fused_bottleneck_call(x_nhwc, prep)


def bottleneck_forward(prep, x_nchw):
    """Module-compatible wrapper (NCHW in / NCHW out, like the PyTorch Bottleneck)."""
    y = bottleneck_forward_nhwc(prep, jnp.transpose(x_nchw, (0, 2, 3, 1)))
    return jnp.transpose(y, (0, 3, 1, 2))


# --------------------------------------------------------------------------------------
# Plain-XLA reference (same bf16 rounding points as the kernel, NCHW in/out, f32 out)
# --------------------------------------------------------------------------------------
def bottleneck_reference(p, x_nchw):
    bf = lambda t: t.astype(jnp.bfloat16).astype(jnp.float32)

    def fold(layer):
        bn = layer["bn"]
        s = bn["gamma"] * jax.lax.rsqrt(bn["var"] + BN_EPS)
        w = bf(layer["w"] * s[:, None, None, None])
        b = (bn["beta"] - bn["mean"] * s)[None, :, None, None]
        return w, b

    def conv(x, w, stride, pad):
        return jax.lax.conv_general_dilated(
            x, w, (stride, stride), [(pad, pad), (pad, pad)],
            dimension_numbers=("NCHW", "OIHW", "NCHW"),
            precision=jax.lax.Precision.HIGHEST)

    s = p["stride"]
    x = bf(x_nchw)
    w1, b1 = fold(p["conv1"]); w2, b2 = fold(p["conv2"]); w3, b3 = fold(p["conv3"])
    o = bf(jnp.maximum(conv(x, w1, 1, 0) + b1, 0.0))
    o = bf(jnp.maximum(conv(o, w2, s, 1) + b2, 0.0))
    o = conv(o, w3, 1, 0) + b3
    if "downsample" in p:
        wd, bd = fold(p["downsample"])
        r = conv(x, wd, s, 0) + bd
    else:
        r = x
    return jnp.maximum(o + r, 0.0)


# --------------------------------------------------------------------------------------
# Deterministic synthetic params
# --------------------------------------------------------------------------------------
class _KeyGen:
    def __init__(self, key):
        self.key = key

    def __call__(self):
        self.key, sub = jax.random.split(self.key)
        return sub


def _conv_w(key, o, i, kh, kw):
    fan_in = i * kh * kw
    return jax.random.normal(key, (o, i, kh, kw), jnp.float32) / jnp.sqrt(float(fan_in))


def _bn_p(key, c):
    k1, k2, k3, k4 = jax.random.split(key, 4)
    return dict(
        gamma=1.0 + 0.1 * jax.random.normal(k1, (c,), jnp.float32),
        beta=0.1 * jax.random.normal(k2, (c,), jnp.float32),
        mean=0.05 * jax.random.normal(k3, (c,), jnp.float32),
        var=1.0 + 0.1 * jax.random.uniform(k4, (c,), jnp.float32),
    )


def init_bottleneck_params(key, in_planes, planes, stride, expansion, with_downsample):
    kg = _KeyGen(key)
    p = dict(
        stride=stride,
        conv1=dict(w=_conv_w(kg(), planes, in_planes, 1, 1), bn=_bn_p(kg(), planes)),
        conv2=dict(w=_conv_w(kg(), planes, planes, 3, 3), bn=_bn_p(kg(), planes)),
        conv3=dict(w=_conv_w(kg(), expansion * planes, planes, 1, 1),
                   bn=_bn_p(kg(), expansion * planes)),
    )
    if with_downsample:
        p["downsample"] = dict(w=_conv_w(kg(), expansion * planes, in_planes, 1, 1),
                               bn=_bn_p(kg(), expansion * planes))
    return p


# --------------------------------------------------------------------------------------
if __name__ == "__main__":
    key = jax.random.PRNGKey(0)
    k1, k2, kx = jax.random.split(key, 3)

    B, H, W = 2, 16, 16
    planes, expansion = 8, 4
    in_planes = planes * expansion          # 32

    # Block A: identity residual (stride=1, no downsample).
    params_a = init_bottleneck_params(k1, in_planes, planes, stride=1,
                                      expansion=expansion, with_downsample=False)
    # Block B: projection residual (stride=2, 1x1-conv + BN downsample).
    params_b = init_bottleneck_params(k2, in_planes, planes, stride=2,
                                      expansion=expansion, with_downsample=True)

    prep_a = prepare_bottleneck(params_a)
    prep_b = prepare_bottleneck(params_b)

    x_nchw = jax.random.normal(kx, (B, in_planes, H, W), jnp.float32)
    x_nhwc = jnp.transpose(x_nchw, (0, 2, 3, 1))

    # Primary NHWC chain: cast, stride and output layout are handled in-kernel.
    y1 = bottleneck_forward_nhwc(prep_a, x_nhwc)            # (B, 16, 16, 32) bf16
    y2 = bottleneck_forward_nhwc(prep_b, y1)                # (B,  8,  8, 32) bf16
    jax.block_until_ready((y1, y2))

    assert y1.shape == (B, H, W, expansion * planes) and y1.dtype == jnp.bfloat16
    assert y2.shape == (B, H // 2, W // 2, expansion * planes)

    # Module-compatible NCHW wrapper produces the same values.
    y1_nchw_wrap = bottleneck_forward(prep_a, x_nchw)
    y1_nchw = jnp.transpose(y1, (0, 3, 1, 2)).astype(jnp.float32)
    y2_nchw = jnp.transpose(y2, (0, 3, 1, 2)).astype(jnp.float32)
    assert jnp.allclose(y1_nchw_wrap.astype(jnp.float32), y1_nchw)

    # Numerical check against a plain-XLA reference with matching bf16 rounding points.
    r1 = bottleneck_reference(params_a, x_nchw)
    r2 = bottleneck_reference(params_b, y1_nchw)
    for got, ref in ((y1_nchw, r1), (y2_nchw, r2)):
        err = float(jnp.max(jnp.abs(got - ref)))
        tol = 1e-2 + 1e-2 * float(jnp.max(jnp.abs(ref)))
        assert err < tol, f"kernel/reference mismatch: {err} (tol {tol})"

    print("KERNEL_OK")
</pallas_src>

<mosaic_0001>
module attributes {stable_mosaic.version = 11 : i64} {
  func.func @_bottleneck_kernel(%arg0: i32, %arg1: memref<1x16x16x32xf32, #tpu.memory_space<vmem>>, %arg2: memref<32x8xbf16, #tpu.memory_space<vmem>>, %arg3: memref<9x8x8xbf16, #tpu.memory_space<vmem>>, %arg4: memref<8x32xbf16, #tpu.memory_space<vmem>>, %arg5: memref<1x8xf32, #tpu.memory_space<vmem>>, %arg6: memref<1x8xf32, #tpu.memory_space<vmem>>, %arg7: memref<1x32xf32, #tpu.memory_space<vmem>>, %arg8: memref<1x16x16x32xbf16, #tpu.memory_space<vmem>>, %arg9: memref<464x8xbf16, #tpu.memory_space<vmem>>) attributes {dimension_semantics = [#tpu.dimension_semantics<parallel>], iteration_bounds = array<i64: 2>, scalar_prefetch = 0 : i64, scratch_operands = 1 : i64, tpu.core_type = #tpu.core_type<tc>, window_params = [{transform_indices = @transform_0, window_bounds = array<i64: 1, 16, 16, 32>}, {pipeline_mode = #tpu.pipeline_mode<synchronous>, transform_indices = @transform_1, window_bounds = array<i64: 32, 8>}, {pipeline_mode = #tpu.pipeline_mode<synchronous>, transform_indices = @transform_2, window_bounds = array<i64: 9, 8, 8>}, {pipeline_mode = #tpu.pipeline_mode<synchronous>, transform_indices = @transform_3, window_bounds = array<i64: 8, 32>}, {pipeline_mode = #tpu.pipeline_mode<synchronous>, transform_indices = @transform_4, window_bounds = array<i64: 1, 8>}, {pipeline_mode = #tpu.pipeline_mode<synchronous>, transform_indices = @transform_5, window_bounds = array<i64: 1, 8>}, {pipeline_mode = #tpu.pipeline_mode<synchronous>, transform_indices = @transform_6, window_bounds = array<i64: 1, 32>}, {transform_indices = @transform_7, window_bounds = array<i64: 1, 16, 16, 32>}]} {
    %c0 = arith.constant 0 : index
    %c0_0 = arith.constant 0 : index
    %c0_1 = arith.constant 0 : index
    %c0_2 = arith.constant 0 : index
    %0 = vector.load %arg1[%c0, %c0_0, %c0_1, %c0_2] : memref<1x16x16x32xf32, #tpu.memory_space<vmem>>, vector<1x16x16x32xf32>
    %1 = arith.truncf %0 : vector<1x16x16x32xf32> to vector<1x16x16x32xbf16>
    %2 = vector.shape_cast %1 : vector<1x16x16x32xbf16> to vector<16x16x32xbf16>
    %3 = vector.shape_cast %2 : vector<16x16x32xbf16> to vector<256x32xbf16>
    %c0_3 = arith.constant 0 : index
    %c0_4 = arith.constant 0 : index
    %4 = vector.load %arg2[%c0_3, %c0_4] : memref<32x8xbf16, #tpu.memory_space<vmem>>, vector<32x8xbf16>
    %cst = arith.constant dense<0.000000e+00> : vector<256x8xf32>
    %5 = tpu.matmul %3, %4, %cst {dimension_numbers = #tpu.dot_dimension_numbers<[1], [0], [0], [1], [0, 0, 1, 1], [], []>} : vector<256x32xbf16>, vector<32x8xbf16>, vector<256x8xf32> -> vector<256x8xf32>
    %c0_5 = arith.constant 0 : index
    %c0_6 = arith.constant 0 : index
    %6 = vector.load %arg5[%c0_5, %c0_6] : memref<1x8xf32, #tpu.memory_space<vmem>>, vector<1x8xf32>
    %7 = vector.broadcast %6 : vector<1x8xf32> to vector<256x8xf32>
    %8 = arith.addf %5, %7 : vector<256x8xf32>
    %cst_7 = arith.constant 0.000000e+00 : f32
    %9 = vector.broadcast %cst_7 : f32 to vector<256x8xf32>
    %10 = arith.maximumf %8, %9 : vector<256x8xf32>
    %11 = arith.truncf %10 : vector<256x8xf32> to vector<256x8xbf16>
    %cst_8 = arith.constant 0.000000e+00 : bf16
    %12 = vector.broadcast %cst_8 : bf16 to vector<48x8xbf16>
    %c0_9 = arith.constant 0 : index
    %c0_10 = arith.constant 0 : index
    %13 = vector.load %arg9[%c0_9, %c0_10] : memref<464x8xbf16, #tpu.memory_space<vmem>>, vector<48x8xbf16>
    tpu.vector_store %arg9[%c0_9, %c0_10], %12 {strides = array<i32>} : memref<464x8xbf16, #tpu.memory_space<vmem>>, vector<48x8xbf16>,
    %cst_11 = arith.constant 0.000000e+00 : bf16
    %14 = vector.broadcast %cst_11 : bf16 to vector<32x8xbf16>
    %c432 = arith.constant 432 : index
    %c0_12 = arith.constant 0 : index
    %15 = vector.load %arg9[%c432, %c0_12] : memref<464x8xbf16, #tpu.memory_space<vmem>>, vector<32x8xbf16>
    tpu.vector_store %arg9[%c432, %c0_12], %14 {strides = array<i32>} : memref<464x8xbf16, #tpu.memory_space<vmem>>, vector<32x8xbf16>,
    %16 = vector.shape_cast %11 : vector<256x8xbf16> to vector<16x16x8xbf16>
    %cst_13 = arith.constant 0.000000e+00 : bf16
    %17 = vector.broadcast %cst_13 : bf16 to vector<16x8x8xbf16>
    %18 = tpu.concatenate %16, %17 in 1 : vector<16x16x8xbf16>, vector<16x8x8xbf16> -> vector<16x24x8xbf16>
    %19 = vector.shape_cast %18 : vector<16x24x8xbf16> to vector<384x8xbf16>
    %c48 = arith.constant 48 : index
    %c0_14 = arith.constant 0 : index
    %20 = vector.load %arg9[%c48, %c0_14] : memref<464x8xbf16, #tpu.memory_space<vmem>>, vector<384x8xbf16>
    tpu.vector_store %arg9[%c48, %c0_14], %19 {strides = array<i32>} : memref<464x8xbf16, #tpu.memory_space<vmem>>, vector<384x8xbf16>,
    %cst_15 = arith.constant 0.000000e+00 : f32
    %21 = vector.broadcast %cst_15 : f32 to vector<384x8xf32>
    %c23 = arith.constant 23 : index
    %c0_16 = arith.constant 0 : index
    %22 = vector.load %arg9[%c23, %c0_16] : memref<464x8xbf16, #tpu.memory_space<vmem>>, vector<384x8xbf16>
    %c0_17 = arith.constant 0 : index
    %c0_18 = arith.constant 0 : index
    %c0_19 = arith.constant 0 : index
    %23 = vector.load %arg3[%c0_17, %c0_18, %c0_19] : memref<9x8x8xbf16, #tpu.memory_space<vmem>>, vector<1x8x8xbf16>
    %24 = vector.shape_cast %23 : vector<1x8x8xbf16> to vector<8x8xbf16>
    %cst_20 = arith.constant dense<0.000000e+00> : vector<384x8xf32>
    %25 = tpu.matmul %22, %24, %cst_20 {dimension_numbers = #tpu.dot_dimension_numbers<[1], [0], [0], [1], [0, 0, 1, 1], [], []>} : vector<384x8xbf16>, vector<8x8xbf16>, vector<384x8xf32> -> vector<384x8xf32>
    %26 = arith.addf %21, %25 : vector<384x8xf32>
    %c24 = arith.constant 24 : index
    %c0_21 = arith.constant 0 : index
    %27 = vector.load %arg9[%c24, %c0_21] : memref<464x8xbf16, #tpu.memory_space<vmem>>, vector<384x8xbf16>
    %c1 = arith.constant 1 : index
    %c0_22 = arith.constant 0 : index
    %c0_23 = arith.constant 0 : index
    %28 = vector.load %arg3[%c1, %c0_22, %c0_23] : memref<9x8x8xbf16, #tpu.memory_space<vmem>>, vector<1x8x8xbf16>
    %29 = vector.shape_cast %28 : vector<1x8x8xbf16> to vector<8x8xbf16>
    %cst_24 = arith.constant dense<0.000000e+00> : vector<384x8xf32>
    %30 = tpu.matmul %27, %29, %cst_24 {dimension_numbers = #tpu.dot_dimension_numbers<[1], [0], [0], [1], [0, 0, 1, 1], [], []>} : vector<384x8xbf16>, vector<8x8xbf16>, vector<384x8xf32> -> vector<384x8xf32>
    %31 = arith.addf %26, %30 : vector<384x8xf32>
    %c25 = arith.constant 25 : index
    %c0_25 = arith.constant 0 : index
    %32 = vector.load %arg9[%c25, %c0_25] : memref<464x8xbf16, #tpu.memory_space<vmem>>, vector<384x8xbf16>
    %c2 = arith.constant 2 : index
    %c0_26 = arith.constant 0 : index
    %c0_27 = arith.constant 0 : index
    %33 = vector.load %arg3[%c2, %c0_26, %c0_27] : memref<9x8x8xbf16, #tpu.memory_space<vmem>>, vector<1x8x8xbf16>
    %34 = vector.shape_cast %33 : vector<1x8x8xbf16> to vector<8x8xbf16>
    %cst_28 = arith.constant dense<0.000000e+00> : vector<384x8xf32>
    %35 = tpu.matmul %32, %34, %cst_28 {dimension_numbers = #tpu.dot_dimension_numbers<[1], [0], [0], [1], [0, 0, 1, 1], [], []>} : vector<384x8xbf16>, vector<8x8xbf16>, vector<384x8xf32> -> vector<384x8xf32>
    %36 = arith.addf %31, %35 : vector<384x8xf32>
    %c47 = arith.constant 47 : index
    %c0_29 = arith.constant 0 : index
    %37 = vector.load %arg9[%c47, %c0_29] : memref<464x8xbf16, #tpu.memory_space<vmem>>, vector<384x8xbf16>
    %c3 = arith.constant 3 : index
    %c0_30 = arith.constant 0 : index
    %c0_31 = arith.constant 0 : index
    %38 = vector.load %arg3[%c3, %c0_30, %c0_31] : memref<9x8x8xbf16, #tpu.memory_space<vmem>>, vector<1x8x8xbf16>
    %39 = vector.shape_cast %38 : vector<1x8x8xbf16> to vector<8x8xbf16>
    %cst_32 = arith.constant dense<0.000000e+00> : vector<384x8xf32>
    %40 = tpu.matmul %37, %39, %cst_32 {dimension_numbers = #tpu.dot_dimension_numbers<[1], [0], [0], [1], [0, 0, 1, 1], [], []>} : vector<384x8xbf16>, vector<8x8xbf16>, vector<384x8xf32> -> vector<384x8xf32>
    %41 = arith.addf %36, %40 : vector<384x8xf32>
    %c48_33 = arith.constant 48 : index
    %c0_34 = arith.constant 0 : index
    %42 = vector.load %arg9[%c48_33, %c0_34] : memref<464x8xbf16, #tpu.memory_space<vmem>>, vector<384x8xbf16>
    %c4 = arith.constant 4 : index
    %c0_35 = arith.constant 0 : index
    %c0_36 = arith.constant 0 : index
    %43 = vector.load %arg3[%c4, %c0_35, %c0_36] : memref<9x8x8xbf16, #tpu.memory_space<vmem>>, vector<1x8x8xbf16>
    %44 = vector.shape_cast %43 : vector<1x8x8xbf16> to vector<8x8xbf16>
    %cst_37 = arith.constant dense<0.000000e+00> : vector<384x8xf32>
    %45 = tpu.matmul %42, %44, %cst_37 {dimension_numbers = #tpu.dot_dimension_numbers<[1], [0], [0], [1], [0, 0, 1, 1], [], []>} : vector<384x8xbf16>, vector<8x8xbf16>, vector<384x8xf32> -> vector<384x8xf32>
    %46 = arith.addf %41, %45 : vector<384x8xf32>
    %c49 = arith.constant 49 : index
    %c0_38 = arith.constant 0 : index
    %47 = vector.load %arg9[%c49, %c0_38] : memref<464x8xbf16, #tpu.memory_space<vmem>>, vector<384x8xbf16>
    %c5 = arith.constant 5 : index
    %c0_39 = arith.constant 0 : index
    %c0_40 = arith.constant 0 : index
    %48 = vector.load %arg3[%c5, %c0_39, %c0_40] : memref<9x8x8xbf16, #tpu.memory_space<vmem>>, vector<1x8x8xbf16>
    %49 = vector.shape_cast %48 : vector<1x8x8xbf16> to vector<8x8xbf16>
    %cst_41 = arith.constant dense<0.000000e+00> : vector<384x8xf32>
    %50 = tpu.matmul %47, %49, %cst_41 {dimension_numbers = #tpu.dot_dimension_numbers<[1], [0], [0], [1], [0, 0, 1, 1], [], []>} : vector<384x8xbf16>, vector<8x8xbf16>, vector<384x8xf32> -> vector<384x8xf32>
    %51 = arith.addf %46, %50 : vector<384x8xf32>
    %c71 = arith.constant 71 : index
    %c0_42 = arith.constant 0 : index
    %52 = vector.load %arg9[%c71, %c0_42] : memref<464x8xbf16, #tpu.memory_space<vmem>>, vector<384x8xbf16>
    %c6 = arith.constant 6 : index
    %c0_43 = arith.constant 0 : index
    %c0_44 = arith.constant 0 : index
    %53 = vector.load %arg3[%c6, %c0_43, %c0_44] : memref<9x8x8xbf16, #tpu.memory_space<vmem>>, vector<1x8x8xbf16>
    %54 = vector.shape_cast %53 : vector<1x8x8xbf16> to vector<8x8xbf16>
    %cst_45 = arith.constant dense<0.000000e+00> : vector<384x8xf32>
    %55 = tpu.matmul %52, %54, %cst_45 {dimension_numbers = #tpu.dot_dimension_numbers<[1], [0], [0], [1], [0, 0, 1, 1], [], []>} : vector<384x8xbf16>, vector<8x8xbf16>, vector<384x8xf32> -> vector<384x8xf32>
    %56 = arith.addf %51, %55 : vector<384x8xf32>
    %c72 = arith.constant 72 : index
    %c0_46 = arith.constant 0 : index
    %57 = vector.load %arg9[%c72, %c0_46] : memref<464x8xbf16, #tpu.memory_space<vmem>>, vector<384x8xbf16>
    %c7 = arith.constant 7 : index
    %c0_47 = arith.constant 0 : index
    %c0_48 = arith.constant 0 : index
    %58 = vector.load %arg3[%c7, %c0_47, %c0_48] : memref<9x8x8xbf16, #tpu.memory_space<vmem>>, vector<1x8x8xbf16>
    %59 = vector.shape_cast %58 : vector<1x8x8xbf16> to vector<8x8xbf16>
    %cst_49 = arith.constant dense<0.000000e+00> : vector<384x8xf32>
    %60 = tpu.matmul %57, %59, %cst_49 {dimension_numbers = #tpu.dot_dimension_numbers<[1], [0], [0], [1], [0, 0, 1, 1], [], []>} : vector<384x8xbf16>, vector<8x8xbf16>, vector<384x8xf32> -> vector<384x8xf32>
    %61 = arith.addf %56, %60 : vector<384x8xf32>
    %c73 = arith.constant 73 : index
    %c0_50 = arith.constant 0 : index
    %62 = vector.load %arg9[%c73, %c0_50] : memref<464x8xbf16, #tpu.memory_space<vmem>>, vector<384x8xbf16>
    %c8 = arith.constant 8 : index
    %c0_51 = arith.constant 0 : index
    %c0_52 = arith.constant 0 : index
    %63 = vector.load %arg3[%c8, %c0_51, %c0_52] : memref<9x8x8xbf16, #tpu.memory_space<vmem>>, vector<1x8x8xbf16>
    %64 = vector.shape_cast %63 : vector<1x8x8xbf16> to vector<8x8xbf16>
    %cst_53 = arith.constant dense<0.000000e+00> : vector<384x8xf32>
    %65 = tpu.matmul %62, %64, %cst_53 {dimension_numbers = #tpu.dot_dimension_numbers<[1], [0], [0], [1], [0, 0, 1, 1], [], []>} : vector<384x8xbf16>, vector<8x8xbf16>, vector<384x8xf32> -> vector<384x8xf32>
    %66 = arith.addf %61, %65 : vector<384x8xf32>
    %c0_54 = arith.constant 0 : index
    %c0_55 = arith.constant 0 : index
    %67 = vector.load %arg6[%c0_54, %c0_55] : memref<1x8xf32, #tpu.memory_space<vmem>>, vector<1x8xf32>
    %68 = vector.broadcast %67 : vector<1x8xf32> to vector<384x8xf32>
    %69 = arith.addf %66, %68 : vector<384x8xf32>
    %cst_56 = arith.constant 0.000000e+00 : f32
    %70 = vector.broadcast %cst_56 : f32 to vector<384x8xf32>
    %71 = arith.maximumf %69, %70 : vector<384x8xf32>
    %72 = vector.shape_cast %71 : vector<384x8xf32> to vector<16x24x8xf32>
    %73 = vector.extract_strided_slice %72 {offsets = [0, 0, 0], sizes = [16, 16, 8], strides = [1, 1, 1]} : vector<16x24x8xf32> to vector<16x16x8xf32>
    %74 = vector.shape_cast %73 : vector<16x16x8xf32> to vector<256x8xf32>
    %75 = arith.truncf %74 : vector<256x8xf32> to vector<256x8xbf16>
    %c0_57 = arith.constant 0 : index
    %c0_58 = arith.constant 0 : index
    %76 = vector.load %arg4[%c0_57, %c0_58] : memref<8x32xbf16, #tpu.memory_space<vmem>>, vector<8x32xbf16>
    %cst_59 = arith.constant dense<0.000000e+00> : vector<256x32xf32>
    %77 = tpu.matmul %75, %76, %cst_59 {dimension_numbers = #tpu.dot_dimension_numbers<[1], [0], [0], [1], [0, 0, 1, 1], [], []>} : vector<256x8xbf16>, vector<8x32xbf16>, vector<256x32xf32> -> vector<256x32xf32>
    %c0_60 = arith.constant 0 : index
    %c0_61 = arith.constant 0 : index
    %78 = vector.load %arg7[%c0_60, %c0_61] : memref<1x32xf32, #tpu.memory_space<vmem>>, vector<1x32xf32>
    %79 = vector.broadcast %78 : vector<1x32xf32> to vector<256x32xf32>
    %80 = arith.addf %77, %79 : vector<256x32xf32>
    %81 = arith.extf %3 : vector<256x32xbf16> to vector<256x32xf32>
    %82 = arith.addf %80, %81 : vector<256x32xf32>
    %cst_62 = arith.constant 0.000000e+00 : f32
    %83 = vector.broadcast %cst_62 : f32 to vector<256x32xf32>
    %84 = arith.maximumf %82, %83 : vector<256x32xf32>
    %85 = vector.shape_cast %84 : vector<256x32xf32> to vector<1x16x16x32xf32>
    %86 = arith.truncf %85 : vector<1x16x16x32xf32> to vector<1x16x16x32xbf16>
    %c0_63 = arith.constant 0 : index
    %c0_64 = arith.constant 0 : index
    %c0_65 = arith.constant 0 : index
    %c0_66 = arith.constant 0 : index
    %87 = vector.load %arg8[%c0_63, %c0_64, %c0_65, %c0_66] : memref<1x16x16x32xbf16, #tpu.memory_space<vmem>>, vector<1x16x16x32xbf16>
    tpu.vector_store %arg8[%c0_63, %c0_64, %c0_65, %c0_66], %86 {strides = array<i32>} : memref<1x16x16x32xbf16, #tpu.memory_space<vmem>>, vector<1x16x16x32xbf16>,
    return
  }
  func.func @transform_0(%arg0: i32) -> (i32, i32, i32, i32) {
    %c0_i32 = arith.constant 0 : i32
    %c0_i32_0 = arith.constant 0 : i32
    %c0_i32_1 = arith.constant 0 : i32
    %c0_i32_2 = arith.constant 0 : i32
    return %arg0, %c0_i32, %c0_i32_0, %c0_i32_1 : i32, i32, i32, i32
  }
  func.func @transform_1(%arg0: i32) -> (i32, i32) {
    %c0_i32 = arith.constant 0 : i32
    %c0_i32_0 = arith.constant 0 : i32
    %c0_i32_1 = arith.constant 0 : i32
    return %c0_i32, %c0_i32_0 : i32, i32
  }
  func.func @transform_2(%arg0: i32) -> (i32, i32, i32) {
    %c0_i32 = arith.constant 0 : i32
    %c0_i32_0 = arith.constant 0 : i32
    %c0_i32_1 = arith.constant 0 : i32
    %c0_i32_2 = arith.constant 0 : i32
    return %c0_i32, %c0_i32_0, %c0_i32_1 : i32, i32, i32
  }
  func.func @transform_3(%arg0: i32) -> (i32, i32) {
    %c0_i32 = arith.constant 0 : i32
    %c0_i32_0 = arith.constant 0 : i32
    %c0_i32_1 = arith.constant 0 : i32
    return %c0_i32, %c0_i32_0 : i32, i32
  }
  func.func @transform_4(%arg0: i32) -> (i32, i32) {
    %c0_i32 = arith.constant 0 : i32
    %c0_i32_0 = arith.constant 0 : i32
    %c0_i32_1 = arith.constant 0 : i32
    return %c0_i32, %c0_i32_0 : i32, i32
  }
  func.func @transform_5(%arg0: i32) -> (i32, i32) {
    %c0_i32 = arith.constant 0 : i32
    %c0_i32_0 = arith.constant 0 : i32
    %c0_i32_1 = arith.constant 0 : i32
    return %c0_i32, %c0_i32_0 : i32, i32
  }
  func.func @transform_6(%arg0: i32) -> (i32, i32) {
    %c0_i32 = arith.constant 0 : i32
    %c0_i32_0 = arith.constant 0 : i32
    %c0_i32_1 = arith.constant 0 : i32
    return %c0_i32, %c0_i32_0 : i32, i32
  }
  func.func @transform_7(%arg0: i32) -> (i32, i32, i32, i32) {
    %c0_i32 = arith.constant 0 : i32
    %c0_i32_0 = arith.constant 0 : i32
    %c0_i32_1 = arith.constant 0 : i32
    %c0_i32_2 = arith.constant 0 : i32
    return %arg0, %c0_i32, %c0_i32_0, %c0_i32_1 : i32, i32, i32, i32
  }
}

</mosaic_0001>

<llo_original>
// kernel: tpu_custom_call.1
$region0: #{tpu_custom_call.1}
  #allocation0 [shape = 'u32[]', space=smem, size = 0x4, offset = 0x4, fixed_abs, tag = 'smem constant byte address 0x4 - core index']
  #allocation1 [shape = 'u32[144,128]{1,0:T(1,128)}', space=vmem, size = 0x12000, scoped, tag = 'internal scratch']
  #allocation2 [shape = 'bf16[464,8]{1,0:T(16,128)(2,1)}', space=vmem, size = 0x1d000, scoped, tag = 'scratch operand']
  %s0 = inlined_call_operand.hbm [shape: f32[2,16,16,32], index: 0, kind: input, shape index: {}]
  %s1 = inlined_call_operand.vmem [shape: bf16[32,8], index: 1, kind: input, shape index: {}]
  %s2 = inlined_call_operand.vmem [shape: bf16[9,8,8], index: 2, kind: input, shape index: {}]
  %s3 = inlined_call_operand.vmem [shape: bf16[8,32], index: 3, kind: input, shape index: {}]
  %s4 = inlined_call_operand.vmem [shape: f32[1,8], index: 4, kind: input, shape index: {}]
  %s5 = inlined_call_operand.vmem [shape: f32[1,8], index: 5, kind: input, shape index: {}]
  %s6 = inlined_call_operand.vmem [shape: f32[1,32], index: 6, kind: input, shape index: {}]
  %s7 = inlined_call_operand.hbm [shape: bf16[2,16,16,32], index: 7, kind: output, shape index: {}]
  %s8 = sld [smem:[#allocation0]]
  $region65: #{tpu_custom_call.1} parent=0
    _
  %s10 = ssub.s32 1, %s8
  %s11 = scalar_select 0, %s10, %s8
  $region1: #{tpu_custom_call.1} parent=0
    #allocation3 [shape = 'u8[262144]{0}', space=vmem, size = 0x40000, scoped, tag = 'input window, operand 0']
    #allocation4 [shape = 's32[2]{0}', space=sflag, size = 0x8, scoped, tag = 'scoped memory for tpu_custom_call.1']
    #allocation5 [shape = 's32[2]{0}', space=sflag, size = 0x8, scoped, tag = 'scoped memory for tpu_custom_call.1']
    #allocation6 [shape = 'u8[131072]{0}', space=vmem, size = 0x20000, scoped, tag = 'output window, operand 0']
    %12 = vsyncpa [#allocation4], 0
    %s13 = scalar_lea.sflag [#allocation4], 1
    %14 = vsyncpa %s13, 0
    %15 = vsyncpa [#allocation5], 0
    %s16 = scalar_lea.sflag [#allocation5], 1
    %17 = vsyncpa %s16, 0
    loop: start=0, step=1, limit=4
    $region2: #{tpu_custom_call.1} parent=1 // loop_pre_header
      _
    $region3: #{tpu_custom_call.1} parent=1 // loop_header
      %s19 = sphi 0, %s23
      %p20 = scmp.ge.s32.totalorder %s19, 4
      %s29 = sphi 0, %s31
      %s32 = sphi 0, %s29
      %s33 = sphi 0, %s32
      %s49 = sphi 0, %s33
      %s53 = sphi 0, %s53
      %s55 = sphi 0, %s53
      %s56 = sphi 0, %s55
      %s70 = sphi 0, %s56
      %s74 = sphi 0, %s74
      %s76 = sphi 0, %s74
      %s77 = sphi 0, %s76
      %s91 = sphi 0, %s77
      %s95 = sphi 0, %s95
      %s97 = sphi 0, %s95
      %s98 = sphi 0, %s97
      %s112 = sphi 0, %s98
      %s116 = sphi 0, %s116
      %s118 = sphi 0, %s116
      %s119 = sphi 0, %s118
      %s133 = sphi 0, %s119
      %s137 = sphi 0, %s137
      %s139 = sphi 0, %s137
      %s140 = sphi 0, %s139
      %s154 = sphi 0, %s140
      %s158 = sphi 0, %s158
      %s160 = sphi 0, %s158
      %s161 = sphi 0, %s160
      %s175 = sphi 0, %s161
      %s181 = sphi 0, %s183
      %s184 = sphi 0, %s181
      %s185 = sphi 0, %s184
      %s201 = sphi 0, %s185
    $region4: #{tpu_custom_call.1} parent=1 // loop_header_branch
      %22 = sbr.rel (%p20) target = $region8
    $region5: #{tpu_custom_call.1} parent=1 // loop_body
      %s24 = ssub.s32 %s19, 1
      %s25 = ssub.s32 %s19, 2
      %s26 = sadd.s32 %s19, 1
      %s27 = ssub.s32 %s19, %s26
      %p28 = scmp.eq.s32.totalorder %s27, 0
      %s30 = sadd.s32 %s29, 1
      %s31 = scalar_select %p28, %s29, %s30
      %p34 = pneg %p28
      %p35 = scmp.eq.s32.totalorder %s19, 1
      %p36 = por %p34, %p35
      %p37 = scmp.ne.s32.totalorder %s29, %s32
      %p38 = scmp.eq.s32.totalorder %s19, 0
      %p39 = por %p37, %p38
      %p40 = scmp.ne.s32.totalorder %s29, %s32
      %p41 = scmp.eq.s32.totalorder %s24, 1
      %p42 = por %p40, %p41
      %p43 = scmp.ne.s32.totalorder %s32, %s33
      %p44 = scmp.eq.s32.totalorder %s24, 0
      %p45 = por %p43, %p44
      %p46 = scmp.ne.s32.totalorder %s32, %s33
      %p47 = scmp.eq.s32.totalorder %s25, 1
      %p48 = por %p46, %p47
      %p50 = scmp.ne.s32.totalorder %s33, %s49
      %p51 = scmp.eq.s32.totalorder %s25, 0
      %p52 = por %p50, %p51
      %s54 = sadd.s32 %s53, 1
      %p57 = scmp.eq.s32.totalorder %s19, 1
      %p58 = scmp.ne.s32.totalorder %s53, %s55
      %p59 = scmp.eq.s32.totalorder %s19, 0
      %p60 = por %p58, %p59
      %p61 = scmp.ne.s32.totalorder %s53, %s55
      %p62 = scmp.eq.s32.totalorder %s24, 1
      %p63 = por %p61, %p62
      %p64 = scmp.ne.s32.totalorder %s55, %s56
      %p65 = scmp.eq.s32.totalorder %s24, 0
      %p66 = por %p64, %p65
      %p67 = scmp.ne.s32.totalorder %s55, %s56
      %p68 = scmp.eq.s32.totalorder %s25, 1
      %p69 = por %p67, %p68
      %p71 = scmp.ne.s32.totalorder %s56, %s70
      %p72 = scmp.eq.s32.totalorder %s25, 0
      %p73 = por %p71, %p72
      %s75 = sadd.s32 %s74, 1
      %p78 = scmp.eq.s32.totalorder %s19, 1
      %p79 = scmp.ne.s32.totalorder %s74, %s76
      %p80 = scmp.eq.s32.totalorder %s19, 0
      %p81 = por %p79, %p80
      %p82 = scmp.ne.s32.totalorder %s74, %s76
      %p83 = scmp.eq.s32.totalorder %s24, 1
      %p84 = por %p82, %p83
      %p85 = scmp.ne.s32.totalorder %s76, %s77
      %p86 = scmp.eq.s32.totalorder %s24, 0
      %p87 = por %p85, %p86
      %p88 = scmp.ne.s32.totalorder %s76, %s77
      %p89 = scmp.eq.s32.totalorder %s25, 1
      %p90 = por %p88, %p89
      %p92 = scmp.ne.s32.totalorder %s77, %s91
      %p93 = scmp.eq.s32.totalorder %s25, 0
      %p94 = por %p92, %p93
      %s96 = sadd.s32 %s95, 1
      %p99 = scmp.eq.s32.totalorder %s19, 1
      %p100 = scmp.ne.s32.totalorder %s95, %s97
      %p101 = scmp.eq.s32.totalorder %s19, 0
      %p102 = por %p100, %p101
      %p103 = scmp.ne.s32.totalorder %s95, %s97
      %p104 = scmp.eq.s32.totalorder %s24, 1
      %p105 = por %p103, %p104
      %p106 = scmp.ne.s32.totalorder %s97, %s98
      %p107 = scmp.eq.s32.totalorder %s24, 0
      %p108 = por %p106, %p107
      %p109 = scmp.ne.s32.totalorder %s97, %s98
      %p110 = scmp.eq.s32.totalorder %s25, 1
      %p111 = por %p109, %p110
      %p113 = scmp.ne.s32.totalorder %s98, %s112
      %p114 = scmp.eq.s32.totalorder %s25, 0
      %p115 = por %p113, %p114
      %s117 = sadd.s32 %s116, 1
      %p120 = scmp.eq.s32.totalorder %s19, 1
      %p121 = scmp.ne.s32.totalorder %s116, %s118
      %p122 = scmp.eq.s32.totalorder %s19, 0
      %p123 = por %p121, %p122
      %p124 = scmp.ne.s32.totalorder %s116, %s118
      %p125 = scmp.eq.s32.totalorder %s24, 1
      %p126 = por %p124, %p125
      %p127 = scmp.ne.s32.totalorder %s118, %s119
      %p128 = scmp.eq.s32.totalorder %s24, 0
      %p129 = por %p127, %p128
      %p130 = scmp.ne.s32.totalorder %s118, %s119
      %p131 = scmp.eq.s32.totalorder %s25, 1
      %p132 = por %p130, %p131
      %p134 = scmp.ne.s32.totalorder %s119, %s133
      %p135 = scmp.eq.s32.totalorder %s25, 0
      %p136 = por %p134, %p135
      %s138 = sadd.s32 %s137, 1
      %p141 = scmp.eq.s32.totalorder %s19, 1
      %p142 = scmp.ne.s32.totalorder %s137, %s139
      %p143 = scmp.eq.s32.totalorder %s19, 0
      %p144 = por %p142, %p143
      %p145 = scmp.ne.s32.totalorder %s137, %s139
      %p146 = scmp.eq.s32.totalorder %s24, 1
      %p147 = por %p145, %p146
      %p148 = scmp.ne.s32.totalorder %s139, %s140
      %p149 = scmp.eq.s32.totalorder %s24, 0
      %p150 = por %p148, %p149
      %p151 = scmp.ne.s32.totalorder %s139, %s140
      %p152 = scmp.eq.s32.totalorder %s25, 1
      %p153 = por %p151, %p152
      %p155 = scmp.ne.s32.totalorder %s140, %s154
      %p156 = scmp.eq.s32.totalorder %s25, 0
      %p157 = por %p155, %p156
      %s159 = sadd.s32 %s158, 1
      %p162 = scmp.eq.s32.totalorder %s19, 1
      %p163 = scmp.ne.s32.totalorder %s158, %s160
      %p164 = scmp.eq.s32.totalorder %s19, 0
      %p165 = por %p163, %p164
      %p166 = scmp.ne.s32.totalorder %s158, %s160
      %p167 = scmp.eq.s32.totalorder %s24, 1
      %p168 = por %p166, %p167
      %p169 = scmp.ne.s32.totalorder %s160, %s161
      %p170 = scmp.eq.s32.totalorder %s24, 0
      %p171 = por %p169, %p170
      %p172 = scmp.ne.s32.totalorder %s160, %s161
      %p173 = scmp.eq.s32.totalorder %s25, 1
      %p174 = por %p172, %p173
      %p176 = scmp.ne.s32.totalorder %s161, %s175
      %p177 = scmp.eq.s32.totalorder %s25, 0
      %p178 = por %p176, %p177
      %s179 = ssub.s32 %s19, %s26
      %p180 = scmp.eq.s32.totalorder %s179, 0
      %s182 = sadd.s32 %s181, 1
      %s183 = scalar_select %p180, %s181, %s182
      %p186 = pneg %p180
      %p187 = scmp.eq.s32.totalorder %s19, 1
      %p188 = por %p186, %p187
      %p189 = scmp.ne.s32.totalorder %s181, %s184
      %p190 = scmp.eq.s32.totalorder %s19, 0
      %p191 = por %p189, %p190
      %p192 = scmp.ne.s32.totalorder %s181, %s184
      %p193 = scmp.eq.s32.totalorder %s24, 1
      %p194 = por %p192, %p193
      %p195 = scmp.ne.s32.totalorder %s184, %s185
      %p196 = scmp.eq.s32.totalorder %s24, 0
      %p197 = por %p195, %p196
      %p198 = scmp.ne.s32.totalorder %s184, %s185
      %p199 = scmp.eq.s32.totalorder %s25, 1
      %p200 = por %p198, %p199
      %p202 = scmp.ne.s32.totalorder %s185, %s201
      %p203 = scmp.eq.s32.totalorder %s25, 0
      %p204 = por %p202, %p203
      %p205 = scmp.le.s32.totalorder 1, %s19
      %p206 = scmp.lt.s32.totalorder %s19, 3
      %p207 = pnand %p205, %p206
      %p208 = pneg %p207
      // Predicated region
      $region9: #{tpu_custom_call.1} parent=5 // pred_check
        _
      $region10: #{tpu_custom_call.1} parent=5 // pred_check_branch
        %210 = sbr.rel (%p207) target = $region12
      $region11: #{tpu_custom_call.1} parent=5 // pred_region
        %s211 = ssub.s32 %s19, 1
        // Predicated region
        $region13: #{tpu_custom_call.1} parent=11 // pred_check
          %p212 = pneg %p66
        $region14: #{tpu_custom_call.1} parent=11 // pred_check_branch
          %214 = sbr.rel (%p212) target = $region16
        $region15: #{tpu_custom_call.1} parent=11 // pred_region
          _
        $region16: #{tpu_custom_call.1} parent=11 // pred_fallthru
          _
        // Predicated region
        $region17: #{tpu_custom_call.1} parent=11 // pred_check
          %p215 = pneg %p87
        $region18: #{tpu_custom_call.1} parent=11 // pred_check_branch
          %217 = sbr.rel (%p215) target = $region20
        $region19: #{tpu_custom_call.1} parent=11 // pred_region
          _
        $region20: #{tpu_custom_call.1} parent=11 // pred_fallthru
          _
        // Predicated region
        $region21: #{tpu_custom_call.1} parent=11 // pred_check
          %p218 = pneg %p108
        $region22: #{tpu_custom_call.1} parent=11 // pred_check_branch
          %220 = sbr.rel (%p218) target = $region24
        $region23: #{tpu_custom_call.1} parent=11 // pred_region
          _
        $region24: #{tpu_custom_call.1} parent=11 // pred_fallthru
          _
        // Predicated region
        $region25: #{tpu_custom_call.1} parent=11 // pred_check
          %p221 = pneg %p129
        $region26: #{tpu_custom_call.1} parent=11 // pred_check_branch
          %223 = sbr.rel (%p221) target = $region28
        $region27: #{tpu_custom_call.1} parent=11 // pred_region
          _
        $region28: #{tpu_custom_call.1} parent=11 // pred_fallthru
          _
        // Predicated region
        $region29: #{tpu_custom_call.1} parent=11 // pred_check
          %p224 = pneg %p150
        $region30: #{tpu_custom_call.1} parent=11 // pred_check_branch
          %226 = sbr.rel (%p224) target = $region32
        $region31: #{tpu_custom_call.1} parent=11 // pred_region
          _
        $region32: #{tpu_custom_call.1} parent=11 // pred_fallthru
          _
        // Predicated region
        $region33: #{tpu_custom_call.1} parent=11 // pred_check
          %p227 = pneg %p171
        $region34: #{tpu_custom_call.1} parent=11 // pred_check_branch
          %229 = sbr.rel (%p227) target = $region36
        $region35: #{tpu_custom_call.1} parent=11 // pred_region
          _
        $region36: #{tpu_custom_call.1} parent=11 // pred_fallthru
          _
      $region12: #{tpu_custom_call.1} parent=5 // pred_fallthru
        _
      %p230 = scmp.lt.s32.totalorder %s19, 2
      // Predicated region
      $region37: #{tpu_custom_call.1} parent=5 // pred_check
        %p231 = pneg %p230
      $region38: #{tpu_custom_call.1} parent=5 // pred_check_branch
        %233 = sbr.rel (%p231) target = $region40
      $region39: #{tpu_custom_call.1} parent=5 // pred_region
        // Predicated region
        $region41: #{tpu_custom_call.1} parent=39 // pred_check
          %p234 = pneg %p39
        $region42: #{tpu_custom_call.1} parent=39 // pred_check_branch
          %236 = sbr.rel (%p234) target = $region44
        $region43: #{tpu_custom_call.1} parent=39 // pred_region
          %s237 = sand.u32 %s29, 1
          %s238 = scalar_lea.sflag [#allocation4], %s237
          %s239 = sand.u32 %s29, 1
          %s240 = smul.addr %s239, 256
          %s241 = scalar_lea.vmem [#allocation3], %s240
          %s243 = ssub.s32 4096, 4096
          %244 = vsyncadd %s238, %s243
          %s245 = smul.addr %s19, 32
          %s246 = smul.addr %s245, 128
          %s247 = scalar_lea.hbm %s0, %s246
          %s248 = sshll.u32 %s241, 4
          %s249 = int_to_ptr.vmem [resolvable:$true] %s248
          %254 = dma.hbm_to_vmem [thread:$0]  %s247, 4096, %s249, %s238, 128, 128, 8
        $region44: #{tpu_custom_call.1} parent=39 // pred_fallthru
          _
      $region40: #{tpu_custom_call.1} parent=5 // pred_fallthru
        _
      %p255 = scmp.le.s32.totalorder 1, %s19
      %p256 = scmp.lt.s32.totalorder %s19, 3
      %p257 = pnand %p255, %p256
      %p258 = pneg %p257
      // Predicated region
      $region45: #{tpu_custom_call.1} parent=5 // pred_check
        _
      $region46: #{tpu_custom_call.1} parent=5 // pred_check_branch
        %260 = sbr.rel (%p257) target = $region48
      $region47: #{tpu_custom_call.1} parent=5 // pred_region
        %s261 = ssub.s32 %s19, 1
        %s262 = sand.u32 %s32, 1
        %s263 = scalar_lea.sflag [#allocation4], %s262
        %s264 = sand.u32 %s32, 1
        %s265 = smul.addr %s264, 256
        %s266 = scalar_lea.vmem [#allocation3], %s265
        // Predicated region
        $region49: #{tpu_custom_call.1} parent=47 // pred_check
          %p267 = pneg %p45
        $region50: #{tpu_custom_call.1} parent=47 // pred_check_branch
          %269 = sbr.rel (%p267) target = $region52
        $region51: #{tpu_custom_call.1} parent=47 // pred_region
          %270 = dma.done %s263, 4096
        $region52: #{tpu_custom_call.1} parent=47 // pred_fallthru
          _
        %s271 = sand.u32 %s32, 1
        %s272 = scalar_lea.sflag [#allocation4], %s271
        %s273 = sand.u32 %s32, 1
        %s274 = smul.addr %s273, 256
        %s275 = scalar_lea.vmem [#allocation3], %s274
        %p276 = pneg %p45
        %p277 = pneg %p42
        %p278 = pneg %p66
        %p279 = pneg %p63
        %p280 = pneg %p87
        %p281 = pneg %p84
        %p282 = pneg %p108
        %p283 = pneg %p105
        %p284 = pneg %p129
        %p285 = pneg %p126
        %p286 = pneg %p150
        %p287 = pneg %p147
        %p288 = pneg %p171
        %p289 = pneg %p168
        %p290 = pneg %p197
        %p291 = pneg %p194
        %s292 = sand.u32 %s184, 1
        %s293 = scalar_lea.sflag [#allocation5], %s292
        %s294 = sand.u32 %s184, 1
        %s295 = smul.addr %s294, 128
        %s296 = scalar_lea.vmem [#allocation6], %s295
        %v298 = vld [vmem:[%s266] sm:$0xff]
        %v299 = vld [vmem:[%s266 + $0x8] sm:$0xff]
        %v300 = vld [vmem:[%s266 + $0x10] sm:$0xff]
        %v301 = vld [vmem:[%s266 + $0x18] sm:$0xff]
        %v302 = vld [vmem:[%s266 + $0x20] sm:$0xff]
        %v303 = vld [vmem:[%s266 + $0x28] sm:$0xff]
        %v304 = vld [vmem:[%s266 + $0x30] sm:$0xff]
        %v305 = vld [vmem:[%s266 + $0x38] sm:$0xff]
        %v306 = vld [vmem:[%s266 + $0x40] sm:$0xff]
        %v307 = vld [vmem:[%s266 + $0x48] sm:$0xff]
        %v308 = vld [vmem:[%s266 + $0x50] sm:$0xff]
        %v309 = vld [vmem:[%s266 + $0x58] sm:$0xff]
        %v310 = vld [vmem:[%s266 + $0x60] sm:$0xff]
        %v311 = vld [vmem:[%s266 + $0x68] sm:$0xff]
        %v312 = vld [vmem:[%s266 + $0x70] sm:$0xff]
        %v313 = vld [vmem:[%s266 + $0x78] sm:$0xff]
        %v314 = vld [vmem:[%s266 + $0x80] sm:$0xff]
        %v315 = vld [vmem:[%s266 + $0x88] sm:$0xff]
        %v316 = vld [vmem:[%s266 + $0x90] sm:$0xff]
        %v317 = vld [vmem:[%s266 + $0x98] sm:$0xff]
        %v318 = vld [vmem:[%s266 + $0xa0] sm:$0xff]
        %v319 = vld [vmem:[%s266 + $0xa8] sm:$0xff]
        %v320 = vld [vmem:[%s266 + $0xb0] sm:$0xff]
        %v321 = vld [vmem:[%s266 + $0xb8] sm:$0xff]
        %v322 = vld [vmem:[%s266 + $0xc0] sm:$0xff]
        %v323 = vld [vmem:[%s266 + $0xc8] sm:$0xff]
        %v324 = vld [vmem:[%s266 + $0xd0] sm:$0xff]
        %v325 = vld [vmem:[%s266 + $0xd8] sm:$0xff]
        %v326 = vld [vmem:[%s266 + $0xe0] sm:$0xff]
        %v327 = vld [vmem:[%s266 + $0xe8] sm:$0xff]
        %v328 = vld [vmem:[%s266 + $0xf0] sm:$0xff]
        %v329 = vld [vmem:[%s266 + $0xf8] sm:$0xff]
        %v330 = vpack.c.bf16 %v299, %v298
        %v331 = vpack.c.bf16 %v301, %v300
        %v332 = vpack.c.bf16 %v303, %v302
        %v333 = vpack.c.bf16 %v305, %v304
        %v334 = vpack.c.bf16 %v307, %v306
        %v335 = vpack.c.bf16 %v309, %v308
        %v336 = vpack.c.bf16 %v311, %v310
        %v337 = vpack.c.bf16 %v313, %v312
        %v338 = vpack.c.bf16 %v315, %v314
        %v339 = vpack.c.bf16 %v317, %v316
        %v340 = vpack.c.bf16 %v319, %v318
        %v341 = vpack.c.bf16 %v321, %v320
        %v342 = vpack.c.bf16 %v323, %v322
        %v343 = vpack.c.bf16 %v325, %v324
        %v344 = vpack.c.bf16 %v327, %v326
        %v345 = vpack.c.bf16 %v329, %v328
        %v346 = vld [vmem:[%s1] sm:$0xf]
        %v347 = vld [vmem:[%s1 + $0x4] sm:$0xf]
        %v348 = vld [vmem:[%s1 + $0x8] sm:$0xf]
        %v349 = vld [vmem:[%s1 + $0xc] sm:$0xf]
        %v350 = vld [vmem:[%s4] sm:$0x1]
        %v352 = vlaneseq
        %v353 = vshrl.u32 %v352, 7
        %v354 = vsub.s32 0, %v353
        %v355 = vrot.slane %v350, %v354
        %v361 = vunpack.c.l.b16 %v346
        %v362 = vunpack.c.l.b16 %v347
        %v363 = vunpack.c.l.b16 %v348
        %v364 = vunpack.c.l.b16 %v349
        %v365 = vpack.c.b16 %v362, %v361
        %v366 = vpack.c.b16 %v364, %v363
        %vm369 = vcmask 261120
        %v371 = vsel %vm369, %v330, 0
        %v374 = vsel %vm369, %v331, 0
        %v377 = vsel %vm369, %v332, 0
        %v380 = vsel %vm369, %v333, 0
        %v383 = vsel %vm369, %v334, 0
        %v386 = vsel %vm369, %v335, 0
        %v389 = vsel %vm369, %v336, 0
        %v392 = vsel %vm369, %v337, 0
        %v395 = vsel %vm369, %v338, 0
        %v398 = vsel %vm369, %v339, 0
        %v401 = vsel %vm369, %v340, 0
        %v404 = vsel %vm369, %v341, 0
        %v407 = vsel %vm369, %v342, 0
        %v410 = vsel %vm369, %v343, 0
        %v413 = vsel %vm369, %v344, 0
        %v416 = vsel %vm369, %v345, 0
        %418 = vmatprep.subr.bf16.mxu0 0
        %419 = vmatpush1.bf16.msra.mxu0 %v365
        %420 = vmatprep.subr.bf16.mxu0 0
        %421 = vmatpush1.bf16.msra.mxu0 %v366
        %422 = vmatprep.subr.bf16.mxu0 0
        %423 = vmatpush1.bf16.msra.mxu0 0
        %424 = vmatprep.subr.bf16.mxu0 0
        %425 = vmatpush1.bf16.msra.mxu0 0
        %426 = vmatprep.subr.bf16.mxu0 0
        %427 = vmatpush1.bf16.msra.mxu0 0
        %428 = vmatprep.subr.bf16.mxu0 0
        %429 = vmatpush1.bf16.msra.mxu0 0
        %430 = vmatprep.subr.bf16.mxu0 0
        %431 = vmatpush1.bf16.msra.mxu0 0
        %432 = vmatprep.subr.bf16.mxu0 0
        %433 = vmatpush1.bf16.msra.mxu0 0
        %434 = vmatprep.subr.bf16.mxu0 0
        %435 = vmatpush1.bf16.msra.mxu0 0
        %436 = vmatprep.subr.bf16.mxu0 0
        %437 = vmatpush1.bf16.msra.mxu0 0
        %438 = vmatprep.subr.bf16.mxu0 0
        %439 = vmatpush1.bf16.msra.mxu0 0
        %440 = vmatprep.subr.bf16.mxu0 0
        %441 = vmatpush1.bf16.msra.mxu0 0
        %442 = vmatprep.subr.bf16.mxu0 0
        %443 = vmatpush1.bf16.msra.mxu0 0
        %444 = vmatprep.subr.bf16.mxu0 0
        %445 = vmatpush1.bf16.msra.mxu0 0
        %446 = vmatprep.subr.bf16.mxu0 0
        %447 = vmatpush1.bf16.msra.mxu0 0
        %448 = vmatprep.subr.bf16.mxu0 0
        %449 = vmatpush1.bf16.msra.mxu0 0
        %450 = vmatprep.mubr.bf16.mxu0 0
        %451 = vmatmul.mubr.bf16.gmra.mrb[0].mxu0 %v371
        %v452 = vpop.f32.mrb[0].mxu0
        %v453 = vadd.f32 %v355, %v452
        %v454 = vpop.f32.mrb[0].mxu0
        %v455 = vpop.f32.mrb[0].mxu0
        %v456 = vadd.f32 %v355, %v455
        %v457 = vpop.f32.mrb[0].mxu0
        %458 = vmatprep.mubr.bf16.mxu0 0
        %459 = vmatmul.mubr.bf16.gmra.mrb[0].mxu0 %v374
        %v460 = vpop.f32.mrb[0].mxu0
        %v461 = vadd.f32 %v355, %v460
        %v462 = vpop.f32.mrb[0].mxu0
        %v463 = vpop.f32.mrb[0].mxu0
        %v464 = vadd.f32 %v355, %v463
        %v465 = vpop.f32.mrb[0].mxu0
        %466 = vmatprep.mubr.bf16.mxu0 0
        %467 = vmatmul.mubr.bf16.gmra.mrb[0].mxu0 %v377
        %v468 = vpop.f32.mrb[0].mxu0
        %v469 = vadd.f32 %v355, %v468
        %v470 = vpop.f32.mrb[0].mxu0
        %v471 = vpop.f32.mrb[0].mxu0
        %v472 = vadd.f32 %v355, %v471
        %v473 = vpop.f32.mrb[0].mxu0
        %474 = vmatprep.mubr.bf16.mxu0 0
        %475 = vmatmul.mubr.bf16.gmra.mrb[0].mxu0 %v380
        %v476 = vpop.f32.mrb[0].mxu0
        %v477 = vadd.f32 %v355, %v476
        %v478 = vpop.f32.mrb[0].mxu0
        %v479 = vpop.f32.mrb[0].mxu0
        %v480 = vadd.f32 %v355, %v479
        %v481 = vpop.f32.mrb[0].mxu0
        %482 = vmatprep.mubr.bf16.mxu0 0
        %483 = vmatmul.mubr.bf16.gmra.mrb[0].mxu0 %v383
        %v484 = vpop.f32.mrb[0].mxu0
        %v485 = vadd.f32 %v355, %v484
        %v486 = vpop.f32.mrb[0].mxu0
        %v487 = vpop.f32.mrb[0].mxu0
        %v488 = vadd.f32 %v355, %v487
        %v489 = vpop.f32.mrb[0].mxu0
        %490 = vmatprep.mubr.bf16.mxu0 0
        %491 = vmatmul.mubr.bf16.gmra.mrb[0].mxu0 %v386
        %v492 = vpop.f32.mrb[0].mxu0
        %v493 = vadd.f32 %v355, %v492
        %v494 = vpop.f32.mrb[0].mxu0
        %v495 = vpop.f32.mrb[0].mxu0
        %v496 = vadd.f32 %v355, %v495
        %v497 = vpop.f32.mrb[0].mxu0
        %498 = vmatprep.mubr.bf16.mxu0 0
        %499 = vmatmul.mubr.bf16.gmra.mrb[0].mxu0 %v389
        %v500 = vpop.f32.mrb[0].mxu0
        %v501 = vadd.f32 %v355, %v500
        %v502 = vpop.f32.mrb[0].mxu0
        %v503 = vpop.f32.mrb[0].mxu0
        %v504 = vadd.f32 %v355, %v503
        %v505 = vpop.f32.mrb[0].mxu0
        %506 = vmatprep.mubr.bf16.mxu0 0
        %507 = vmatmul.mubr.bf16.gmra.mrb[0].mxu0 %v392
        %v508 = vpop.f32.mrb[0].mxu0
        %v509 = vadd.f32 %v355, %v508
        %v510 = vpop.f32.mrb[0].mxu0
        %v511 = vpop.f32.mrb[0].mxu0
        %v512 = vadd.f32 %v355, %v511
        %v513 = vpop.f32.mrb[0].mxu0
        %514 = vmatprep.mubr.bf16.mxu0 0
        %515 = vmatmul.mubr.bf16.gmra.mrb[0].mxu0 %v395
        %v516 = vpop.f32.mrb[0].mxu0
        %v517 = vadd.f32 %v355, %v516
        %v518 = vpop.f32.mrb[0].mxu0
        %v519 = vpop.f32.mrb[0].mxu0
        %v520 = vadd.f32 %v355, %v519
        %v521 = vpop.f32.mrb[0].mxu0
        %522 = vmatprep.mubr.bf16.mxu0 0
        %523 = vmatmul.mubr.bf16.gmra.mrb[0].mxu0 %v398
        %v524 = vpop.f32.mrb[0].mxu0
        %v525 = vadd.f32 %v355, %v524
        %v526 = vpop.f32.mrb[0].mxu0
        %v527 = vpop.f32.mrb[0].mxu0
        %v528 = vadd.f32 %v355, %v527
        %v529 = vpop.f32.mrb[0].mxu0
        %530 = vmatprep.mubr.bf16.mxu0 0
        %531 = vmatmul.mubr.bf16.gmra.mrb[0].mxu0 %v401
        %v532 = vpop.f32.mrb[0].mxu0
        %v533 = vadd.f32 %v355, %v532
        %v534 = vpop.f32.mrb[0].mxu0
        %v535 = vpop.f32.mrb[0].mxu0
        %v536 = vadd.f32 %v355, %v535
        %v537 = vpop.f32.mrb[0].mxu0
        %538 = vmatprep.mubr.bf16.mxu0 0
        %539 = vmatmul.mubr.bf16.gmra.mrb[0].mxu0 %v404
        %v540 = vpop.f32.mrb[0].mxu0
        %v541 = vadd.f32 %v355, %v540
        %v542 = vpop.f32.mrb[0].mxu0
        %v543 = vpop.f32.mrb[0].mxu0
        %v544 = vadd.f32 %v355, %v543
        %v545 = vpop.f32.mrb[0].mxu0
        %546 = vmatprep.mubr.bf16.mxu0 0
        %547 = vmatmul.mubr.bf16.gmra.mrb[0].mxu0 %v407
        %v548 = vpop.f32.mrb[0].mxu0
        %v549 = vadd.f32 %v355, %v548
        %v550 = vpop.f32.mrb[0].mxu0
        %v551 = vpop.f32.mrb[0].mxu0
        %v552 = vadd.f32 %v355, %v551
        %v553 = vpop.f32.mrb[0].mxu0
        %554 = vmatprep.mubr.bf16.mxu0 0
        %555 = vmatmul.mubr.bf16.gmra.mrb[0].mxu0 %v410
        %v556 = vpop.f32.mrb[0].mxu0
        %v557 = vadd.f32 %v355, %v556
        %v558 = vpop.f32.mrb[0].mxu0
        %v559 = vpop.f32.mrb[0].mxu0
        %v560 = vadd.f32 %v355, %v559
        %v561 = vpop.f32.mrb[0].mxu0
        %562 = vmatprep.mubr.bf16.mxu0 0
        %563 = vmatmul.mubr.bf16.gmra.mrb[0].mxu0 %v413
        %v564 = vpop.f32.mrb[0].mxu0
        %v565 = vadd.f32 %v355, %v564
        %v566 = vpop.f32.mrb[0].mxu0
        %v567 = vpop.f32.mrb[0].mxu0
        %v568 = vadd.f32 %v355, %v567
        %v569 = vpop.f32.mrb[0].mxu0
        %570 = vmatprep.mubr.bf16.mxu0 0
        %571 = vmatmul.mubr.bf16.gmra.mrb[0].mxu0 %v416
        %v572 = vpop.f32.mrb[0].mxu0
        %v573 = vadd.f32 %v355, %v572
        %v574 = vpop.f32.mrb[0].mxu0
        %v575 = vpop.f32.mrb[0].mxu0
        %v576 = vadd.f32 %v355, %v575
        %v577 = vpop.f32.mrb[0].mxu0
        %578 = vdwg.mxu0
        %v579 = vmax.f32 %v453, 0.0
        %v580 = vmax.f32 %v456, 0.0
        %v581 = vmax.f32 %v461, 0.0
        %v582 = vmax.f32 %v464, 0.0
        %v583 = vmax.f32 %v469, 0.0
        %v584 = vmax.f32 %v472, 0.0
        %v585 = vmax.f32 %v477, 0.0
        %v586 = vmax.f32 %v480, 0.0
        %v587 = vmax.f32 %v485, 0.0
        %v588 = vmax.f32 %v488, 0.0
        %v589 = vmax.f32 %v493, 0.0
        %v590 = vmax.f32 %v496, 0.0
        %v591 = vmax.f32 %v501, 0.0
        %v592 = vmax.f32 %v504, 0.0
        %v593 = vmax.f32 %v509, 0.0
        %v594 = vmax.f32 %v512, 0.0
        %v595 = vmax.f32 %v517, 0.0
        %v596 = vmax.f32 %v520, 0.0
        %v597 = vmax.f32 %v525, 0.0
        %v598 = vmax.f32 %v528, 0.0
        %v599 = vmax.f32 %v533, 0.0
        %v600 = vmax.f32 %v536, 0.0
        %v601 = vmax.f32 %v541, 0.0
        %v602 = vmax.f32 %v544, 0.0
        %v603 = vmax.f32 %v549, 0.0
        %v604 = vmax.f32 %v552, 0.0
        %v605 = vmax.f32 %v557, 0.0
        %v606 = vmax.f32 %v560, 0.0
        %v607 = vmax.f32 %v565, 0.0
        %v608 = vmax.f32 %v568, 0.0
        %v609 = vmax.f32 %v573, 0.0
        %v610 = vmax.f32 %v576, 0.0
        %v611 = vpack.c.bf16 %v580, %v579
        %v612 = vpack.c.bf16 %v582, %v581
        %v613 = vpack.c.bf16 %v584, %v583
        %v614 = vpack.c.bf16 %v586, %v585
        %v615 = vpack.c.bf16 %v588, %v587
        %v616 = vpack.c.bf16 %v590, %v589
        %v617 = vpack.c.bf16 %v592, %v591
        %v618 = vpack.c.bf16 %v594, %v593
        %v619 = vpack.c.bf16 %v596, %v595
        %v620 = vpack.c.bf16 %v598, %v597
        %v621 = vpack.c.bf16 %v600, %v599
        %v622 = vpack.c.bf16 %v602, %v601
        %v623 = vpack.c.bf16 %v604, %v603
        %v624 = vpack.c.bf16 %v606, %v605
        %v625 = vpack.c.bf16 %v608, %v607
        %v626 = vpack.c.bf16 %v610, %v609
        %vm627 = vcmask 64512
        %628 = vst.msk [vmem:[#allocation2] sm:$0xff] %vm627, 0
        %629 = vst.msk [vmem:[#allocation2 + $0x8] sm:$0xff] %vm627, 0
        %630 = vst.msk [vmem:[#allocation2 + $0x10] sm:$0xff] %vm627, 0
        %631 = vst.msk [vmem:[#allocation2 + $0xd8] sm:$0xff] %vm627, 0
        %632 = vst.msk [vmem:[#allocation2 + $0xe0] sm:$0xff] %vm627, 0
        %v650 = vunpack.c.l.b16 %v611
        %v651 = vunpack.c.h.b16 %v611
        %v652 = vunpack.c.l.b16 0
        %v653 = vunpack.c.l.b16 %v612
        %v654 = vunpack.c.h.b16 %v612
        %v655 = vunpack.c.l.b16 %v613
        %v656 = vunpack.c.h.b16 %v613
        %v657 = vunpack.c.l.b16 %v614
        %v658 = vunpack.c.h.b16 %v614
        %v659 = vunpack.c.l.b16 %v615
        %v660 = vunpack.c.h.b16 %v615
        %v661 = vunpack.c.l.b16 %v616
        %v662 = vunpack.c.h.b16 %v616
        %v663 = vunpack.c.l.b16 %v617
        %v664 = vunpack.c.h.b16 %v617
        %v665 = vunpack.c.l.b16 %v618
        %v666 = vunpack.c.h.b16 %v618
        %v667 = vunpack.c.l.b16 %v619
        %v668 = vunpack.c.h.b16 %v619
        %v669 = vunpack.c.l.b16 %v620
        %v670 = vunpack.c.h.b16 %v620
        %v671 = vunpack.c.l.b16 %v621
        %v672 = vunpack.c.h.b16 %v621
        %v673 = vunpack.c.l.b16 %v622
        %v674 = vunpack.c.h.b16 %v622
        %v675 = vunpack.c.l.b16 %v623
        %v676 = vunpack.c.h.b16 %v623
        %v677 = vunpack.c.l.b16 %v624
        %v678 = vunpack.c.h.b16 %v624
        %v679 = vunpack.c.l.b16 %v625
        %v680 = vunpack.c.h.b16 %v625
        %v681 = vunpack.c.l.b16 %v626
        %v682 = vunpack.c.h.b16 %v626
        %v683 = vpack.c.b16 %v651, %v650
        %v684 = vpack.c.b16 %v653, %v652
        %v685 = vpack.c.b16 %v652, %v654
        %v686 = vpack.c.b16 %v656, %v655
        %v687 = vpack.c.b16 %v657, %v652
        %v688 = vpack.c.b16 %v652, %v658
        %v689 = vpack.c.b16 %v660, %v659
        %v690 = vpack.c.b16 %v661, %v652
        %v691 = vpack.c.b16 %v652, %v662
        %v692 = vpack.c.b16 %v664, %v663
        %v693 = vpack.c.b16 %v665, %v652
        %v694 = vpack.c.b16 %v652, %v666
        %v695 = vpack.c.b16 %v668, %v667
        %v696 = vpack.c.b16 %v669, %v652
        %v697 = vpack.c.b16 %v652, %v670
        %v698 = vpack.c.b16 %v672, %v671
        %v699 = vpack.c.b16 %v673, %v652
        %v700 = vpack.c.b16 %v652, %v674
        %v701 = vpack.c.b16 %v676, %v675
        %v702 = vpack.c.b16 %v677, %v652
        %v703 = vpack.c.b16 %v652, %v678
        %v704 = vpack.c.b16 %v680, %v679
        %v705 = vpack.c.b16 %v681, %v652
        %v706 = vpack.c.b16 %v652, %v682
        %731 = vst.msk [vmem:[#allocation2 + $0x18] sm:$0xff] %vm627, %v683
        %732 = vst.msk [vmem:[#allocation2 + $0x20] sm:$0xff] %vm627, %v684
        %733 = vst.msk [vmem:[#allocation2 + $0x28] sm:$0xff] %vm627, %v685
        %734 = vst.msk [vmem:[#allocation2 + $0x30] sm:$0xff] %vm627, %v686
        %735 = vst.msk [vmem:[#allocation2 + $0x38] sm:$0xff] %vm627, %v687
        %736 = vst.msk [vmem:[#allocation2 + $0x40] sm:$0xff] %vm627, %v688
        %737 = vst.msk [vmem:[#allocation2 + $0x48] sm:$0xff] %vm627, %v689
        %738 = vst.msk [vmem:[#allocation2 + $0x50] sm:$0xff] %vm627, %v690
        %739 = vst.msk [vmem:[#allocation2 + $0x58] sm:$0xff] %vm627, %v691
        %740 = vst.msk [vmem:[#allocation2 + $0x60] sm:$0xff] %vm627, %v692
        %741 = vst.msk [vmem:[#allocation2 + $0x68] sm:$0xff] %vm627, %v693
        %742 = vst.msk [vmem:[#allocation2 + $0x70] sm:$0xff] %vm627, %v694
        %743 = vst.msk [vmem:[#allocation2 + $0x78] sm:$0xff] %vm627, %v695
        %744 = vst.msk [vmem:[#allocation2 + $0x80] sm:$0xff] %vm627, %v696
        %745 = vst.msk [vmem:[#allocation2 + $0x88] sm:$0xff] %vm627, %v697
        %746 = vst.msk [vmem:[#allocation2 + $0x90] sm:$0xff] %vm627, %v698
        %747 = vst.msk [vmem:[#allocation2 + $0x98] sm:$0xff] %vm627, %v699
        %748 = vst.msk [vmem:[#allocation2 + $0xa0] sm:$0xff] %vm627, %v700
        %749 = vst.msk [vmem:[#allocation2 + $0xa8] sm:$0xff] %vm627, %v701
        %750 = vst.msk [vmem:[#allocation2 + $0xb0] sm:$0xff] %vm627, %v702
        %751 = vst.msk [vmem:[#allocation2 + $0xb8] sm:$0xff] %vm627, %v703
        %752 = vst.msk [vmem:[#allocation2 + $0xc0] sm:$0xff] %vm627, %v704
        %753 = vst.msk [vmem:[#allocation2 + $0xc8] sm:$0xff] %vm627, %v705
        %754 = vst.msk [vmem:[#allocation2 + $0xd0] sm:$0xff] %vm627, %v706
        %v755 = vld [vmem:[#allocation2 + $0x8] sm:$0xf8]
        %v756 = vld [vmem:[#allocation2 + $0x10] sm:$0xff]
        %v757 = vld [vmem:[#allocation2 + $0x18] sm:$0xff]
        %v758 = vld [vmem:[#allocation2 + $0x20] sm:$0xff]
        %v759 = vld [vmem:[#allocation2 + $0x28] sm:$0xff]
        %v760 = vld [vmem:[#allocation2 + $0x30] sm:$0xff]
        %v761 = vld [vmem:[#allocation2 + $0x38] sm:$0xff]
        %v762 = vld [vmem:[#allocation2 + $0x40] sm:$0xff]
        %v763 = vld [vmem:[#allocation2 + $0x48] sm:$0xff]
        %v764 = vld [vmem:[#allocation2 + $0x50] sm:$0xff]
        %v765 = vld [vmem:[#allocation2 + $0x58] sm:$0xff]
        %v766 = vld [vmem:[#allocation2 + $0x60] sm:$0xff]
        %v767 = vld [vmem:[#allocation2 + $0x68] sm:$0xff]
        %v768 = vld [vmem:[#allocation2 + $0x70] sm:$0xff]
        %v769 = vld [vmem:[#allocation2 + $0x78] sm:$0xff]
        %v770 = vld [vmem:[#allocation2 + $0x80] sm:$0xff]
        %v771 = vld [vmem:[#allocation2 + $0x88] sm:$0xff]
        %v772 = vld [vmem:[#allocation2 + $0x90] sm:$0xff]
        %v773 = vld [vmem:[#allocation2 + $0x98] sm:$0xff]
        %v774 = vld [vmem:[#allocation2 + $0xa0] sm:$0xff]
        %v775 = vld [vmem:[#allocation2 + $0xa8] sm:$0xff]
        %v776 = vld [vmem:[#allocation2 + $0xb0] sm:$0xff]
        %v777 = vld [vmem:[#allocation2 + $0xb8] sm:$0xff]
        %v778 = vld [vmem:[#allocation2 + $0xc0] sm:$0xff]
        %v779 = vld [vmem:[#allocation2 + $0xc8] sm:$0xf]
        %v780 = vld [vmem:[%s2] sm:$0xf]
        %v781 = vld [vmem:[#allocation2 + $0x8] sm:$0xf0]
        %s782 = scalar_lea.vmem %s2, 4
        %v783 = vld [vmem:[%s782] sm:$0xf]
        %vm809 = vcmask 1043456
        %v810 = vrot.slane %v781, 4
        %v811 = vrot.slane %v756, 4
        %v812 = vsel %vm809, %v810, %v811
        %v813 = vrot.slane %v757, 4
        %v814 = vsel %vm809, %v811, %v813
        %v815 = vrot.slane %v758, 4
        %v816 = vsel %vm809, %v813, %v815
        %v817 = vrot.slane %v759, 4
        %v818 = vsel %vm809, %v815, %v817
        %v819 = vrot.slane %v760, 4
        %v820 = vsel %vm809, %v817, %v819
        %v821 = vrot.slane %v761, 4
        %v822 = vsel %vm809, %v819, %v821
        %v823 = vrot.slane %v762, 4
        %v824 = vsel %vm809, %v821, %v823
        %v825 = vrot.slane %v763, 4
        %v826 = vsel %vm809, %v823, %v825
        %v827 = vrot.slane %v764, 4
        %v828 = vsel %vm809, %v825, %v827
        %v829 = vrot.slane %v765, 4
        %v830 = vsel %vm809, %v827, %v829
        %v831 = vrot.slane %v766, 4
        %v832 = vsel %vm809, %v829, %v831
        %v833 = vrot.slane %v767, 4
        %v834 = vsel %vm809, %v831, %v833
        %v835 = vrot.slane %v768, 4
        %v836 = vsel %vm809, %v833, %v835
        %v837 = vrot.slane %v769, 4
        %v838 = vsel %vm809, %v835, %v837
        %v839 = vrot.slane %v770, 4
        %v840 = vsel %vm809, %v837, %v839
        %v841 = vrot.slane %v771, 4
        %v842 = vsel %vm809, %v839, %v841
        %v843 = vrot.slane %v772, 4
        %v844 = vsel %vm809, %v841, %v843
        %v845 = vrot.slane %v773, 4
        %v846 = vsel %vm809, %v843, %v845
        %v847 = vrot.slane %v774, 4
        %v848 = vsel %vm809, %v845, %v847
        %v849 = vrot.slane %v775, 4
        %v850 = vsel %vm809, %v847, %v849
        %v851 = vrot.slane %v776, 4
        %v852 = vsel %vm809, %v849, %v851
        %v853 = vrot.slane %v777, 4
        %v854 = vsel %vm809, %v851, %v853
        %v855 = vrot.slane %v778, 4
        %v856 = vsel %vm809, %v853, %v855
        %v857 = vrot.slane %v779, 4
        %v858 = vsel %vm809, %v855, %v857
        %v860 = vsel %vm627, %v812, 0
        %v863 = vsel %vm627, %v814, 0
        %v866 = vsel %vm627, %v816, 0
        %v869 = vsel %vm627, %v818, 0
        %v872 = vsel %vm627, %v820, 0
        %v875 = vsel %vm627, %v822, 0
        %v878 = vsel %vm627, %v824, 0
        %v881 = vsel %vm627, %v826, 0
        %v884 = vsel %vm627, %v828, 0
        %v887 = vsel %vm627, %v830, 0
        %v890 = vsel %vm627, %v832, 0
        %v893 = vsel %vm627, %v834, 0
        %v896 = vsel %vm627, %v836, 0
        %v899 = vsel %vm627, %v838, 0
        %v902 = vsel %vm627, %v840, 0
        %v905 = vsel %vm627, %v842, 0
        %v908 = vsel %vm627, %v844, 0
        %v911 = vsel %vm627, %v846, 0
        %v914 = vsel %vm627, %v848, 0
        %v917 = vsel %vm627, %v850, 0
        %v920 = vsel %vm627, %v852, 0
        %v923 = vsel %vm627, %v854, 0
        %v926 = vsel %vm627, %v856, 0
        %v929 = vsel %vm627, %v858, 0
        %vm931 = vcmask 1043456
        %v933 = vsel %vm931, %v783, 0
        %935 = vmatprep.subr.bf16.mxu0 0
        %936 = vmatpush1.bf16.msra.mxu0 %v933
        %937 = vmatprep.subr.bf16.mxu0 0
        %938 = vmatpush1.bf16.msra.mxu0 0
        %939 = vmatprep.subr.bf16.mxu0 0
        %940 = vmatpush1.bf16.msra.mxu0 0
        %941 = vmatprep.subr.bf16.mxu0 0
        %942 = vmatpush1.bf16.msra.mxu0 0
        %943 = vmatprep.subr.bf16.mxu0 0
        %944 = vmatpush1.bf16.msra.mxu0 0
        %945 = vmatprep.subr.bf16.mxu0 0
        %946 = vmatpush1.bf16.msra.mxu0 0
        %947 = vmatprep.subr.bf16.mxu0 0
        %948 = vmatpush1.bf16.msra.mxu0 0
        %949 = vmatprep.subr.bf16.mxu0 0
        %950 = vmatpush1.bf16.msra.mxu0 0
        %951 = vmatprep.subr.bf16.mxu0 0
        %952 = vmatpush1.bf16.msra.mxu0 0
        %953 = vmatprep.subr.bf16.mxu0 0
        %954 = vmatpush1.bf16.msra.mxu0 0
        %955 = vmatprep.subr.bf16.mxu0 0
        %956 = vmatpush1.bf16.msra.mxu0 0
        %957 = vmatprep.subr.bf16.mxu0 0
        %958 = vmatpush1.bf16.msra.mxu0 0
        %959 = vmatprep.subr.bf16.mxu0 0
        %960 = vmatpush1.bf16.msra.mxu0 0
        %961 = vmatprep.subr.bf16.mxu0 0
        %962 = vmatpush1.bf16.msra.mxu0 0
        %963 = vmatprep.subr.bf16.mxu0 0
        %964 = vmatpush1.bf16.msra.mxu0 0
        %965 = vmatprep.subr.bf16.mxu0 0
        %966 = vmatpush1.bf16.msra.mxu0 0
        %967 = vmatprep.mubr.bf16.mxu0 0
        %968 = vmatmul.mubr.bf16.gmra.mrb[0].mxu0 %v860
        %v969 = vpop.f32.mrb[0].mxu0
        %v970 = vadd.f32 0.0, %v969
        %v971 = vpop.f32.mrb[0].mxu0
        %v972 = vpop.f32.mrb[0].mxu0
        %v973 = vadd.f32 0.0, %v972
        %v974 = vpop.f32.mrb[0].mxu0
        %975 = vmatprep.mubr.bf16.mxu0 0
        %976 = vmatmul.mubr.bf16.gmra.mrb[0].mxu0 %v863
        %v977 = vpop.f32.mrb[0].mxu0
        %v978 = vpop.f32.mrb[0].mxu0
        %v979 = vpop.f32.mrb[0].mxu0
        %v980 = vadd.f32 0.0, %v979
        %v981 = vpop.f32.mrb[0].mxu0
        %982 = vmatprep.mubr.bf16.mxu0 0
        %983 = vmatmul.mubr.bf16.gmra.mrb[0].mxu0 %v866
        %v984 = vpop.f32.mrb[0].mxu0
        %v985 = vadd.f32 0.0, %v984
        %v986 = vpop.f32.mrb[0].mxu0
        %v987 = vpop.f32.mrb[0].mxu0
        %v988 = vpop.f32.mrb[0].mxu0
        %989 = vmatprep.mubr.bf16.mxu0 0
        %990 = vmatmul.mubr.bf16.gmra.mrb[0].mxu0 %v869
        %v991 = vpop.f32.mrb[0].mxu0
        %v992 = vadd.f32 0.0, %v991
        %v993 = vpop.f32.mrb[0].mxu0
        %v994 = vpop.f32.mrb[0].mxu0
        %v995 = vadd.f32 0.0, %v994
        %v996 = vpop.f32.mrb[0].mxu0
        %997 = vmatprep.mubr.bf16.mxu0 0
        %998 = vmatmul.mubr.bf16.gmra.mrb[0].mxu0 %v872
        %v999 = vpop.f32.mrb[0].mxu0
        %v1000 = vpop.f32.mrb[0].mxu0
        %v1001 = vpop.f32.mrb[0].mxu0
        %v1002 = vadd.f32 0.0, %v1001
        %v1003 = vpop.f32.mrb[0].mxu0
        %1004 = vmatprep.mubr.bf16.mxu0 0
        %1005 = vmatmul.mubr.bf16.gmra.mrb[0].mxu0 %v875
        %v1006 = vpop.f32.mrb[0].mxu0
        %v1007 = vadd.f32 0.0, %v1006
        %v1008 = vpop.f32.mrb[0].mxu0
        %v1009 = vpop.f32.mrb[0].mxu0
        %v1010 = vpop.f32.mrb[0].mxu0
        %1011 = vmatprep.mubr.bf16.mxu0 0
        %1012 = vmatmul.mubr.bf16.gmra.mrb[0].mxu0 %v878
        %v1013 = vpop.f32.mrb[0].mxu0
        %v1014 = vadd.f32 0.0, %v1013
        %v1015 = vpop.f32.mrb[0].mxu0
        %v1016 = vpop.f32.mrb[0].mxu0
        %v1017 = vadd.f32 0.0, %v1016
        %v1018 = vpop.f32.mrb[0].mxu0
        %1019 = vmatprep.mubr.bf16.mxu0 0
        %1020 = vmatmul.mubr.bf16.gmra.mrb[0].mxu0 %v881
        %v1021 = vpop.f32.mrb[0].mxu0
        %v1022 = vpop.f32.mrb[0].mxu0
        %v1023 = vpop.f32.mrb[0].mxu0
        %v1024 = vadd.f32 0.0, %v1023
        %v1025 = vpop.f32.mrb[0].mxu0
        %1026 = vmatprep.mubr.bf16.mxu0 0
        %1027 = vmatmul.mubr.bf16.gmra.mrb[0].mxu0 %v884
        %v1028 = vpop.f32.mrb[0].mxu0
        %v1029 = vadd.f32 0.0, %v1028
        %v1030 = vpop.f32.mrb[0].mxu0
        %v1031 = vpop.f32.mrb[0].mxu0
        %v1032 = vpop.f32.mrb[0].mxu0
        %1033 = vmatprep.mubr.bf16.mxu0 0
        %1034 = vmatmul.mubr.bf16.gmra.mrb[0].mxu0 %v887
        %v1035 = vpop.f32.mrb[0].mxu0
        %v1036 = vadd.f32 0.0, %v1035
        %v1037 = vpop.f32.mrb[0].mxu0
        %v1038 = vpop.f32.mrb[0].mxu0
        %v1039 = vadd.f32 0.0, %v1038
        %v1040 = vpop.f32.mrb[0].mxu0
        %1041 = vmatprep.mubr.bf16.mxu0 0
        %1042 = vmatmul.mubr.bf16.gmra.mrb[0].mxu0 %v890
        %v1043 = vpop.f32.mrb[0].mxu0
        %v1044 = vpop.f32.mrb[0].mxu0
        %v1045 = vpop.f32.mrb[0].mxu0
        %v1046 = vadd.f32 0.0, %v1045
        %v1047 = vpop.f32.mrb[0].mxu0
        %1048 = vmatprep.mubr.bf16.mxu0 0
        %1049 = vmatmul.mubr.bf16.gmra.mrb[0].mxu0 %v893
        %v1050 = vpop.f32.mrb[0].mxu0
        %v1051 = vadd.f32 0.0, %v1050
        %v1052 = vpop.f32.mrb[0].mxu0
        %v1053 = vpop.f32.mrb[0].mxu0
        %v1054 = vpop.f32.mrb[0].mxu0
        %1055 = vmatprep.mubr.bf16.mxu0 0
        %1056 = vmatmul.mubr.bf16.gmra.mrb[0].mxu0 %v896
        %v1057 = vpop.f32.mrb[0].mxu0
        %v1058 = vadd.f32 0.0, %v1057
        %v1059 = vpop.f32.mrb[0].mxu0
        %v1060 = vpop.f32.mrb[0].mxu0
        %v1061 = vadd.f32 0.0, %v1060
        %v1062 = vpop.f32.mrb[0].mxu0
        %1063 = vmatprep.mubr.bf16.mxu0 0
        %1064 = vmatmul.mubr.bf16.gmra.mrb[0].mxu0 %v899
        %v1065 = vpop.f32.mrb[0].mxu0
        %v1066 = vpop.f32.mrb[0].mxu0
        %v1067 = vpop.f32.mrb[0].mxu0
        %v1068 = vadd.f32 0.0, %v1067
        %v1069 = vpop.f32.mrb[0].mxu0
        %1070 = vmatprep.mubr.bf16.mxu0 0
        %1071 = vmatmul.mubr.bf16.gmra.mrb[0].mxu0 %v902
        %v1072 = vpop.f32.mrb[0].mxu0
        %v1073 = vadd.f32 0.0, %v1072
        %v1074 = vpop.f32.mrb[0].mxu0
        %v1075 = vpop.f32.mrb[0].mxu0
        %v1076 = vpop.f32.mrb[0].mxu0
        %1077 = vmatprep.mubr.bf16.mxu0 0
        %1078 = vmatmul.mubr.bf16.gmra.mrb[0].mxu0 %v905
        %v1079 = vpop.f32.mrb[0].mxu0
        %v1080 = vadd.f32 0.0, %v1079
        %v1081 = vpop.f32.mrb[0].mxu0
        %v1082 = vpop.f32.mrb[0].mxu0
        %v1083 = vadd.f32 0.0, %v1082
        %v1084 = vpop.f32.mrb[0].mxu0
        %1085 = vmatprep.mubr.bf16.mxu0 0
        %1086 = vmatmul.mubr.bf16.gmra.mrb[0].mxu0 %v908
        %v1087 = vpop.f32.mrb[0].mxu0
        %v1088 = vpop.f32.mrb[0].mxu0
        %v1089 = vpop.f32.mrb[0].mxu0
        %v1090 = vadd.f32 0.0, %v1089
        %v1091 = vpop.f32.mrb[0].mxu0
        %1092 = vmatprep.mubr.bf16.mxu0 0
        %1093 = vmatmul.mubr.bf16.gmra.mrb[0].mxu0 %v911
        %v1094 = vpop.f32.mrb[0].mxu0
        %v1095 = vadd.f32 0.0, %v1094
        %v1096 = vpop.f32.mrb[0].mxu0
        %v1097 = vpop.f32.mrb[0].mxu0
        %v1098 = vpop.f32.mrb[0].mxu0
        %1099 = vmatprep.mubr.bf16.mxu0 0
        %1100 = vmatmul.mubr.bf16.gmra.mrb[0].mxu0 %v914
        %v1101 = vpop.f32.mrb[0].mxu0
        %v1102 = vadd.f32 0.0, %v1101
        %v1103 = vpop.f32.mrb[0].mxu0
        %v1104 = vpop.f32.mrb[0].mxu0
        %v1105 = vadd.f32 0.0, %v1104
        %v1106 = vpop.f32.mrb[0].mxu0
        %1107 = vmatprep.mubr.bf16.mxu0 0
        %1108 = vmatmul.mubr.bf16.gmra.mrb[0].mxu0 %v917
        %v1109 = vpop.f32.mrb[0].mxu0
        %v1110 = vpop.f32.mrb[0].mxu0
        %v1111 = vpop.f32.mrb[0].mxu0
        %v1112 = vadd.f32 0.0, %v1111
        %v1113 = vpop.f32.mrb[0].mxu0
        %1114 = vmatprep.mubr.bf16.mxu0 0
        %1115 = vmatmul.mubr.bf16.gmra.mrb[0].mxu0 %v920
        %v1116 = vpop.f32.mrb[0].mxu0
        %v1117 = vadd.f32 0.0, %v1116
        %v1118 = vpop.f32.mrb[0].mxu0
        %v1119 = vpop.f32.mrb[0].mxu0
        %v1120 = vpop.f32.mrb[0].mxu0
        %1121 = vmatprep.mubr.bf16.mxu0 0
        %1122 = vmatmul.mubr.bf16.gmra.mrb[0].mxu0 %v923
        %v1123 = vpop.f32.mrb[0].mxu0
        %v1124 = vadd.f32 0.0, %v1123
        %v1125 = vpop.f32.mrb[0].mxu0
        %v1126 = vpop.f32.mrb[0].mxu0
        %v1127 = vadd.f32 0.0, %v1126
        %v1128 = vpop.f32.mrb[0].mxu0
        %1129 = vmatprep.mubr.bf16.mxu0 0
        %1130 = vmatmul.mubr.bf16.gmra.mrb[0].mxu0 %v926
        %v1131 = vpop.f32.mrb[0].mxu0
        %v1132 = vpop.f32.mrb[0].mxu0
        %v1133 = vpop.f32.mrb[0].mxu0
        %v1134 = vadd.f32 0.0, %v1133
        %v1135 = vpop.f32.mrb[0].mxu0
        %1136 = vmatprep.mubr.bf16.mxu0 0
        %1137 = vmatmul.mubr.bf16.gmra.mrb[0].mxu0 %v929
        %v1138 = vpop.f32.mrb[0].mxu0
        %v1139 = vadd.f32 0.0, %v1138
        %v1140 = vpop.f32.mrb[0].mxu0
        %v1141 = vpop.f32.mrb[0].mxu0
        %v1142 = vpop.f32.mrb[0].mxu0
        %1143 = vdwg.mxu0
        %vm1144 = vsmask.f32 4352
        %v1146 = vshrl.u32 %v755, 16
        %v1148 = vrot.slane %v1146, 3
        %v1149 = vshll.u32 %v755, 16
        %v1151 = vrot.slane %v1149, 4
        %v1152 = vor.u32 %v1148, %v1151
        %v1154 = vshrl.u32 %v756, 16
        %v1156 = vrot.slane %v1154, 3
        %v1157 = vshll.u32 %v756, 16
        %v1159 = vrot.slane %v1157, 4
        %v1160 = vor.u32 %v1156, %v1159
        %v1161 = vsel %vm1144, %v1152, %v1160
        %v1163 = vshrl.u32 %v757, 16
        %v1165 = vrot.slane %v1163, 3
        %v1166 = vshll.u32 %v757, 16
        %v1168 = vrot.slane %v1166, 4
        %v1169 = vor.u32 %v1165, %v1168
        %v1170 = vsel %vm1144, %v1160, %v1169
        %v1172 = vshrl.u32 %v758, 16
        %v1174 = vrot.slane %v1172, 3
        %v1175 = vshll.u32 %v758, 16
        %v1177 = vrot.slane %v1175, 4
        %v1178 = vor.u32 %v1174, %v1177
        %v1179 = vsel %vm1144, %v1169, %v1178
        %v1181 = vshrl.u32 %v759, 16
        %v1183 = vrot.slane %v1181, 3
        %v1184 = vshll.u32 %v759, 16
        %v1186 = vrot.slane %v1184, 4
        %v1187 = vor.u32 %v1183, %v1186
        %v1188 = vsel %vm1144, %v1178, %v1187
        %v1190 = vshrl.u32 %v760, 16
        %v1192 = vrot.slane %v1190, 3
        %v1193 = vshll.u32 %v760, 16
        %v1195 = vrot.slane %v1193, 4
        %v1196 = vor.u32 %v1192, %v1195
        %v1197 = vsel %vm1144, %v1187, %v1196
        %v1199 = vshrl.u32 %v761, 16
        %v1201 = vrot.slane %v1199, 3
        %v1202 = vshll.u32 %v761, 16
        %v1204 = vrot.slane %v1202, 4
        %v1205 = vor.u32 %v1201, %v1204
        %v1206 = vsel %vm1144, %v1196, %v1205
        %v1208 = vshrl.u32 %v762, 16
        %v1210 = vrot.slane %v1208, 3
        %v1211 = vshll.u32 %v762, 16
        %v1213 = vrot.slane %v1211, 4
        %v1214 = vor.u32 %v1210, %v1213
        %v1215 = vsel %vm1144, %v1205, %v1214
        %v1217 = vshrl.u32 %v763, 16
        %v1219 = vrot.slane %v1217, 3
        %v1220 = vshll.u32 %v763, 16
        %v1222 = vrot.slane %v1220, 4
        %v1223 = vor.u32 %v1219, %v1222
        %v1224 = vsel %vm1144, %v1214, %v1223
        %v1226 = vshrl.u32 %v764, 16
        %v1228 = vrot.slane %v1226, 3
        %v1229 = vshll.u32 %v764, 16
        %v1231 = vrot.slane %v1229, 4
        %v1232 = vor.u32 %v1228, %v1231
        %v1233 = vsel %vm1144, %v1223, %v1232
        %v1235 = vshrl.u32 %v765, 16
        %v1237 = vrot.slane %v1235, 3
        %v1238 = vshll.u32 %v765, 16
        %v1240 = vrot.slane %v1238, 4
        %v1241 = vor.u32 %v1237, %v1240
        %v1242 = vsel %vm1144, %v1232, %v1241
        %v1244 = vshrl.u32 %v766, 16
        %v1246 = vrot.slane %v1244, 3
        %v1247 = vshll.u32 %v766, 16
        %v1249 = vrot.slane %v1247, 4
        %v1250 = vor.u32 %v1246, %v1249
        %v1251 = vsel %vm1144, %v1241, %v1250
        %v1253 = vshrl.u32 %v767, 16
        %v1255 = vrot.slane %v1253, 3
        %v1256 = vshll.u32 %v767, 16
        %v1258 = vrot.slane %v1256, 4
        %v1259 = vor.u32 %v1255, %v1258
        %v1260 = vsel %vm1144, %v1250, %v1259
        %v1262 = vshrl.u32 %v768, 16
        %v1264 = vrot.slane %v1262, 3
        %v1265 = vshll.u32 %v768, 16
        %v1267 = vrot.slane %v1265, 4
        %v1268 = vor.u32 %v1264, %v1267
        %v1269 = vsel %vm1144, %v1259, %v1268
        %v1271 = vshrl.u32 %v769, 16
        %v1273 = vrot.slane %v1271, 3
        %v1274 = vshll.u32 %v769, 16
        %v1276 = vrot.slane %v1274, 4
        %v1277 = vor.u32 %v1273, %v1276
        %v1278 = vsel %vm1144, %v1268, %v1277
        %v1280 = vshrl.u32 %v770, 16
        %v1282 = vrot.slane %v1280, 3
        %v1283 = vshll.u32 %v770, 16
        %v1285 = vrot.slane %v1283, 4
        %v1286 = vor.u32 %v1282, %v1285
        %v1287 = vsel %vm1144, %v1277, %v1286
        %v1289 = vshrl.u32 %v771, 16
        %v1291 = vrot.slane %v1289, 3
        %v1292 = vshll.u32 %v771, 16
        %v1294 = vrot.slane %v1292, 4
        %v1295 = vor.u32 %v1291, %v1294
        %v1296 = vsel %vm1144, %v1286, %v1295
        %v1298 = vshrl.u32 %v772, 16
        %v1300 = vrot.slane %v1298, 3
        %v1301 = vshll.u32 %v772, 16
        %v1303 = vrot.slane %v1301, 4
        %v1304 = vor.u32 %v1300, %v1303
        %v1305 = vsel %vm1144, %v1295, %v1304
        %v1307 = vshrl.u32 %v773, 16
        %v1309 = vrot.slane %v1307, 3
        %v1310 = vshll.u32 %v773, 16
        %v1312 = vrot.slane %v1310, 4
        %v1313 = vor.u32 %v1309, %v1312
        %v1314 = vsel %vm1144, %v1304, %v1313
        %v1316 = vshrl.u32 %v774, 16
        %v1318 = vrot.slane %v1316, 3
        %v1319 = vshll.u32 %v774, 16
        %v1321 = vrot.slane %v1319, 4
        %v1322 = vor.u32 %v1318, %v1321
        %v1323 = vsel %vm1144, %v1313, %v1322
        %v1325 = vshrl.u32 %v775, 16
        %v1327 = vrot.slane %v1325, 3
        %v1328 = vshll.u32 %v775, 16
        %v1330 = vrot.slane %v1328, 4
        %v1331 = vor.u32 %v1327, %v1330
        %v1332 = vsel %vm1144, %v1322, %v1331
        %v1334 = vshrl.u32 %v776, 16
        %v1336 = vrot.slane %v1334, 3
        %v1337 = vshll.u32 %v776, 16
        %v1339 = vrot.slane %v1337, 4
        %v1340 = vor.u32 %v1336, %v1339
        %v1341 = vsel %vm1144, %v1331, %v1340
        %v1343 = vshrl.u32 %v777, 16
        %v1345 = vrot.slane %v1343, 3
        %v1346 = vshll.u32 %v777, 16
        %v1348 = vrot.slane %v1346, 4
        %v1349 = vor.u32 %v1345, %v1348
        %v1350 = vsel %vm1144, %v1340, %v1349
        %v1352 = vshrl.u32 %v778, 16
        %v1354 = vrot.slane %v1352, 3
        %v1355 = vshll.u32 %v778, 16
        %v1357 = vrot.slane %v1355, 4
        %v1358 = vor.u32 %v1354, %v1357
        %v1359 = vsel %vm1144, %v1349, %v1358
        %v1361 = vshrl.u32 %v779, 16
        %v1363 = vrot.slane %v1361, 3
        %v1364 = vshll.u32 %v779, 16
        %v1366 = vrot.slane %v1364, 4
        %v1367 = vor.u32 %v1363, %v1366
        %v1368 = vsel %vm1144, %v1358, %v1367
        %v1370 = vsel %vm627, %v1161, 0
        %v1373 = vsel %vm627, %v1170, 0
        %v1376 = vsel %vm627, %v1179, 0
        %v1379 = vsel %vm627, %v1188, 0
        %v1382 = vsel %vm627, %v1197, 0
        %v1385 = vsel %vm627, %v1206, 0
        %v1388 = vsel %vm627, %v1215, 0
        %v1391 = vsel %vm627, %v1224, 0
        %v1394 = vsel %vm627, %v1233, 0
        %v1397 = vsel %vm627, %v1242, 0
        %v1400 = vsel %vm627, %v1251, 0
        %v1403 = vsel %vm627, %v1260, 0
        %v1406 = vsel %vm627, %v1269, 0
        %v1409 = vsel %vm627, %v1278, 0
        %v1412 = vsel %vm627, %v1287, 0
        %v1415 = vsel %vm627, %v1296, 0
        %v1418 = vsel %vm627, %v1305, 0
        %v1421 = vsel %vm627, %v1314, 0
        %v1424 = vsel %vm627, %v1323, 0
        %v1427 = vsel %vm627, %v1332, 0
        %v1430 = vsel %vm627, %v1341, 0
        %v1433 = vsel %vm627, %v1350, 0
        %v1436 = vsel %vm627, %v1359, 0
        %v1439 = vsel %vm627, %v1368, 0
        %v1442 = vsel %vm931, %v780, 0
        %1444 = vmatprep.subr.bf16.mxu0 0
        %1445 = vmatpush1.bf16.msra.mxu0 %v1442
        %1446 = vmatprep.subr.bf16.mxu0 0
        %1447 = vmatpush1.bf16.msra.mxu0 0
        %1448 = vmatprep.subr.bf16.mxu0 0
        %1449 = vmatpush1.bf16.msra.mxu0 0
        %1450 = vmatprep.subr.bf16.mxu0 0
        %1451 = vmatpush1.bf16.msra.mxu0 0
        %1452 = vmatprep.subr.bf16.mxu0 0
        %1453 = vmatpush1.bf16.msra.mxu0 0
        %1454 = vmatprep.subr.bf16.mxu0 0
        %1455 = vmatpush1.bf16.msra.mxu0 0
        %1456 = vmatprep.subr.bf16.mxu0 0
        %1457 = vmatpush1.bf16.msra.mxu0 0
        %1458 = vmatprep.subr.bf16.mxu0 0
        %1459 = vmatpush1.bf16.msra.mxu0 0
        %1460 = vmatprep.subr.bf16.mxu0 0
        %1461 = vmatpush1.bf16.msra.mxu0 0
        %1462 = vmatprep.subr.bf16.mxu0 0
        %1463 = vmatpush1.bf16.msra.mxu0 0
        %1464 = vmatprep.subr.bf16.mxu0 0
        %1465 = vmatpush1.bf16.msra.mxu0 0
        %1466 = vmatprep.subr.bf16.mxu0 0
        %1467 = vmatpush1.bf16.msra.mxu0 0
        %1468 = vmatprep.subr.bf16.mxu0 0
        %1469 = vmatpush1.bf16.msra.mxu0 0
        %1470 = vmatprep.subr.bf16.mxu0 0
        %1471 = vmatpush1.bf16.msra.mxu0 0
        %1472 = vmatprep.subr.bf16.mxu0 0
        %1473 = vmatpush1.bf16.msra.mxu0 0
        %1474 = vmatprep.subr.bf16.mxu0 0
        %1475 = vmatpush1.bf16.msra.mxu0 0
        %1476 = vmatprep.mubr.bf16.mxu0 0
        %1477 = vmatmul.mubr.bf16.gmra.mrb[0].mxu0 %v1370
        %v1478 = vpop.f32.mrb[0].mxu0
        %v1479 = vadd.f32 %v970, %v1478
        %v1480 = vpop.f32.mrb[0].mxu0
        %v1481 = vpop.f32.mrb[0].mxu0
        %v1482 = vadd.f32 %v973, %v1481
        %v1483 = vpop.f32.mrb[0].mxu0
        %1484 = vmatprep.mubr.bf16.mxu0 0
        %1485 = vmatmul.mubr.bf16.gmra.mrb[0].mxu0 %v1373
        %v1486 = vpop.f32.mrb[0].mxu0
        %v1487 = vpop.f32.mrb[0].mxu0
        %v1488 = vpop.f32.mrb[0].mxu0
        %v1489 = vadd.f32 %v980, %v1488
        %v1490 = vpop.f32.mrb[0].mxu0
        %1491 = vmatprep.mubr.bf16.mxu0 0
        %1492 = vmatmul.mubr.bf16.gmra.mrb[0].mxu0 %v1376
        %v1493 = vpop.f32.mrb[0].mxu0
        %v1494 = vadd.f32 %v985, %v1493
        %v1495 = vpop.f32.mrb[0].mxu0
        %v1496 = vpop.f32.mrb[0].mxu0
        %v1497 = vpop.f32.mrb[0].mxu0
        %1498 = vmatprep.mubr.bf16.mxu0 0
        %1499 = vmatmul.mubr.bf16.gmra.mrb[0].mxu0 %v1379
        %v1500 = vpop.f32.mrb[0].mxu0
        %v1501 = vadd.f32 %v992, %v1500
        %v1502 = vpop.f32.mrb[0].mxu0
        %v1503 = vpop.f32.mrb[0].mxu0
        %v1504 = vadd.f32 %v995, %v1503
        %v1505 = vpop.f32.mrb[0].mxu0
        %1506 = vmatprep.mubr.bf16.mxu0 0
        %1507 = vmatmul.mubr.bf16.gmra.mrb[0].mxu0 %v1382
        %v1508 = vpop.f32.mrb[0].mxu0
        %v1509 = vpop.f32.mrb[0].mxu0
        %v1510 = vpop.f32.mrb[0].mxu0
        %v1511 = vadd.f32 %v1002, %v1510
        %v1512 = vpop.f32.mrb[0].mxu0
        %1513 = vmatprep.mubr.bf16.mxu0 0
        %1514 = vmatmul.mubr.bf16.gmra.mrb[0].mxu0 %v1385
        %v1515 = vpop.f32.mrb[0].mxu0
        %v1516 = vadd.f32 %v1007, %v1515
        %v1517 = vpop.f32.mrb[0].mxu0
        %v1518 = vpop.f32.mrb[0].mxu0
        %v1519 = vpop.f32.mrb[0].mxu0
        %1520 = vmatprep.mubr.bf16.mxu0 0
        %1521 = vmatmul.mubr.bf16.gmra.mrb[0].mxu0 %v1388
        %v1522 = vpop.f32.mrb[0].mxu0
        %v1523 = vadd.f32 %v1014, %v1522
        %v1524 = vpop.f32.mrb[0].mxu0
        %v1525 = vpop.f32.mrb[0].mxu0
        %v1526 = vadd.f32 %v1017, %v1525
        %v1527 = vpop.f32.mrb[0].mxu0
        %1528 = vmatprep.mubr.bf16.mxu0 0
        %1529 = vmatmul.mubr.bf16.gmra.mrb[0].mxu0 %v1391
        %v1530 = vpop.f32.mrb[0].mxu0
        %v1531 = vpop.f32.mrb[0].mxu0
        %v1532 = vpop.f32.mrb[0].mxu0
        %v1533 = vadd.f32 %v1024, %v1532
        %v1534 = vpop.f32.mrb[0].mxu0
        %1535 = vmatprep.mubr.bf16.mxu0 0
        %1536 = vmatmul.mubr.bf16.gmra.mrb[0].mxu0 %v1394
        %v1537 = vpop.f32.mrb[0].mxu0
        %v1538 = vadd.f32 %v1029, %v1537
        %v1539 = vpop.f32.mrb[0].mxu0
        %v1540 = vpop.f32.mrb[0].mxu0
        %v1541 = vpop.f32.mrb[0].mxu0
        %1542 = vmatprep.mubr.bf16.mxu0 0
        %1543 = vmatmul.mubr.bf16.gmra.mrb[0].mxu0 %v1397
        %v1544 = vpop.f32.mrb[0].mxu0
        %v1545 = vadd.f32 %v1036, %v1544
        %v1546 = vpop.f32.mrb[0].mxu0
        %v1547 = vpop.f32.mrb[0].mxu0
        %v1548 = vadd.f32 %v1039, %v1547
        %v1549 = vpop.f32.mrb[0].mxu0
        %1550 = vmatprep.mubr.bf16.mxu0 0
        %1551 = vmatmul.mubr.bf16.gmra.mrb[0].mxu0 %v1400
        %v1552 = vpop.f32.mrb[0].mxu0
        %v1553 = vpop.f32.mrb[0].mxu0
        %v1554 = vpop.f32.mrb[0].mxu0
        %v1555 = vadd.f32 %v1046, %v1554
        %v1556 = vpop.f32.mrb[0].mxu0
        %1557 = vmatprep.mubr.bf16.mxu0 0
        %1558 = vmatmul.mubr.bf16.gmra.mrb[0].mxu0 %v1403
        %v1559 = vpop.f32.mrb[0].mxu0
        %v1560 = vadd.f32 %v1051, %v1559
        %v1561 = vpop.f32.mrb[0].mxu0
        %v1562 = vpop.f32.mrb[0].mxu0
        %v1563 = vpop.f32.mrb[0].mxu0
        %1564 = vmatprep.mubr.bf16.mxu0 0
        %1565 = vmatmul.mubr.bf16.gmra.mrb[0].mxu0 %v1406
        %v1566 = vpop.f32.mrb[0].mxu0
        %v1567 = vadd.f32 %v1058, %v1566
        %v1568 = vpop.f32.mrb[0].mxu0
        %v1569 = vpop.f32.mrb[0].mxu0
        %v1570 = vadd.f32 %v1061, %v1569
        %v1571 = vpop.f32.mrb[0].mxu0
        %1572 = vmatprep.mubr.bf16.mxu0 0
        %1573 = vmatmul.mubr.bf16.gmra.mrb[0].mxu0 %v1409
        %v1574 = vpop.f32.mrb[0].mxu0
        %v1575 = vpop.f32.mrb[0].mxu0
        %v1576 = vpop.f32.mrb[0].mxu0
        %v1577 = vadd.f32 %v1068, %v1576
        %v1578 = vpop.f32.mrb[0].mxu0
        %1579 = vmatprep.mubr.bf16.mxu0 0
        %1580 = vmatmul.mubr.bf16.gmra.mrb[0].mxu0 %v1412
        %v1581 = vpop.f32.mrb[0].mxu0
        %v1582 = vadd.f32 %v1073, %v1581
        %v1583 = vpop.f32.mrb[0].mxu0
        %v1584 = vpop.f32.mrb[0].mxu0
        %v1585 = vpop.f32.mrb[0].mxu0
        %1586 = vmatprep.mubr.bf16.mxu0 0
        %1587 = vmatmul.mubr.bf16.gmra.mrb[0].mxu0 %v1415
        %v1588 = vpop.f32.mrb[0].mxu0
        %v1589 = vadd.f32 %v1080, %v1588
        %v1590 = vpop.f32.mrb[0].mxu0
        %v1591 = vpop.f32.mrb[0].mxu0
        %v1592 = vadd.f32 %v1083, %v1591
        %v1593 = vpop.f32.mrb[0].mxu0
        %1594 = vmatprep.mubr.bf16.mxu0 0
        %1595 = vmatmul.mubr.bf16.gmra.mrb[0].mxu0 %v1418
        %v1596 = vpop.f32.mrb[0].mxu0
        %v1597 = vpop.f32.mrb[0].mxu0
        %v1598 = vpop.f32.mrb[0].mxu0
        %v1599 = vadd.f32 %v1090, %v1598
        %v1600 = vpop.f32.mrb[0].mxu0
        %1601 = vmatprep.mubr.bf16.mxu0 0
        %1602 = vmatmul.mubr.bf16.gmra.mrb[0].mxu0 %v1421
        %v1603 = vpop.f32.mrb[0].mxu0
        %v1604 = vadd.f32 %v1095, %v1603
        %v1605 = vpop.f32.mrb[0].mxu0
        %v1606 = vpop.f32.mrb[0].mxu0
        %v1607 = vpop.f32.mrb[0].mxu0
        %1608 = vmatprep.mubr.bf16.mxu0 0
        %1609 = vmatmul.mubr.bf16.gmra.mrb[0].mxu0 %v1424
        %v1610 = vpop.f32.mrb[0].mxu0
        %v1611 = vadd.f32 %v1102, %v1610
        %v1612 = vpop.f32.mrb[0].mxu0
        %v1613 = vpop.f32.mrb[0].mxu0
        %v1614 = vadd.f32 %v1105, %v1613
        %v1615 = vpop.f32.mrb[0].mxu0
        %1616 = vmatprep.mubr.bf16.mxu0 0
        %1617 = vmatmul.mubr.bf16.gmra.mrb[0].mxu0 %v1427
        %v1618 = vpop.f32.mrb[0].mxu0
        %v1619 = vpop.f32.mrb[0].mxu0
        %v1620 = vpop.f32.mrb[0].mxu0
        %v1621 = vadd.f32 %v1112, %v1620
        %v1622 = vpop.f32.mrb[0].mxu0
        %1623 = vmatprep.mubr.bf16.mxu0 0
        %1624 = vmatmul.mubr.bf16.gmra.mrb[0].mxu0 %v1430
        %v1625 = vpop.f32.mrb[0].mxu0
        %v1626 = vadd.f32 %v1117, %v1625
        %v1627 = vpop.f32.mrb[0].mxu0
        %v1628 = vpop.f32.mrb[0].mxu0
        %v1629 = vpop.f32.mrb[0].mxu0
        %1630 = vmatprep.mubr.bf16.mxu0 0
        %1631 = vmatmul.mubr.bf16.gmra.mrb[0].mxu0 %v1433
        %v1632 = vpop.f32.mrb[0].mxu0
        %v1633 = vadd.f32 %v1124, %v1632
        %v1634 = vpop.f32.mrb[0].mxu0
        %v1635 = vpop.f32.mrb[0].mxu0
        %v1636 = vadd.f32 %v1127, %v1635
        %v1637 = vpop.f32.mrb[0].mxu0
        %1638 = vmatprep.mubr.bf16.mxu0 0
        %1639 = vmatmul.mubr.bf16.gmra.mrb[0].mxu0 %v1436
        %v1640 = vpop.f32.mrb[0].mxu0
        %v1641 = vpop.f32.mrb[0].mxu0
        %v1642 = vpop.f32.mrb[0].mxu0
        %v1643 = vadd.f32 %v1134, %v1642
        %v1644 = vpop.f32.mrb[0].mxu0
        %1645 = vmatprep.mubr.bf16.mxu0 0
        %1646 = vmatmul.mubr.bf16.gmra.mrb[0].mxu0 %v1439
        %v1647 = vpop.f32.mrb[0].mxu0
        %v1648 = vadd.f32 %v1139, %v1647
        %v1649 = vpop.f32.mrb[0].mxu0
        %v1650 = vpop.f32.mrb[0].mxu0
        %v1651 = vpop.f32.mrb[0].mxu0
        %1652 = vdwg.mxu0
        %v1653 = vld [vmem:[#allocation2 + $0xc8] sm:$0x1f]
        %s1654 = scalar_lea.vmem %s2, 8
        %v1655 = vld [vmem:[%s1654] sm:$0xf]
        %vm1656 = vsmask.f32 3328
        %v1658 = vshrl.u32 %v781, 16
        %v1660 = vrot.slane %v1658, 4
        %v1661 = vshll.u32 %v781, 16
        %v1663 = vrot.slane %v1661, 5
        %v1664 = vor.u32 %v1660, %v1663
        %v1665 = vrot.slane %v1154, 4
        %v1666 = vrot.slane %v1157, 5
        %v1667 = vor.u32 %v1665, %v1666
        %v1668 = vsel %vm1656, %v1664, %v1667
        %v1669 = vrot.slane %v1163, 4
        %v1670 = vrot.slane %v1166, 5
        %v1671 = vor.u32 %v1669, %v1670
        %v1672 = vsel %vm1656, %v1667, %v1671
        %v1673 = vrot.slane %v1172, 4
        %v1674 = vrot.slane %v1175, 5
        %v1675 = vor.u32 %v1673, %v1674
        %v1676 = vsel %vm1656, %v1671, %v1675
        %v1677 = vrot.slane %v1181, 4
        %v1678 = vrot.slane %v1184, 5
        %v1679 = vor.u32 %v1677, %v1678
        %v1680 = vsel %vm1656, %v1675, %v1679
        %v1681 = vrot.slane %v1190, 4
        %v1682 = vrot.slane %v1193, 5
        %v1683 = vor.u32 %v1681, %v1682
        %v1684 = vsel %vm1656, %v1679, %v1683
        %v1685 = vrot.slane %v1199, 4
        %v1686 = vrot.slane %v1202, 5
        %v1687 = vor.u32 %v1685, %v1686
        %v1688 = vsel %vm1656, %v1683, %v1687
        %v1689 = vrot.slane %v1208, 4
        %v1690 = vrot.slane %v1211, 5
        %v1691 = vor.u32 %v1689, %v1690
        %v1692 = vsel %vm1656, %v1687, %v1691
        %v1693 = vrot.slane %v1217, 4
        %v1694 = vrot.slane %v1220, 5
        %v1695 = vor.u32 %v1693, %v1694
        %v1696 = vsel %vm1656, %v1691, %v1695
        %v1697 = vrot.slane %v1226, 4
        %v1698 = vrot.slane %v1229, 5
        %v1699 = vor.u32 %v1697, %v1698
        %v1700 = vsel %vm1656, %v1695, %v1699
        %v1701 = vrot.slane %v1235, 4
        %v1702 = vrot.slane %v1238, 5
        %v1703 = vor.u32 %v1701, %v1702
        %v1704 = vsel %vm1656, %v1699, %v1703
        %v1705 = vrot.slane %v1244, 4
        %v1706 = vrot.slane %v1247, 5
        %v1707 = vor.u32 %v1705, %v1706
        %v1708 = vsel %vm1656, %v1703, %v1707
        %v1709 = vrot.slane %v1253, 4
        %v1710 = vrot.slane %v1256, 5
        %v1711 = vor.u32 %v1709, %v1710
        %v1712 = vsel %vm1656, %v1707, %v1711
        %v1713 = vrot.slane %v1262, 4
        %v1714 = vrot.slane %v1265, 5
        %v1715 = vor.u32 %v1713, %v1714
        %v1716 = vsel %vm1656, %v1711, %v1715
        %v1717 = vrot.slane %v1271, 4
        %v1718 = vrot.slane %v1274, 5
        %v1719 = vor.u32 %v1717, %v1718
        %v1720 = vsel %vm1656, %v1715, %v1719
        %v1721 = vrot.slane %v1280, 4
        %v1722 = vrot.slane %v1283, 5
        %v1723 = vor.u32 %v1721, %v1722
        %v1724 = vsel %vm1656, %v1719, %v1723
        %v1725 = vrot.slane %v1289, 4
        %v1726 = vrot.slane %v1292, 5
        %v1727 = vor.u32 %v1725, %v1726
        %v1728 = vsel %vm1656, %v1723, %v1727
        %v1729 = vrot.slane %v1298, 4
        %v1730 = vrot.slane %v1301, 5
        %v1731 = vor.u32 %v1729, %v1730
        %v1732 = vsel %vm1656, %v1727, %v1731
        %v1733 = vrot.slane %v1307, 4
        %v1734 = vrot.slane %v1310, 5
        %v1735 = vor.u32 %v1733, %v1734
        %v1736 = vsel %vm1656, %v1731, %v1735
        %v1737 = vrot.slane %v1316, 4
        %v1738 = vrot.slane %v1319, 5
        %v1739 = vor.u32 %v1737, %v1738
        %v1740 = vsel %vm1656, %v1735, %v1739
        %v1741 = vrot.slane %v1325, 4
        %v1742 = vrot.slane %v1328, 5
        %v1743 = vor.u32 %v1741, %v1742
        %v1744 = vsel %vm1656, %v1739, %v1743
        %v1745 = vrot.slane %v1334, 4
        %v1746 = vrot.slane %v1337, 5
        %v1747 = vor.u32 %v1745, %v1746
        %v1748 = vsel %vm1656, %v1743, %v1747
        %v1749 = vrot.slane %v1343, 4
        %v1750 = vrot.slane %v1346, 5
        %v1751 = vor.u32 %v1749, %v1750
        %v1752 = vsel %vm1656, %v1747, %v1751
        %v1753 = vrot.slane %v1352, 4
        %v1754 = vrot.slane %v1355, 5
        %v1755 = vor.u32 %v1753, %v1754
        %v1756 = vsel %vm1656, %v1751, %v1755
        %v1758 = vshrl.u32 %v1653, 16
        %v1760 = vrot.slane %v1758, 4
        %v1761 = vshll.u32 %v1653, 16
        %v1763 = vrot.slane %v1761, 5
        %v1764 = vor.u32 %v1760, %v1763
        %v1765 = vsel %vm1656, %v1755, %v1764
        %v1767 = vsel %vm627, %v1668, 0
        %v1770 = vsel %vm627, %v1672, 0
        %v1773 = vsel %vm627, %v1676, 0
        %v1776 = vsel %vm627, %v1680, 0
        %v1779 = vsel %vm627, %v1684, 0
        %v1782 = vsel %vm627, %v1688, 0
        %v1785 = vsel %vm627, %v1692, 0
        %v1788 = vsel %vm627, %v1696, 0
        %v1791 = vsel %vm627, %v1700, 0
        %v1794 = vsel %vm627, %v1704, 0
        %v1797 = vsel %vm627, %v1708, 0
        %v1800 = vsel %vm627, %v1712, 0
        %v1803 = vsel %vm627, %v1716, 0
        %v1806 = vsel %vm627, %v1720, 0
        %v1809 = vsel %vm627, %v1724, 0
        %v1812 = vsel %vm627, %v1728, 0
        %v1815 = vsel %vm627, %v1732, 0
        %v1818 = vsel %vm627, %v1736, 0
        %v1821 = vsel %vm627, %v1740, 0
        %v1824 = vsel %vm627, %v1744, 0
        %v1827 = vsel %vm627, %v1748, 0
        %v1830 = vsel %vm627, %v1752, 0
        %v1833 = vsel %vm627, %v1756, 0
        %v1836 = vsel %vm627, %v1765, 0
        %v1839 = vsel %vm931, %v1655, 0
        %1841 = vmatprep.subr.bf16.mxu0 0
        %1842 = vmatpush1.bf16.msra.mxu0 %v1839
        %1843 = vmatprep.subr.bf16.mxu0 0
        %1844 = vmatpush1.bf16.msra.mxu0 0
        %1845 = vmatprep.subr.bf16.mxu0 0
        %1846 = vmatpush1.bf16.msra.mxu0 0
        %1847 = vmatprep.subr.bf16.mxu0 0
        %1848 = vmatpush1.bf16.msra.mxu0 0
        %1849 = vmatprep.subr.bf16.mxu0 0
        %1850 = vmatpush1.bf16.msra.mxu0 0
        %1851 = vmatprep.subr.bf16.mxu0 0
        %1852 = vmatpush1.bf16.msra.mxu0 0
        %1853 = vmatprep.subr.bf16.mxu0 0
        %1854 = vmatpush1.bf16.msra.mxu0 0
        %1855 = vmatprep.subr.bf16.mxu0 0
        %1856 = vmatpush1.bf16.msra.mxu0 0
        %1857 = vmatprep.subr.bf16.mxu0 0
        %1858 = vmatpush1.bf16.msra.mxu0 0
        %1859 = vmatprep.subr.bf16.mxu0 0
        %1860 = vmatpush1.bf16.msra.mxu0 0
        %1861 = vmatprep.subr.bf16.mxu0 0
        %1862 = vmatpush1.bf16.msra.mxu0 0
        %1863 = vmatprep.subr.bf16.mxu0 0
        %1864 = vmatpush1.bf16.msra.mxu0 0
        %1865 = vmatprep.subr.bf16.mxu0 0
        %1866 = vmatpush1.bf16.msra.mxu0 0
        %1867 = vmatprep.subr.bf16.mxu0 0
        %1868 = vmatpush1.bf16.msra.mxu0 0
        %1869 = vmatprep.subr.bf16.mxu0 0
        %1870 = vmatpush1.bf16.msra.mxu0 0
        %1871 = vmatprep.subr.bf16.mxu0 0
        %1872 = vmatpush1.bf16.msra.mxu0 0
        %1873 = vmatprep.mubr.bf16.mxu0 0
        %1874 = vmatmul.mubr.bf16.gmra.mrb[0].mxu0 %v1767
        %v1875 = vpop.f32.mrb[0].mxu0
        %v1876 = vadd.f32 0.0, %v1875
        %v1877 = vpop.f32.mrb[0].mxu0
        %v1878 = vpop.f32.mrb[0].mxu0
        %v1879 = vadd.f32 0.0, %v1878
        %v1880 = vpop.f32.mrb[0].mxu0
        %1881 = vmatprep.mubr.bf16.mxu0 0
        %1882 = vmatmul.mubr.bf16.gmra.mrb[0].mxu0 %v1770
        %v1883 = vpop.f32.mrb[0].mxu0
        %v1884 = vpop.f32.mrb[0].mxu0
        %v1885 = vpop.f32.mrb[0].mxu0
        %v1886 = vadd.f32 0.0, %v1885
        %v1887 = vpop.f32.mrb[0].mxu0
        %1888 = vmatprep.mubr.bf16.mxu0 0
        %1889 = vmatmul.mubr.bf16.gmra.mrb[0].mxu0 %v1773
        %v1890 = vpop.f32.mrb[0].mxu0
        %v1891 = vadd.f32 0.0, %v1890
        %v1892 = vpop.f32.mrb[0].mxu0
        %v1893 = vpop.f32.mrb[0].mxu0
        %v1894 = vpop.f32.mrb[0].mxu0
        %1895 = vmatprep.mubr.bf16.mxu0 0
        %1896 = vmatmul.mubr.bf16.gmra.mrb[0].mxu0 %v1776
        %v1897 = vpop.f32.mrb[0].mxu0
        %v1898 = vadd.f32 0.0, %v1897
        %v1899 = vpop.f32.mrb[0].mxu0
        %v1900 = vpop.f32.mrb[0].mxu0
        %v1901 = vadd.f32 0.0, %v1900
        %v1902 = vpop.f32.mrb[0].mxu0
        %1903 = vmatprep.mubr.bf16.mxu0 0
        %1904 = vmatmul.mubr.bf16.gmra.mrb[0].mxu0 %v1779
        %v1905 = vpop.f32.mrb[0].mxu0
        %v1906 = vpop.f32.mrb[0].mxu0
        %v1907 = vpop.f32.mrb[0].mxu0
        %v1908 = vadd.f32 0.0, %v1907
        %v1909 = vpop.f32.mrb[0].mxu0
        %1910 = vmatprep.mubr.bf16.mxu0 0
        %1911 = vmatmul.mubr.bf16.gmra.mrb[0].mxu0 %v1782
        %v1912 = vpop.f32.mrb[0].mxu0
        %v1913 = vadd.f32 0.0, %v1912
        %v1914 = vpop.f32.mrb[0].mxu0
        %v1915 = vpop.f32.mrb[0].mxu0
        %v1916 = vpop.f32.mrb[0].mxu0
        %1917 = vmatprep.mubr.bf16.mxu0 0
        %1918 = vmatmul.mubr.bf16.gmra.mrb[0].mxu0 %v1785
        %v1919 = vpop.f32.mrb[0].mxu0
        %v1920 = vadd.f32 0.0, %v1919
        %v1921 = vpop.f32.mrb[0].mxu0
        %v1922 = vpop.f32.mrb[0].mxu0
        %v1923 = vadd.f32 0.0, %v1922
        %v1924 = vpop.f32.mrb[0].mxu0
        %1925 = vmatprep.mubr.bf16.mxu0 0
        %1926 = vmatmul.mubr.bf16.gmra.mrb[0].mxu0 %v1788
        %v1927 = vpop.f32.mrb[0].mxu0
        %v1928 = vpop.f32.mrb[0].mxu0
        %v1929 = vpop.f32.mrb[0].mxu0
        %v1930 = vadd.f32 0.0, %v1929
        %v1931 = vpop.f32.mrb[0].mxu0
        %1932 = vmatprep.mubr.bf16.mxu0 0
        %1933 = vmatmul.mubr.bf16.gmra.mrb[0].mxu0 %v1791
        %v1934 = vpop.f32.mrb[0].mxu0
        %v1935 = vadd.f32 0.0, %v1934
        %v1936 = vpop.f32.mrb[0].mxu0
        %v1937 = vpop.f32.mrb[0].mxu0
        %v1938 = vpop.f32.mrb[0].mxu0
        %1939 = vmatprep.mubr.bf16.mxu0 0
        %1940 = vmatmul.mubr.bf16.gmra.mrb[0].mxu0 %v1794
        %v1941 = vpop.f32.mrb[0].mxu0
        %v1942 = vadd.f32 0.0, %v1941
        %v1943 = vpop.f32.mrb[0].mxu0
        %v1944 = vpop.f32.mrb[0].mxu0
        %v1945 = vadd.f32 0.0, %v1944
        %v1946 = vpop.f32.mrb[0].mxu0
        %1947 = vmatprep.mubr.bf16.mxu0 0
        %1948 = vmatmul.mubr.bf16.gmra.mrb[0].mxu0 %v1797
        %v1949 = vpop.f32.mrb[0].mxu0
        %v1950 = vpop.f32.mrb[0].mxu0
        %v1951 = vpop.f32.mrb[0].mxu0
        %v1952 = vadd.f32 0.0, %v1951
        %v1953 = vpop.f32.mrb[0].mxu0
        %1954 = vmatprep.mubr.bf16.mxu0 0
        %1955 = vmatmul.mubr.bf16.gmra.mrb[0].mxu0 %v1800
        %v1956 = vpop.f32.mrb[0].mxu0
        %v1957 = vadd.f32 0.0, %v1956
        %v1958 = vpop.f32.mrb[0].mxu0
        %v1959 = vpop.f32.mrb[0].mxu0
        %v1960 = vpop.f32.mrb[0].mxu0
        %1961 = vmatprep.mubr.bf16.mxu0 0
        %1962 = vmatmul.mubr.bf16.gmra.mrb[0].mxu0 %v1803
        %v1963 = vpop.f32.mrb[0].mxu0
        %v1964 = vadd.f32 0.0, %v1963
        %v1965 = vpop.f32.mrb[0].mxu0
        %v1966 = vpop.f32.mrb[0].mxu0
        %v1967 = vadd.f32 0.0, %v1966
        %v1968 = vpop.f32.mrb[0].mxu0
        %1969 = vmatprep.mubr.bf16.mxu0 0
        %1970 = vmatmul.mubr.bf16.gmra.mrb[0].mxu0 %v1806
        %v1971 = vpop.f32.mrb[0].mxu0
        %v1972 = vpop.f32.mrb[0].mxu0
        %v1973 = vpop.f32.mrb[0].mxu0
        %v1974 = vadd.f32 0.0, %v1973
        %v1975 = vpop.f32.mrb[0].mxu0
        %1976 = vmatprep.mubr.bf16.mxu0 0
        %1977 = vmatmul.mubr.bf16.gmra.mrb[0].mxu0 %v1809
        %v1978 = vpop.f32.mrb[0].mxu0
        %v1979 = vadd.f32 0.0, %v1978
        %v1980 = vpop.f32.mrb[0].mxu0
        %v1981 = vpop.f32.mrb[0].mxu0
        %v1982 = vpop.f32.mrb[0].mxu0
        %1983 = vmatprep.mubr.bf16.mxu0 0
        %1984 = vmatmul.mubr.bf16.gmra.mrb[0].mxu0 %v1812
        %v1985 = vpop.f32.mrb[0].mxu0
        %v1986 = vadd.f32 0.0, %v1985
        %v1987 = vpop.f32.mrb[0].mxu0
        %v1988 = vpop.f32.mrb[0].mxu0
        %v1989 = vadd.f32 0.0, %v1988
        %v1990 = vpop.f32.mrb[0].mxu0
        %1991 = vmatprep.mubr.bf16.mxu0 0
        %1992 = vmatmul.mubr.bf16.gmra.mrb[0].mxu0 %v1815
        %v1993 = vpop.f32.mrb[0].mxu0
        %v1994 = vpop.f32.mrb[0].mxu0
        %v1995 = vpop.f32.mrb[0].mxu0
        %v1996 = vadd.f32 0.0, %v1995
        %v1997 = vpop.f32.mrb[0].mxu0
        %1998 = vmatprep.mubr.bf16.mxu0 0
        %1999 = vmatmul.mubr.bf16.gmra.mrb[0].mxu0 %v1818
        %v2000 = vpop.f32.mrb[0].mxu0
        %v2001 = vadd.f32 0.0, %v2000
        %v2002 = vpop.f32.mrb[0].mxu0
        %v2003 = vpop.f32.mrb[0].mxu0
        %v2004 = vpop.f32.mrb[0].mxu0
        %2005 = vmatprep.mubr.bf16.mxu0 0
        %2006 = vmatmul.mubr.bf16.gmra.mrb[0].mxu0 %v1821
        %v2007 = vpop.f32.mrb[0].mxu0
        %v2008 = vadd.f32 0.0, %v2007
        %v2009 = vpop.f32.mrb[0].mxu0
        %v2010 = vpop.f32.mrb[0].mxu0
        %v2011 = vadd.f32 0.0, %v2010
        %v2012 = vpop.f32.mrb[0].mxu0
        %2013 = vmatprep.mubr.bf16.mxu0 0
        %2014 = vmatmul.mubr.bf16.gmra.mrb[0].mxu0 %v1824
        %v2015 = vpop.f32.mrb[0].mxu0
        %v2016 = vpop.f32.mrb[0].mxu0
        %v2017 = vpop.f32.mrb[0].mxu0
        %v2018 = vadd.f32 0.0, %v2017
        %v2019 = vpop.f32.mrb[0].mxu0
        %2020 = vmatprep.mubr.bf16.mxu0 0
        %2021 = vmatmul.mubr.bf16.gmra.mrb[0].mxu0 %v1827
        %v2022 = vpop.f32.mrb[0].mxu0
        %v2023 = vadd.f32 0.0, %v2022
        %v2024 = vpop.f32.mrb[0].mxu0
        %v2025 = vpop.f32.mrb[0].mxu0
        %v2026 = vpop.f32.mrb[0].mxu0
        %2027 = vmatprep.mubr.bf16.mxu0 0
        %2028 = vmatmul.mubr.bf16.gmra.mrb[0].mxu0 %v1830
        %v2029 = vpop.f32.mrb[0].mxu0
        %v2030 = vadd.f32 0.0, %v2029
        %v2031 = vpop.f32.mrb[0].mxu0
        %v2032 = vpop.f32.mrb[0].mxu0
        %v2033 = vadd.f32 0.0, %v2032
        %v2034 = vpop.f32.mrb[0].mxu0
        %2035 = vmatprep.mubr.bf16.mxu0 0
        %2036 = vmatmul.mubr.bf16.gmra.mrb[0].mxu0 %v1833
        %v2037 = vpop.f32.mrb[0].mxu0
        %v2038 = vpop.f32.mrb[0].mxu0
        %v2039 = vpop.f32.mrb[0].mxu0
        %v2040 = vadd.f32 0.0, %v2039
        %v2041 = vpop.f32.mrb[0].mxu0
        %2042 = vmatprep.mubr.bf16.mxu0 0
        %2043 = vmatmul.mubr.bf16.gmra.mrb[0].mxu0 %v1836
        %v2044 = vpop.f32.mrb[0].mxu0
        %v2045 = vadd.f32 0.0, %v2044
        %v2046 = vpop.f32.mrb[0].mxu0
        %v2047 = vpop.f32.mrb[0].mxu0
        %v2048 = vpop.f32.mrb[0].mxu0
        %2049 = vdwg.mxu0
        %v2050 = vadd.f32 %v1479, %v1876
        %v2051 = vadd.f32 %v1482, %v1879
        %v2052 = vadd.f32 %v1489, %v1886
        %v2053 = vadd.f32 %v1494, %v1891
        %v2054 = vadd.f32 %v1501, %v1898
        %v2055 = vadd.f32 %v1504, %v1901
        %v2056 = vadd.f32 %v1511, %v1908
        %v2057 = vadd.f32 %v1516, %v1913
        %v2058 = vadd.f32 %v1523, %v1920
        %v2059 = vadd.f32 %v1526, %v1923
        %v2060 = vadd.f32 %v1533, %v1930
        %v2061 = vadd.f32 %v1538, %v1935
        %v2062 = vadd.f32 %v1545, %v1942
        %v2063 = vadd.f32 %v1548, %v1945
        %v2064 = vadd.f32 %v1555, %v1952
        %v2065 = vadd.f32 %v1560, %v1957
        %v2066 = vadd.f32 %v1567, %v1964
        %v2067 = vadd.f32 %v1570, %v1967
        %v2068 = vadd.f32 %v1577, %v1974
        %v2069 = vadd.f32 %v1582, %v1979
        %v2070 = vadd.f32 %v1589, %v1986
        %v2071 = vadd.f32 %v1592, %v1989
        %v2072 = vadd.f32 %v1599, %v1996
        %v2073 = vadd.f32 %v1604, %v2001
        %v2074 = vadd.f32 %v1611, %v2008
        %v2075 = vadd.f32 %v1614, %v2011
        %v2076 = vadd.f32 %v1621, %v2018
        %v2077 = vadd.f32 %v1626, %v2023
        %v2078 = vadd.f32 %v1633, %v2030
        %v2079 = vadd.f32 %v1636, %v2033
        %v2080 = vadd.f32 %v1643, %v2040
        %v2081 = vadd.f32 %v1648, %v2045
        %v2082 = vld [vmem:[#allocation2 + $0x10] sm:$0x80]
        %v2083 = vld [vmem:[#allocation2 + $0x18] sm:$0xff]
        %v2084 = vld [vmem:[#allocation2 + $0x20] sm:$0xff]
        %v2085 = vld [vmem:[#allocation2 + $0x28] sm:$0xff]
        %v2086 = vld [vmem:[#allocation2 + $0x30] sm:$0xff]
        %v2087 = vld [vmem:[#allocation2 + $0x38] sm:$0xff]
        %v2088 = vld [vmem:[#allocation2 + $0x40] sm:$0xff]
        %v2089 = vld [vmem:[#allocation2 + $0x48] sm:$0xff]
        %v2090 = vld [vmem:[#allocation2 + $0x50] sm:$0xff]
        %v2091 = vld [vmem:[#allocation2 + $0x58] sm:$0xff]
        %v2092 = vld [vmem:[#allocation2 + $0x60] sm:$0xff]
        %v2093 = vld [vmem:[#allocation2 + $0x68] sm:$0xff]
        %v2094 = vld [vmem:[#allocation2 + $0x70] sm:$0xff]
        %v2095 = vld [vmem:[#allocation2 + $0x78] sm:$0xff]
        %v2096 = vld [vmem:[#allocation2 + $0x80] sm:$0xff]
        %v2097 = vld [vmem:[#allocation2 + $0x88] sm:$0xff]
        %v2098 = vld [vmem:[#allocation2 + $0x90] sm:$0xff]
        %v2099 = vld [vmem:[#allocation2 + $0x98] sm:$0xff]
        %v2100 = vld [vmem:[#allocation2 + $0xa0] sm:$0xff]
        %v2101 = vld [vmem:[#allocation2 + $0xa8] sm:$0xff]
        %v2102 = vld [vmem:[#allocation2 + $0xb0] sm:$0xff]
        %v2103 = vld [vmem:[#allocation2 + $0xb8] sm:$0xff]
        %v2104 = vld [vmem:[#allocation2 + $0xc0] sm:$0xff]
        %v2105 = vld [vmem:[#allocation2 + $0xc8] sm:$0xff]
        %v2106 = vld [vmem:[#allocation2 + $0xd0] sm:$0xff]
        %s2107 = scalar_lea.vmem %s2, 12
        %v2108 = vld [vmem:[%s2107] sm:$0xf]
        %vm2109 = vsmask.f32 256
        %v2111 = vshrl.u32 %v2082, 16
        %v2113 = vrot.slane %v2111, 7
        %v2115 = vshrl.u32 %v2083, 16
        %v2117 = vrot.slane %v2115, 7
        %v2118 = vshll.u32 %v2083, 16
        %v2120 = vor.u32 %v2117, %v2118
        %v2121 = vsel %vm2109, %v2113, %v2120
        %v2123 = vshrl.u32 %v2084, 16
        %v2125 = vrot.slane %v2123, 7
        %v2126 = vshll.u32 %v2084, 16
        %v2128 = vor.u32 %v2125, %v2126
        %v2129 = vsel %vm2109, %v2117, %v2128
        %v2131 = vshrl.u32 %v2085, 16
        %v2133 = vrot.slane %v2131, 7
        %v2134 = vshll.u32 %v2085, 16
        %v2136 = vor.u32 %v2133, %v2134
        %v2137 = vsel %vm2109, %v2125, %v2136
        %v2139 = vshrl.u32 %v2086, 16
        %v2141 = vrot.slane %v2139, 7
        %v2142 = vshll.u32 %v2086, 16
        %v2144 = vor.u32 %v2141, %v2142
        %v2145 = vsel %vm2109, %v2133, %v2144
        %v2147 = vshrl.u32 %v2087, 16
        %v2149 = vrot.slane %v2147, 7
        %v2150 = vshll.u32 %v2087, 16
        %v2152 = vor.u32 %v2149, %v2150
        %v2153 = vsel %vm2109, %v2141, %v2152
        %v2155 = vshrl.u32 %v2088, 16
        %v2157 = vrot.slane %v2155, 7
        %v2158 = vshll.u32 %v2088, 16
        %v2160 = vor.u32 %v2157, %v2158
        %v2161 = vsel %vm2109, %v2149, %v2160
        %v2163 = vshrl.u32 %v2089, 16
        %v2165 = vrot.slane %v2163, 7
        %v2166 = vshll.u32 %v2089, 16
        %v2168 = vor.u32 %v2165, %v2166
        %v2169 = vsel %vm2109, %v2157, %v2168
        %v2171 = vshrl.u32 %v2090, 16
        %v2173 = vrot.slane %v2171, 7
        %v2174 = vshll.u32 %v2090, 16
        %v2176 = vor.u32 %v2173, %v2174
        %v2177 = vsel %vm2109, %v2165, %v2176
        %v2179 = vshrl.u32 %v2091, 16
        %v2181 = vrot.slane %v2179, 7
        %v2182 = vshll.u32 %v2091, 16
        %v2184 = vor.u32 %v2181, %v2182
        %v2185 = vsel %vm2109, %v2173, %v2184
        %v2187 = vshrl.u32 %v2092, 16
        %v2189 = vrot.slane %v2187, 7
        %v2190 = vshll.u32 %v2092, 16
        %v2192 = vor.u32 %v2189, %v2190
        %v2193 = vsel %vm2109, %v2181, %v2192
        %v2195 = vshrl.u32 %v2093, 16
        %v2197 = vrot.slane %v2195, 7
        %v2198 = vshll.u32 %v2093, 16
        %v2200 = vor.u32 %v2197, %v2198
        %v2201 = vsel %vm2109, %v2189, %v2200
        %v2203 = vshrl.u32 %v2094, 16
        %v2205 = vrot.slane %v2203, 7
        %v2206 = vshll.u32 %v2094, 16
        %v2208 = vor.u32 %v2205, %v2206
        %v2209 = vsel %vm2109, %v2197, %v2208
        %v2211 = vshrl.u32 %v2095, 16
        %v2213 = vrot.slane %v2211, 7
        %v2214 = vshll.u32 %v2095, 16
        %v2216 = vor.u32 %v2213, %v2214
        %v2217 = vsel %vm2109, %v2205, %v2216
        %v2219 = vshrl.u32 %v2096, 16
        %v2221 = vrot.slane %v2219, 7
        %v2222 = vshll.u32 %v2096, 16
        %v2224 = vor.u32 %v2221, %v2222
        %v2225 = vsel %vm2109, %v2213, %v2224
        %v2227 = vshrl.u32 %v2097, 16
        %v2229 = vrot.slane %v2227, 7
        %v2230 = vshll.u32 %v2097, 16
        %v2232 = vor.u32 %v2229, %v2230
        %v2233 = vsel %vm2109, %v2221, %v2232
        %v2235 = vshrl.u32 %v2098, 16
        %v2237 = vrot.slane %v2235, 7
        %v2238 = vshll.u32 %v2098, 16
        %v2240 = vor.u32 %v2237, %v2238
        %v2241 = vsel %vm2109, %v2229, %v2240
        %v2243 = vshrl.u32 %v2099, 16
        %v2245 = vrot.slane %v2243, 7
        %v2246 = vshll.u32 %v2099, 16
        %v2248 = vor.u32 %v2245, %v2246
        %v2249 = vsel %vm2109, %v2237, %v2248
        %v2251 = vshrl.u32 %v2100, 16
        %v2253 = vrot.slane %v2251, 7
        %v2254 = vshll.u32 %v2100, 16
        %v2256 = vor.u32 %v2253, %v2254
        %v2257 = vsel %vm2109, %v2245, %v2256
        %v2259 = vshrl.u32 %v2101, 16
        %v2261 = vrot.slane %v2259, 7
        %v2262 = vshll.u32 %v2101, 16
        %v2264 = vor.u32 %v2261, %v2262
        %v2265 = vsel %vm2109, %v2253, %v2264
        %v2267 = vshrl.u32 %v2102, 16
        %v2269 = vrot.slane %v2267, 7
        %v2270 = vshll.u32 %v2102, 16
        %v2272 = vor.u32 %v2269, %v2270
        %v2273 = vsel %vm2109, %v2261, %v2272
        %v2275 = vshrl.u32 %v2103, 16
        %v2277 = vrot.slane %v2275, 7
        %v2278 = vshll.u32 %v2103, 16
        %v2280 = vor.u32 %v2277, %v2278
        %v2281 = vsel %vm2109, %v2269, %v2280
        %v2283 = vshrl.u32 %v2104, 16
        %v2285 = vrot.slane %v2283, 7
        %v2286 = vshll.u32 %v2104, 16
        %v2288 = vor.u32 %v2285, %v2286
        %v2289 = vsel %vm2109, %v2277, %v2288
        %v2291 = vshrl.u32 %v2105, 16
        %v2293 = vrot.slane %v2291, 7
        %v2294 = vshll.u32 %v2105, 16
        %v2296 = vor.u32 %v2293, %v2294
        %v2297 = vsel %vm2109, %v2285, %v2296
        %v2299 = vshrl.u32 %v2106, 16
        %v2301 = vrot.slane %v2299, 7
        %v2302 = vshll.u32 %v2106, 16
        %v2304 = vor.u32 %v2301, %v2302
        %v2305 = vsel %vm2109, %v2293, %v2304
        %v2307 = vsel %vm627, %v2121, 0
        %v2310 = vsel %vm627, %v2129, 0
        %v2313 = vsel %vm627, %v2137, 0
        %v2316 = vsel %vm627, %v2145, 0
        %v2319 = vsel %vm627, %v2153, 0
        %v2322 = vsel %vm627, %v2161, 0
        %v2325 = vsel %vm627, %v2169, 0
        %v2328 = vsel %vm627, %v2177, 0
        %v2331 = vsel %vm627, %v2185, 0
        %v2334 = vsel %vm627, %v2193, 0
        %v2337 = vsel %vm627, %v2201, 0
        %v2340 = vsel %vm627, %v2209, 0
        %v2343 = vsel %vm627, %v2217, 0
        %v2346 = vsel %vm627, %v2225, 0
        %v2349 = vsel %vm627, %v2233, 0
        %v2352 = vsel %vm627, %v2241, 0
        %v2355 = vsel %vm627, %v2249, 0
        %v2358 = vsel %vm627, %v2257, 0
        %v2361 = vsel %vm627, %v2265, 0
        %v2364 = vsel %vm627, %v2273, 0
        %v2367 = vsel %vm627, %v2281, 0
        %v2370 = vsel %vm627, %v2289, 0
        %v2373 = vsel %vm627, %v2297, 0
        %v2376 = vsel %vm627, %v2305, 0
        %v2379 = vsel %vm931, %v2108, 0
        %2381 = vmatprep.subr.bf16.mxu0 0
        %2382 = vmatpush1.bf16.msra.mxu0 %v2379
        %2383 = vmatprep.subr.bf16.mxu0 0
        %2384 = vmatpush1.bf16.msra.mxu0 0
        %2385 = vmatprep.subr.bf16.mxu0 0
        %2386 = vmatpush1.bf16.msra.mxu0 0
        %2387 = vmatprep.subr.bf16.mxu0 0
        %2388 = vmatpush1.bf16.msra.mxu0 0
        %2389 = vmatprep.subr.bf16.mxu0 0
        %2390 = vmatpush1.bf16.msra.mxu0 0
        %2391 = vmatprep.subr.bf16.mxu0 0
        %2392 = vmatpush1.bf16.msra.mxu0 0
        %2393 = vmatprep.subr.bf16.mxu0 0
        %2394 = vmatpush1.bf16.msra.mxu0 0
        %2395 = vmatprep.subr.bf16.mxu0 0
        %2396 = vmatpush1.bf16.msra.mxu0 0
        %2397 = vmatprep.subr.bf16.mxu0 0
        %2398 = vmatpush1.bf16.msra.mxu0 0
        %2399 = vmatprep.subr.bf16.mxu0 0
        %2400 = vmatpush1.bf16.msra.mxu0 0
        %2401 = vmatprep.subr.bf16.mxu0 0
        %2402 = vmatpush1.bf16.msra.mxu0 0
        %2403 = vmatprep.subr.bf16.mxu0 0
        %2404 = vmatpush1.bf16.msra.mxu0 0
        %2405 = vmatprep.subr.bf16.mxu0 0
        %2406 = vmatpush1.bf16.msra.mxu0 0
        %2407 = vmatprep.subr.bf16.mxu0 0
        %2408 = vmatpush1.bf16.msra.mxu0 0
        %2409 = vmatprep.subr.bf16.mxu0 0
        %2410 = vmatpush1.bf16.msra.mxu0 0
        %2411 = vmatprep.subr.bf16.mxu0 0
        %2412 = vmatpush1.bf16.msra.mxu0 0
        %2413 = vmatprep.mubr.bf16.mxu0 0
        %2414 = vmatmul.mubr.bf16.gmra.mrb[0].mxu0 %v2307
        %v2415 = vpop.f32.mrb[0].mxu0
        %v2416 = vadd.f32 0.0, %v2415
        %v2417 = vpop.f32.mrb[0].mxu0
        %v2418 = vpop.f32.mrb[0].mxu0
        %v2419 = vadd.f32 0.0, %v2418
        %v2420 = vpop.f32.mrb[0].mxu0
        %2421 = vmatprep.mubr.bf16.mxu0 0
        %2422 = vmatmul.mubr.bf16.gmra.mrb[0].mxu0 %v2310
        %v2423 = vpop.f32.mrb[0].mxu0
        %v2424 = vpop.f32.mrb[0].mxu0
        %v2425 = vpop.f32.mrb[0].mxu0
        %v2426 = vadd.f32 0.0, %v2425
        %v2427 = vpop.f32.mrb[0].mxu0
        %2428 = vmatprep.mubr.bf16.mxu0 0
        %2429 = vmatmul.mubr.bf16.gmra.mrb[0].mxu0 %v2313
        %v2430 = vpop.f32.mrb[0].mxu0
        %v2431 = vadd.f32 0.0, %v2430
        %v2432 = vpop.f32.mrb[0].mxu0
        %v2433 = vpop.f32.mrb[0].mxu0
        %v2434 = vpop.f32.mrb[0].mxu0
        %2435 = vmatprep.mubr.bf16.mxu0 0
        %2436 = vmatmul.mubr.bf16.gmra.mrb[0].mxu0 %v2316
        %v2437 = vpop.f32.mrb[0].mxu0
        %v2438 = vadd.f32 0.0, %v2437
        %v2439 = vpop.f32.mrb[0].mxu0
        %v2440 = vpop.f32.mrb[0].mxu0
        %v2441 = vadd.f32 0.0, %v2440
        %v2442 = vpop.f32.mrb[0].mxu0
        %2443 = vmatprep.mubr.bf16.mxu0 0
        %2444 = vmatmul.mubr.bf16.gmra.mrb[0].mxu0 %v2319
        %v2445 = vpop.f32.mrb[0].mxu0
        %v2446 = vpop.f32.mrb[0].mxu0
        %v2447 = vpop.f32.mrb[0].mxu0
        %v2448 = vadd.f32 0.0, %v2447
        %v2449 = vpop.f32.mrb[0].mxu0
        %2450 = vmatprep.mubr.bf16.mxu0 0
        %2451 = vmatmul.mubr.bf16.gmra.mrb[0].mxu0 %v2322
        %v2452 = vpop.f32.mrb[0].mxu0
        %v2453 = vadd.f32 0.0, %v2452
        %v2454 = vpop.f32.mrb[0].mxu0
        %v2455 = vpop.f32.mrb[0].mxu0
        %v2456 = vpop.f32.mrb[0].mxu0
        %2457 = vmatprep.mubr.bf16.mxu0 0
        %2458 = vmatmul.mubr.bf16.gmra.mrb[0].mxu0 %v2325
        %v2459 = vpop.f32.mrb[0].mxu0
        %v2460 = vadd.f32 0.0, %v2459
        %v2461 = vpop.f32.mrb[0].mxu0
        %v2462 = vpop.f32.mrb[0].mxu0
        %v2463 = vadd.f32 0.0, %v2462
        %v2464 = vpop.f32.mrb[0].mxu0
        %2465 = vmatprep.mubr.bf16.mxu0 0
        %2466 = vmatmul.mubr.bf16.gmra.mrb[0].mxu0 %v2328
        %v2467 = vpop.f32.mrb[0].mxu0
        %v2468 = vpop.f32.mrb[0].mxu0
        %v2469 = vpop.f32.mrb[0].mxu0
        %v2470 = vadd.f32 0.0, %v2469
        %v2471 = vpop.f32.mrb[0].mxu0
        %2472 = vmatprep.mubr.bf16.mxu0 0
        %2473 = vmatmul.mubr.bf16.gmra.mrb[0].mxu0 %v2331
        %v2474 = vpop.f32.mrb[0].mxu0
        %v2475 = vadd.f32 0.0, %v2474
        %v2476 = vpop.f32.mrb[0].mxu0
        %v2477 = vpop.f32.mrb[0].mxu0
        %v2478 = vpop.f32.mrb[0].mxu0
        %2479 = vmatprep.mubr.bf16.mxu0 0
        %2480 = vmatmul.mubr.bf16.gmra.mrb[0].mxu0 %v2334
        %v2481 = vpop.f32.mrb[0].mxu0
        %v2482 = vadd.f32 0.0, %v2481
        %v2483 = vpop.f32.mrb[0].mxu0
        %v2484 = vpop.f32.mrb[0].mxu0
        %v2485 = vadd.f32 0.0, %v2484
        %v2486 = vpop.f32.mrb[0].mxu0
        %2487 = vmatprep.mubr.bf16.mxu0 0
        %2488 = vmatmul.mubr.bf16.gmra.mrb[0].mxu0 %v2337
        %v2489 = vpop.f32.mrb[0].mxu0
        %v2490 = vpop.f32.mrb[0].mxu0
        %v2491 = vpop.f32.mrb[0].mxu0
        %v2492 = vadd.f32 0.0, %v2491
        %v2493 = vpop.f32.mrb[0].mxu0
        %2494 = vmatprep.mubr.bf16.mxu0 0
        %2495 = vmatmul.mubr.bf16.gmra.mrb[0].mxu0 %v2340
        %v2496 = vpop.f32.mrb[0].mxu0
        %v2497 = vadd.f32 0.0, %v2496
        %v2498 = vpop.f32.mrb[0].mxu0
        %v2499 = vpop.f32.mrb[0].mxu0
        %v2500 = vpop.f32.mrb[0].mxu0
        %2501 = vmatprep.mubr.bf16.mxu0 0
        %2502 = vmatmul.mubr.bf16.gmra.mrb[0].mxu0 %v2343
        %v2503 = vpop.f32.mrb[0].mxu0
        %v2504 = vadd.f32 0.0, %v2503
        %v2505 = vpop.f32.mrb[0].mxu0
        %v2506 = vpop.f32.mrb[0].mxu0
        %v2507 = vadd.f32 0.0, %v2506
        %v2508 = vpop.f32.mrb[0].mxu0
        %2509 = vmatprep.mubr.bf16.mxu0 0
        %2510 = vmatmul.mubr.bf16.gmra.mrb[0].mxu0 %v2346
        %v2511 = vpop.f32.mrb[0].mxu0
        %v2512 = vpop.f32.mrb[0].mxu0
        %v2513 = vpop.f32.mrb[0].mxu0
        %v2514 = vadd.f32 0.0, %v2513
        %v2515 = vpop.f32.mrb[0].mxu0
        %2516 = vmatprep.mubr.bf16.mxu0 0
        %2517 = vmatmul.mubr.bf16.gmra.mrb[0].mxu0 %v2349
        %v2518 = vpop.f32.mrb[0].mxu0
        %v2519 = vadd.f32 0.0, %v2518
        %v2520 = vpop.f32.mrb[0].mxu0
        %v2521 = vpop.f32.mrb[0].mxu0
        %v2522 = vpop.f32.mrb[0].mxu0
        %2523 = vmatprep.mubr.bf16.mxu0 0
        %2524 = vmatmul.mubr.bf16.gmra.mrb[0].mxu0 %v2352
        %v2525 = vpop.f32.mrb[0].mxu0
        %v2526 = vadd.f32 0.0, %v2525
        %v2527 = vpop.f32.mrb[0].mxu0
        %v2528 = vpop.f32.mrb[0].mxu0
        %v2529 = vadd.f32 0.0, %v2528
        %v2530 = vpop.f32.mrb[0].mxu0
        %2531 = vmatprep.mubr.bf16.mxu0 0
        %2532 = vmatmul.mubr.bf16.gmra.mrb[0].mxu0 %v2355
        %v2533 = vpop.f32.mrb[0].mxu0
        %v2534 = vpop.f32.mrb[0].mxu0
        %v2535 = vpop.f32.mrb[0].mxu0
        %v2536 = vadd.f32 0.0, %v2535
        %v2537 = vpop.f32.mrb[0].mxu0
        %2538 = vmatprep.mubr.bf16.mxu0 0
        %2539 = vmatmul.mubr.bf16.gmra.mrb[0].mxu0 %v2358
        %v2540 = vpop.f32.mrb[0].mxu0
        %v2541 = vadd.f32 0.0, %v2540
        %v2542 = vpop.f32.mrb[0].mxu0
        %v2543 = vpop.f32.mrb[0].mxu0
        %v2544 = vpop.f32.mrb[0].mxu0
        %2545 = vmatprep.mubr.bf16.mxu0 0
        %2546 = vmatmul.mubr.bf16.gmra.mrb[0].mxu0 %v2361
        %v2547 = vpop.f32.mrb[0].mxu0
        %v2548 = vadd.f32 0.0, %v2547
        %v2549 = vpop.f32.mrb[0].mxu0
        %v2550 = vpop.f32.mrb[0].mxu0
        %v2551 = vadd.f32 0.0, %v2550
        %v2552 = vpop.f32.mrb[0].mxu0
        %2553 = vmatprep.mubr.bf16.mxu0 0
        %2554 = vmatmul.mubr.bf16.gmra.mrb[0].mxu0 %v2364
        %v2555 = vpop.f32.mrb[0].mxu0
        %v2556 = vpop.f32.mrb[0].mxu0
        %v2557 = vpop.f32.mrb[0].mxu0
        %v2558 = vadd.f32 0.0, %v2557
        %v2559 = vpop.f32.mrb[0].mxu0
        %2560 = vmatprep.mubr.bf16.mxu0 0
        %2561 = vmatmul.mubr.bf16.gmra.mrb[0].mxu0 %v2367
        %v2562 = vpop.f32.mrb[0].mxu0
        %v2563 = vadd.f32 0.0, %v2562
        %v2564 = vpop.f32.mrb[0].mxu0
        %v2565 = vpop.f32.mrb[0].mxu0
        %v2566 = vpop.f32.mrb[0].mxu0
        %2567 = vmatprep.mubr.bf16.mxu0 0
        %2568 = vmatmul.mubr.bf16.gmra.mrb[0].mxu0 %v2370
        %v2569 = vpop.f32.mrb[0].mxu0
        %v2570 = vadd.f32 0.0, %v2569
        %v2571 = vpop.f32.mrb[0].mxu0
        %v2572 = vpop.f32.mrb[0].mxu0
        %v2573 = vadd.f32 0.0, %v2572
        %v2574 = vpop.f32.mrb[0].mxu0
        %2575 = vmatprep.mubr.bf16.mxu0 0
        %2576 = vmatmul.mubr.bf16.gmra.mrb[0].mxu0 %v2373
        %v2577 = vpop.f32.mrb[0].mxu0
        %v2578 = vpop.f32.mrb[0].mxu0
        %v2579 = vpop.f32.mrb[0].mxu0
        %v2580 = vadd.f32 0.0, %v2579
        %v2581 = vpop.f32.mrb[0].mxu0
        %2582 = vmatprep.mubr.bf16.mxu0 0
        %2583 = vmatmul.mubr.bf16.gmra.mrb[0].mxu0 %v2376
        %v2584 = vpop.f32.mrb[0].mxu0
        %v2585 = vadd.f32 0.0, %v2584
        %v2586 = vpop.f32.mrb[0].mxu0
        %v2587 = vpop.f32.mrb[0].mxu0
        %v2588 = vpop.f32.mrb[0].mxu0
        %2589 = vdwg.mxu0
        %v2590 = vadd.f32 %v2050, %v2416
        %v2591 = vadd.f32 %v2051, %v2419
        %v2592 = vadd.f32 %v2052, %v2426
        %v2593 = vadd.f32 %v2053, %v2431
        %v2594 = vadd.f32 %v2054, %v2438
        %v2595 = vadd.f32 %v2055, %v2441
        %v2596 = vadd.f32 %v2056, %v2448
        %v2597 = vadd.f32 %v2057, %v2453
        %v2598 = vadd.f32 %v2058, %v2460
        %v2599 = vadd.f32 %v2059, %v2463
        %v2600 = vadd.f32 %v2060, %v2470
        %v2601 = vadd.f32 %v2061, %v2475
        %v2602 = vadd.f32 %v2062, %v2482
        %v2603 = vadd.f32 %v2063, %v2485
        %v2604 = vadd.f32 %v2064, %v2492
        %v2605 = vadd.f32 %v2065, %v2497
        %v2606 = vadd.f32 %v2066, %v2504
        %v2607 = vadd.f32 %v2067, %v2507
        %v2608 = vadd.f32 %v2068, %v2514
        %v2609 = vadd.f32 %v2069, %v2519
        %v2610 = vadd.f32 %v2070, %v2526
        %v2611 = vadd.f32 %v2071, %v2529
        %v2612 = vadd.f32 %v2072, %v2536
        %v2613 = vadd.f32 %v2073, %v2541
        %v2614 = vadd.f32 %v2074, %v2548
        %v2615 = vadd.f32 %v2075, %v2551
        %v2616 = vadd.f32 %v2076, %v2558
        %v2617 = vadd.f32 %v2077, %v2563
        %v2618 = vadd.f32 %v2078, %v2570
        %v2619 = vadd.f32 %v2079, %v2573
        %v2620 = vadd.f32 %v2080, %v2580
        %v2621 = vadd.f32 %v2081, %v2585
        %s2622 = scalar_lea.vmem %s2, 16
        %v2623 = vld [vmem:[%s2622] sm:$0xf]
        %v2624 = vsel %vm627, %v2083, 0
        %v2626 = vsel %vm627, %v2084, 0
        %v2628 = vsel %vm627, %v2085, 0
        %v2630 = vsel %vm627, %v2086, 0
        %v2632 = vsel %vm627, %v2087, 0
        %v2634 = vsel %vm627, %v2088, 0
        %v2636 = vsel %vm627, %v2089, 0
        %v2638 = vsel %vm627, %v2090, 0
        %v2640 = vsel %vm627, %v2091, 0
        %v2642 = vsel %vm627, %v2092, 0
        %v2644 = vsel %vm627, %v2093, 0
        %v2646 = vsel %vm627, %v2094, 0
        %v2648 = vsel %vm627, %v2095, 0
        %v2650 = vsel %vm627, %v2096, 0
        %v2652 = vsel %vm627, %v2097, 0
        %v2654 = vsel %vm627, %v2098, 0
        %v2656 = vsel %vm627, %v2099, 0
        %v2658 = vsel %vm627, %v2100, 0
        %v2660 = vsel %vm627, %v2101, 0
        %v2662 = vsel %vm627, %v2102, 0
        %v2664 = vsel %vm627, %v2103, 0
        %v2666 = vsel %vm627, %v2104, 0
        %v2668 = vsel %vm627, %v2105, 0
        %v2670 = vsel %vm627, %v2106, 0
        %v2673 = vsel %vm931, %v2623, 0
        %2675 = vmatprep.subr.bf16.mxu0 0
        %2676 = vmatpush1.bf16.msra.mxu0 %v2673
        %2677 = vmatprep.subr.bf16.mxu0 0
        %2678 = vmatpush1.bf16.msra.mxu0 0
        %2679 = vmatprep.subr.bf16.mxu0 0
        %2680 = vmatpush1.bf16.msra.mxu0 0
        %2681 = vmatprep.subr.bf16.mxu0 0
        %2682 = vmatpush1.bf16.msra.mxu0 0
        %2683 = vmatprep.subr.bf16.mxu0 0
        %2684 = vmatpush1.bf16.msra.mxu0 0
        %2685 = vmatprep.subr.bf16.mxu0 0
        %2686 = vmatpush1.bf16.msra.mxu0 0
        %2687 = vmatprep.subr.bf16.mxu0 0
        %2688 = vmatpush1.bf16.msra.mxu0 0
        %2689 = vmatprep.subr.bf16.mxu0 0
        %2690 = vmatpush1.bf16.msra.mxu0 0
        %2691 = vmatprep.subr.bf16.mxu0 0
        %2692 = vmatpush1.bf16.msra.mxu0 0
        %2693 = vmatprep.subr.bf16.mxu0 0
        %2694 = vmatpush1.bf16.msra.mxu0 0
        %2695 = vmatprep.subr.bf16.mxu0 0
        %2696 = vmatpush1.bf16.msra.mxu0 0
        %2697 = vmatprep.subr.bf16.mxu0 0
        %2698 = vmatpush1.bf16.msra.mxu0 0
        %2699 = vmatprep.subr.bf16.mxu0 0
        %2700 = vmatpush1.bf16.msra.mxu0 0
        %2701 = vmatprep.subr.bf16.mxu0 0
        %2702 = vmatpush1.bf16.msra.mxu0 0
        %2703 = vmatprep.subr.bf16.mxu0 0
        %2704 = vmatpush1.bf16.msra.mxu0 0
        %2705 = vmatprep.subr.bf16.mxu0 0
        %2706 = vmatpush1.bf16.msra.mxu0 0
        %2707 = vmatprep.mubr.bf16.mxu0 0
        %2708 = vmatmul.mubr.bf16.gmra.mrb[0].mxu0 %v2624
        %v2709 = vpop.f32.mrb[0].mxu0
        %v2710 = vadd.f32 0.0, %v2709
        %v2711 = vpop.f32.mrb[0].mxu0
        %v2712 = vpop.f32.mrb[0].mxu0
        %v2713 = vadd.f32 0.0, %v2712
        %v2714 = vpop.f32.mrb[0].mxu0
        %2715 = vmatprep.mubr.bf16.mxu0 0
        %2716 = vmatmul.mubr.bf16.gmra.mrb[0].mxu0 %v2626
        %v2717 = vpop.f32.mrb[0].mxu0
        %v2718 = vpop.f32.mrb[0].mxu0
        %v2719 = vpop.f32.mrb[0].mxu0
        %v2720 = vadd.f32 0.0, %v2719
        %v2721 = vpop.f32.mrb[0].mxu0
        %2722 = vmatprep.mubr.bf16.mxu0 0
        %2723 = vmatmul.mubr.bf16.gmra.mrb[0].mxu0 %v2628
        %v2724 = vpop.f32.mrb[0].mxu0
        %v2725 = vadd.f32 0.0, %v2724
        %v2726 = vpop.f32.mrb[0].mxu0
        %v2727 = vpop.f32.mrb[0].mxu0
        %v2728 = vpop.f32.mrb[0].mxu0
        %2729 = vmatprep.mubr.bf16.mxu0 0
        %2730 = vmatmul.mubr.bf16.gmra.mrb[0].mxu0 %v2630
        %v2731 = vpop.f32.mrb[0].mxu0
        %v2732 = vadd.f32 0.0, %v2731
        %v2733 = vpop.f32.mrb[0].mxu0
        %v2734 = vpop.f32.mrb[0].mxu0
        %v2735 = vadd.f32 0.0, %v2734
        %v2736 = vpop.f32.mrb[0].mxu0
        %2737 = vmatprep.mubr.bf16.mxu0 0
        %2738 = vmatmul.mubr.bf16.gmra.mrb[0].mxu0 %v2632
        %v2739 = vpop.f32.mrb[0].mxu0
        %v2740 = vpop.f32.mrb[0].mxu0
        %v2741 = vpop.f32.mrb[0].mxu0
        %v2742 = vadd.f32 0.0, %v2741
        %v2743 = vpop.f32.mrb[0].mxu0
        %2744 = vmatprep.mubr.bf16.mxu0 0
        %2745 = vmatmul.mubr.bf16.gmra.mrb[0].mxu0 %v2634
        %v2746 = vpop.f32.mrb[0].mxu0
        %v2747 = vadd.f32 0.0, %v2746
        %v2748 = vpop.f32.mrb[0].mxu0
        %v2749 = vpop.f32.mrb[0].mxu0
        %v2750 = vpop.f32.mrb[0].mxu0
        %2751 = vmatprep.mubr.bf16.mxu0 0
        %2752 = vmatmul.mubr.bf16.gmra.mrb[0].mxu0 %v2636
        %v2753 = vpop.f32.mrb[0].mxu0
        %v2754 = vadd.f32 0.0, %v2753
        %v2755 = vpop.f32.mrb[0].mxu0
        %v2756 = vpop.f32.mrb[0].mxu0
        %v2757 = vadd.f32 0.0, %v2756
        %v2758 = vpop.f32.mrb[0].mxu0
        %2759 = vmatprep.mubr.bf16.mxu0 0
        %2760 = vmatmul.mubr.bf16.gmra.mrb[0].mxu0 %v2638
        %v2761 = vpop.f32.mrb[0].mxu0
        %v2762 = vpop.f32.mrb[0].mxu0
        %v2763 = vpop.f32.mrb[0].mxu0
        %v2764 = vadd.f32 0.0, %v2763
        %v2765 = vpop.f32.mrb[0].mxu0
        %2766 = vmatprep.mubr.bf16.mxu0 0
        %2767 = vmatmul.mubr.bf16.gmra.mrb[0].mxu0 %v2640
        %v2768 = vpop.f32.mrb[0].mxu0
        %v2769 = vadd.f32 0.0, %v2768
        %v2770 = vpop.f32.mrb[0].mxu0
        %v2771 = vpop.f32.mrb[0].mxu0
        %v2772 = vpop.f32.mrb[0].mxu0
        %2773 = vmatprep.mubr.bf16.mxu0 0
        %2774 = vmatmul.mubr.bf16.gmra.mrb[0].mxu0 %v2642
        %v2775 = vpop.f32.mrb[0].mxu0
        %v2776 = vadd.f32 0.0, %v2775
        %v2777 = vpop.f32.mrb[0].mxu0
        %v2778 = vpop.f32.mrb[0].mxu0
        %v2779 = vadd.f32 0.0, %v2778
        %v2780 = vpop.f32.mrb[0].mxu0
        %2781 = vmatprep.mubr.bf16.mxu0 0
        %2782 = vmatmul.mubr.bf16.gmra.mrb[0].mxu0 %v2644
        %v2783 = vpop.f32.mrb[0].mxu0
        %v2784 = vpop.f32.mrb[0].mxu0
        %v2785 = vpop.f32.mrb[0].mxu0
        %v2786 = vadd.f32 0.0, %v2785
        %v2787 = vpop.f32.mrb[0].mxu0
        %2788 = vmatprep.mubr.bf16.mxu0 0
        %2789 = vmatmul.mubr.bf16.gmra.mrb[0].mxu0 %v2646
        %v2790 = vpop.f32.mrb[0].mxu0
        %v2791 = vadd.f32 0.0, %v2790
        %v2792 = vpop.f32.mrb[0].mxu0
        %v2793 = vpop.f32.mrb[0].mxu0
        %v2794 = vpop.f32.mrb[0].mxu0
        %2795 = vmatprep.mubr.bf16.mxu0 0
        %2796 = vmatmul.mubr.bf16.gmra.mrb[0].mxu0 %v2648
        %v2797 = vpop.f32.mrb[0].mxu0
        %v2798 = vadd.f32 0.0, %v2797
        %v2799 = vpop.f32.mrb[0].mxu0
        %v2800 = vpop.f32.mrb[0].mxu0
        %v2801 = vadd.f32 0.0, %v2800
        %v2802 = vpop.f32.mrb[0].mxu0
        %2803 = vmatprep.mubr.bf16.mxu0 0
        %2804 = vmatmul.mubr.bf16.gmra.mrb[0].mxu0 %v2650
        %v2805 = vpop.f32.mrb[0].mxu0
        %v2806 = vpop.f32.mrb[0].mxu0
        %v2807 = vpop.f32.mrb[0].mxu0
        %v2808 = vadd.f32 0.0, %v2807
        %v2809 = vpop.f32.mrb[0].mxu0
        %2810 = vmatprep.mubr.bf16.mxu0 0
        %2811 = vmatmul.mubr.bf16.gmra.mrb[0].mxu0 %v2652
        %v2812 = vpop.f32.mrb[0].mxu0
        %v2813 = vadd.f32 0.0, %v2812
        %v2814 = vpop.f32.mrb[0].mxu0
        %v2815 = vpop.f32.mrb[0].mxu0
        %v2816 = vpop.f32.mrb[0].mxu0
        %2817 = vmatprep.mubr.bf16.mxu0 0
        %2818 = vmatmul.mubr.bf16.gmra.mrb[0].mxu0 %v2654
        %v2819 = vpop.f32.mrb[0].mxu0
        %v2820 = vadd.f32 0.0, %v2819
        %v2821 = vpop.f32.mrb[0].mxu0
        %v2822 = vpop.f32.mrb[0].mxu0
        %v2823 = vadd.f32 0.0, %v2822
        %v2824 = vpop.f32.mrb[0].mxu0
        %2825 = vmatprep.mubr.bf16.mxu0 0
        %2826 = vmatmul.mubr.bf16.gmra.mrb[0].mxu0 %v2656
        %v2827 = vpop.f32.mrb[0].mxu0
        %v2828 = vpop.f32.mrb[0].mxu0
        %v2829 = vpop.f32.mrb[0].mxu0
        %v2830 = vadd.f32 0.0, %v2829
        %v2831 = vpop.f32.mrb[0].mxu0
        %2832 = vmatprep.mubr.bf16.mxu0 0
        %2833 = vmatmul.mubr.bf16.gmra.mrb[0].mxu0 %v2658
        %v2834 = vpop.f32.mrb[0].mxu0
        %v2835 = vadd.f32 0.0, %v2834
        %v2836 = vpop.f32.mrb[0].mxu0
        %v2837 = vpop.f32.mrb[0].mxu0
        %v2838 = vpop.f32.mrb[0].mxu0
        %2839 = vmatprep.mubr.bf16.mxu0 0
        %2840 = vmatmul.mubr.bf16.gmra.mrb[0].mxu0 %v2660
        %v2841 = vpop.f32.mrb[0].mxu0
        %v2842 = vadd.f32 0.0, %v2841
        %v2843 = vpop.f32.mrb[0].mxu0
        %v2844 = vpop.f32.mrb[0].mxu0
        %v2845 = vadd.f32 0.0, %v2844
        %v2846 = vpop.f32.mrb[0].mxu0
        %2847 = vmatprep.mubr.bf16.mxu0 0
        %2848 = vmatmul.mubr.bf16.gmra.mrb[0].mxu0 %v2662
        %v2849 = vpop.f32.mrb[0].mxu0
        %v2850 = vpop.f32.mrb[0].mxu0
        %v2851 = vpop.f32.mrb[0].mxu0
        %v2852 = vadd.f32 0.0, %v2851
        %v2853 = vpop.f32.mrb[0].mxu0
        %2854 = vmatprep.mubr.bf16.mxu0 0
        %2855 = vmatmul.mubr.bf16.gmra.mrb[0].mxu0 %v2664
        %v2856 = vpop.f32.mrb[0].mxu0
        %v2857 = vadd.f32 0.0, %v2856
        %v2858 = vpop.f32.mrb[0].mxu0
        %v2859 = vpop.f32.mrb[0].mxu0
        %v2860 = vpop.f32.mrb[0].mxu0
        %2861 = vmatprep.mubr.bf16.mxu0 0
        %2862 = vmatmul.mubr.bf16.gmra.mrb[0].mxu0 %v2666
        %v2863 = vpop.f32.mrb[0].mxu0
        %v2864 = vadd.f32 0.0, %v2863
        %v2865 = vpop.f32.mrb[0].mxu0
        %v2866 = vpop.f32.mrb[0].mxu0
        %v2867 = vadd.f32 0.0, %v2866
        %v2868 = vpop.f32.mrb[0].mxu0
        %2869 = vmatprep.mubr.bf16.mxu0 0
        %2870 = vmatmul.mubr.bf16.gmra.mrb[0].mxu0 %v2668
        %v2871 = vpop.f32.mrb[0].mxu0
        %v2872 = vpop.f32.mrb[0].mxu0
        %v2873 = vpop.f32.mrb[0].mxu0
        %v2874 = vadd.f32 0.0, %v2873
        %v2875 = vpop.f32.mrb[0].mxu0
        %2876 = vmatprep.mubr.bf16.mxu0 0
        %2877 = vmatmul.mubr.bf16.gmra.mrb[0].mxu0 %v2670
        %v2878 = vpop.f32.mrb[0].mxu0
        %v2879 = vadd.f32 0.0, %v2878
        %v2880 = vpop.f32.mrb[0].mxu0
        %v2881 = vpop.f32.mrb[0].mxu0
        %v2882 = vpop.f32.mrb[0].mxu0
        %2883 = vdwg.mxu0
        %v2884 = vadd.f32 %v2590, %v2710
        %v2885 = vadd.f32 %v2591, %v2713
        %v2886 = vadd.f32 %v2592, %v2720
        %v2887 = vadd.f32 %v2593, %v2725
        %v2888 = vadd.f32 %v2594, %v2732
        %v2889 = vadd.f32 %v2595, %v2735
        %v2890 = vadd.f32 %v2596, %v2742
        %v2891 = vadd.f32 %v2597, %v2747
        %v2892 = vadd.f32 %v2598, %v2754
        %v2893 = vadd.f32 %v2599, %v2757
        %v2894 = vadd.f32 %v2600, %v2764
        %v2895 = vadd.f32 %v2601, %v2769
        %v2896 = vadd.f32 %v2602, %v2776
        %v2897 = vadd.f32 %v2603, %v2779
        %v2898 = vadd.f32 %v2604, %v2786
        %v2899 = vadd.f32 %v2605, %v2791
        %v2900 = vadd.f32 %v2606, %v2798
        %v2901 = vadd.f32 %v2607, %v2801
        %v2902 = vadd.f32 %v2608, %v2808
        %v2903 = vadd.f32 %v2609, %v2813
        %v2904 = vadd.f32 %v2610, %v2820
        %v2905 = vadd.f32 %v2611, %v2823
        %v2906 = vadd.f32 %v2612, %v2830
        %v2907 = vadd.f32 %v2613, %v2835
        %v2908 = vadd.f32 %v2614, %v2842
        %v2909 = vadd.f32 %v2615, %v2845
        %v2910 = vadd.f32 %v2616, %v2852
        %v2911 = vadd.f32 %v2617, %v2857
        %v2912 = vadd.f32 %v2618, %v2864
        %v2913 = vadd.f32 %v2619, %v2867
        %v2914 = vadd.f32 %v2620, %v2874
        %v2915 = vadd.f32 %v2621, %v2879
        %v2916 = vld [vmem:[#allocation2 + $0x18] sm:$0xff]
        %v2917 = vld [vmem:[#allocation2 + $0x20] sm:$0xff]
        %v2918 = vld [vmem:[#allocation2 + $0x28] sm:$0xff]
        %v2919 = vld [vmem:[#allocation2 + $0x30] sm:$0xff]
        %v2920 = vld [vmem:[#allocation2 + $0x38] sm:$0xff]
        %v2921 = vld [vmem:[#allocation2 + $0x40] sm:$0xff]
        %v2922 = vld [vmem:[#allocation2 + $0x48] sm:$0xff]
        %v2923 = vld [vmem:[#allocation2 + $0x50] sm:$0xff]
        %v2924 = vld [vmem:[#allocation2 + $0x58] sm:$0xff]
        %v2925 = vld [vmem:[#allocation2 + $0x60] sm:$0xff]
        %v2926 = vld [vmem:[#allocation2 + $0x68] sm:$0xff]
        %v2927 = vld [vmem:[#allocation2 + $0x70] sm:$0xff]
        %v2928 = vld [vmem:[#allocation2 + $0x78] sm:$0xff]
        %v2929 = vld [vmem:[#allocation2 + $0x80] sm:$0xff]
        %v2930 = vld [vmem:[#allocation2 + $0x88] sm:$0xff]
        %v2931 = vld [vmem:[#allocation2 + $0x90] sm:$0xff]
        %v2932 = vld [vmem:[#allocation2 + $0x98] sm:$0xff]
        %v2933 = vld [vmem:[#allocation2 + $0xa0] sm:$0xff]
        %v2934 = vld [vmem:[#allocation2 + $0xa8] sm:$0xff]
        %v2935 = vld [vmem:[#allocation2 + $0xb0] sm:$0xff]
        %v2936 = vld [vmem:[#allocation2 + $0xb8] sm:$0xff]
        %v2937 = vld [vmem:[#allocation2 + $0xc0] sm:$0xff]
        %v2938 = vld [vmem:[#allocation2 + $0xc8] sm:$0xff]
        %v2939 = vld [vmem:[#allocation2 + $0xd0] sm:$0xff]
        %v2940 = vld [vmem:[#allocation2 + $0xd8] sm:$0x1]
        %s2941 = scalar_lea.vmem %s2, 20
        %v2942 = vld [vmem:[%s2941] sm:$0xf]
        %vm2943 = vsmask.f32 7424
        %v2945 = vshrl.u32 %v2916, 16
        %v2947 = vshll.u32 %v2916, 16
        %v2949 = vrot.slane %v2947, 1
        %v2950 = vor.u32 %v2945, %v2949
        %v2952 = vshll.u32 %v2917, 16
        %v2954 = vrot.slane %v2952, 1
        %v2955 = vsel %vm2943, %v2950, %v2954
        %v2956 = vshrl.u32 %v2917, 16
        %v2958 = vor.u32 %v2956, %v2954
        %v2960 = vshll.u32 %v2918, 16
        %v2962 = vrot.slane %v2960, 1
        %v2963 = vsel %vm2943, %v2958, %v2962
        %v2964 = vshrl.u32 %v2918, 16
        %v2966 = vor.u32 %v2964, %v2962
        %v2968 = vshll.u32 %v2919, 16
        %v2970 = vrot.slane %v2968, 1
        %v2971 = vsel %vm2943, %v2966, %v2970
        %v2972 = vshrl.u32 %v2919, 16
        %v2974 = vor.u32 %v2972, %v2970
        %v2976 = vshll.u32 %v2920, 16
        %v2978 = vrot.slane %v2976, 1
        %v2979 = vsel %vm2943, %v2974, %v2978
        %v2980 = vshrl.u32 %v2920, 16
        %v2982 = vor.u32 %v2980, %v2978
        %v2984 = vshll.u32 %v2921, 16
        %v2986 = vrot.slane %v2984, 1
        %v2987 = vsel %vm2943, %v2982, %v2986
        %v2988 = vshrl.u32 %v2921, 16
        %v2990 = vor.u32 %v2988, %v2986
        %v2992 = vshll.u32 %v2922, 16
        %v2994 = vrot.slane %v2992, 1
        %v2995 = vsel %vm2943, %v2990, %v2994
        %v2996 = vshrl.u32 %v2922, 16
        %v2998 = vor.u32 %v2996, %v2994
        %v3000 = vshll.u32 %v2923, 16
        %v3002 = vrot.slane %v3000, 1
        %v3003 = vsel %vm2943, %v2998, %v3002
        %v3004 = vshrl.u32 %v2923, 16
        %v3006 = vor.u32 %v3004, %v3002
        %v3008 = vshll.u32 %v2924, 16
        %v3010 = vrot.slane %v3008, 1
        %v3011 = vsel %vm2943, %v3006, %v3010
        %v3012 = vshrl.u32 %v2924, 16
        %v3014 = vor.u32 %v3012, %v3010
        %v3016 = vshll.u32 %v2925, 16
        %v3018 = vrot.slane %v3016, 1
        %v3019 = vsel %vm2943, %v3014, %v3018
        %v3020 = vshrl.u32 %v2925, 16
        %v3022 = vor.u32 %v3020, %v3018
        %v3024 = vshll.u32 %v2926, 16
        %v3026 = vrot.slane %v3024, 1
        %v3027 = vsel %vm2943, %v3022, %v3026
        %v3028 = vshrl.u32 %v2926, 16
        %v3030 = vor.u32 %v3028, %v3026
        %v3032 = vshll.u32 %v2927, 16
        %v3034 = vrot.slane %v3032, 1
        %v3035 = vsel %vm2943, %v3030, %v3034
        %v3036 = vshrl.u32 %v2927, 16
        %v3038 = vor.u32 %v3036, %v3034
        %v3040 = vshll.u32 %v2928, 16
        %v3042 = vrot.slane %v3040, 1
        %v3043 = vsel %vm2943, %v3038, %v3042
        %v3044 = vshrl.u32 %v2928, 16
        %v3046 = vor.u32 %v3044, %v3042
        %v3048 = vshll.u32 %v2929, 16
        %v3050 = vrot.slane %v3048, 1
        %v3051 = vsel %vm2943, %v3046, %v3050
        %v3052 = vshrl.u32 %v2929, 16
        %v3054 = vor.u32 %v3052, %v3050
        %v3056 = vshll.u32 %v2930, 16
        %v3058 = vrot.slane %v3056, 1
        %v3059 = vsel %vm2943, %v3054, %v3058
        %v3060 = vshrl.u32 %v2930, 16
        %v3062 = vor.u32 %v3060, %v3058
        %v3064 = vshll.u32 %v2931, 16
        %v3066 = vrot.slane %v3064, 1
        %v3067 = vsel %vm2943, %v3062, %v3066
        %v3068 = vshrl.u32 %v2931, 16
        %v3070 = vor.u32 %v3068, %v3066
        %v3072 = vshll.u32 %v2932, 16
        %v3074 = vrot.slane %v3072, 1
        %v3075 = vsel %vm2943, %v3070, %v3074
        %v3076 = vshrl.u32 %v2932, 16
        %v3078 = vor.u32 %v3076, %v3074
        %v3080 = vshll.u32 %v2933, 16
        %v3082 = vrot.slane %v3080, 1
        %v3083 = vsel %vm2943, %v3078, %v3082
        %v3084 = vshrl.u32 %v2933, 16
        %v3086 = vor.u32 %v3084, %v3082
        %v3088 = vshll.u32 %v2934, 16
        %v3090 = vrot.slane %v3088, 1
        %v3091 = vsel %vm2943, %v3086, %v3090
        %v3092 = vshrl.u32 %v2934, 16
        %v3094 = vor.u32 %v3092, %v3090
        %v3096 = vshll.u32 %v2935, 16
        %v3098 = vrot.slane %v3096, 1
        %v3099 = vsel %vm2943, %v3094, %v3098
        %v3100 = vshrl.u32 %v2935, 16
        %v3102 = vor.u32 %v3100, %v3098
        %v3104 = vshll.u32 %v2936, 16
        %v3106 = vrot.slane %v3104, 1
        %v3107 = vsel %vm2943, %v3102, %v3106
        %v3108 = vshrl.u32 %v2936, 16
        %v3110 = vor.u32 %v3108, %v3106
        %v3112 = vshll.u32 %v2937, 16
        %v3114 = vrot.slane %v3112, 1
        %v3115 = vsel %vm2943, %v3110, %v3114
        %v3116 = vshrl.u32 %v2937, 16
        %v3118 = vor.u32 %v3116, %v3114
        %v3120 = vshll.u32 %v2938, 16
        %v3122 = vrot.slane %v3120, 1
        %v3123 = vsel %vm2943, %v3118, %v3122
        %v3124 = vshrl.u32 %v2938, 16
        %v3126 = vor.u32 %v3124, %v3122
        %v3128 = vshll.u32 %v2939, 16
        %v3130 = vrot.slane %v3128, 1
        %v3131 = vsel %vm2943, %v3126, %v3130
        %v3132 = vshrl.u32 %v2939, 16
        %v3134 = vor.u32 %v3132, %v3130
        %v3136 = vshll.u32 %v2940, 16
        %v3138 = vrot.slane %v3136, 1
        %v3139 = vsel %vm2943, %v3134, %v3138
        %v3141 = vsel %vm627, %v2955, 0
        %v3144 = vsel %vm627, %v2963, 0
        %v3147 = vsel %vm627, %v2971, 0
        %v3150 = vsel %vm627, %v2979, 0
        %v3153 = vsel %vm627, %v2987, 0
        %v3156 = vsel %vm627, %v2995, 0
        %v3159 = vsel %vm627, %v3003, 0
        %v3162 = vsel %vm627, %v3011, 0
        %v3165 = vsel %vm627, %v3019, 0
        %v3168 = vsel %vm627, %v3027, 0
        %v3171 = vsel %vm627, %v3035, 0
        %v3174 = vsel %vm627, %v3043, 0
        %v3177 = vsel %vm627, %v3051, 0
        %v3180 = vsel %vm627, %v3059, 0
        %v3183 = vsel %vm627, %v3067, 0
        %v3186 = vsel %vm627, %v3075, 0
        %v3189 = vsel %vm627, %v3083, 0
        %v3192 = vsel %vm627, %v3091, 0
        %v3195 = vsel %vm627, %v3099, 0
        %v3198 = vsel %vm627, %v3107, 0
        %v3201 = vsel %vm627, %v3115, 0
        %v3204 = vsel %vm627, %v3123, 0
        %v3207 = vsel %vm627, %v3131, 0
        %v3210 = vsel %vm627, %v3139, 0
        %v3213 = vsel %vm931, %v2942, 0
        %3215 = vmatprep.subr.bf16.mxu0 0
        %3216 = vmatpush1.bf16.msra.mxu0 %v3213
        %3217 = vmatprep.subr.bf16.mxu0 0
        %3218 = vmatpush1.bf16.msra.mxu0 0
        %3219 = vmatprep.subr.bf16.mxu0 0
        %3220 = vmatpush1.bf16.msra.mxu0 0
        %3221 = vmatprep.subr.bf16.mxu0 0
        %3222 = vmatpush1.bf16.msra.mxu0 0
        %3223 = vmatprep.subr.bf16.mxu0 0
        %3224 = vmatpush1.bf16.msra.mxu0 0
        %3225 = vmatprep.subr.bf16.mxu0 0
        %3226 = vmatpush1.bf16.msra.mxu0 0
        %3227 = vmatprep.subr.bf16.mxu0 0
        %3228 = vmatpush1.bf16.msra.mxu0 0
        %3229 = vmatprep.subr.bf16.mxu0 0
        %3230 = vmatpush1.bf16.msra.mxu0 0
        %3231 = vmatprep.subr.bf16.mxu0 0
        %3232 = vmatpush1.bf16.msra.mxu0 0
        %3233 = vmatprep.subr.bf16.mxu0 0
        %3234 = vmatpush1.bf16.msra.mxu0 0
        %3235 = vmatprep.subr.bf16.mxu0 0
        %3236 = vmatpush1.bf16.msra.mxu0 0
        %3237 = vmatprep.subr.bf16.mxu0 0
        %3238 = vmatpush1.bf16.msra.mxu0 0
        %3239 = vmatprep.subr.bf16.mxu0 0
        %3240 = vmatpush1.bf16.msra.mxu0 0
        %3241 = vmatprep.subr.bf16.mxu0 0
        %3242 = vmatpush1.bf16.msra.mxu0 0
        %3243 = vmatprep.subr.bf16.mxu0 0
        %3244 = vmatpush1.bf16.msra.mxu0 0
        %3245 = vmatprep.subr.bf16.mxu0 0
        %3246 = vmatpush1.bf16.msra.mxu0 0
        %3247 = vmatprep.mubr.bf16.mxu0 0
        %3248 = vmatmul.mubr.bf16.gmra.mrb[0].mxu0 %v3141
        %v3249 = vpop.f32.mrb[0].mxu0
        %v3250 = vadd.f32 0.0, %v3249
        %v3251 = vpop.f32.mrb[0].mxu0
        %v3252 = vpop.f32.mrb[0].mxu0
        %v3253 = vadd.f32 0.0, %v3252
        %v3254 = vpop.f32.mrb[0].mxu0
        %3255 = vmatprep.mubr.bf16.mxu0 0
        %3256 = vmatmul.mubr.bf16.gmra.mrb[0].mxu0 %v3144
        %v3257 = vpop.f32.mrb[0].mxu0
        %v3258 = vpop.f32.mrb[0].mxu0
        %v3259 = vpop.f32.mrb[0].mxu0
        %v3260 = vadd.f32 0.0, %v3259
        %v3261 = vpop.f32.mrb[0].mxu0
        %3262 = vmatprep.mubr.bf16.mxu0 0
        %3263 = vmatmul.mubr.bf16.gmra.mrb[0].mxu0 %v3147
        %v3264 = vpop.f32.mrb[0].mxu0
        %v3265 = vadd.f32 0.0, %v3264
        %v3266 = vpop.f32.mrb[0].mxu0
        %v3267 = vpop.f32.mrb[0].mxu0
        %v3268 = vpop.f32.mrb[0].mxu0
        %3269 = vmatprep.mubr.bf16.mxu0 0
        %3270 = vmatmul.mubr.bf16.gmra.mrb[0].mxu0 %v3150
        %v3271 = vpop.f32.mrb[0].mxu0
        %v3272 = vadd.f32 0.0, %v3271
        %v3273 = vpop.f32.mrb[0].mxu0
        %v3274 = vpop.f32.mrb[0].mxu0
        %v3275 = vadd.f32 0.0, %v3274
        %v3276 = vpop.f32.mrb[0].mxu0
        %3277 = vmatprep.mubr.bf16.mxu0 0
        %3278 = vmatmul.mubr.bf16.gmra.mrb[0].mxu0 %v3153
        %v3279 = vpop.f32.mrb[0].mxu0
        %v3280 = vpop.f32.mrb[0].mxu0
        %v3281 = vpop.f32.mrb[0].mxu0
        %v3282 = vadd.f32 0.0, %v3281
        %v3283 = vpop.f32.mrb[0].mxu0
        %3284 = vmatprep.mubr.bf16.mxu0 0
        %3285 = vmatmul.mubr.bf16.gmra.mrb[0].mxu0 %v3156
        %v3286 = vpop.f32.mrb[0].mxu0
        %v3287 = vadd.f32 0.0, %v3286
        %v3288 = vpop.f32.mrb[0].mxu0
        %v3289 = vpop.f32.mrb[0].mxu0
        %v3290 = vpop.f32.mrb[0].mxu0
        %3291 = vmatprep.mubr.bf16.mxu0 0
        %3292 = vmatmul.mubr.bf16.gmra.mrb[0].mxu0 %v3159
        %v3293 = vpop.f32.mrb[0].mxu0
        %v3294 = vadd.f32 0.0, %v3293
        %v3295 = vpop.f32.mrb[0].mxu0
        %v3296 = vpop.f32.mrb[0].mxu0
        %v3297 = vadd.f32 0.0, %v3296
        %v3298 = vpop.f32.mrb[0].mxu0
        %3299 = vmatprep.mubr.bf16.mxu0 0
        %3300 = vmatmul.mubr.bf16.gmra.mrb[0].mxu0 %v3162
        %v3301 = vpop.f32.mrb[0].mxu0
        %v3302 = vpop.f32.mrb[0].mxu0
        %v3303 = vpop.f32.mrb[0].mxu0
        %v3304 = vadd.f32 0.0, %v3303
        %v3305 = vpop.f32.mrb[0].mxu0
        %3306 = vmatprep.mubr.bf16.mxu0 0
        %3307 = vmatmul.mubr.bf16.gmra.mrb[0].mxu0 %v3165
        %v3308 = vpop.f32.mrb[0].mxu0
        %v3309 = vadd.f32 0.0, %v3308
        %v3310 = vpop.f32.mrb[0].mxu0
        %v3311 = vpop.f32.mrb[0].mxu0
        %v3312 = vpop.f32.mrb[0].mxu0
        %3313 = vmatprep.mubr.bf16.mxu0 0
        %3314 = vmatmul.mubr.bf16.gmra.mrb[0].mxu0 %v3168
        %v3315 = vpop.f32.mrb[0].mxu0
        %v3316 = vadd.f32 0.0, %v3315
        %v3317 = vpop.f32.mrb[0].mxu0
        %v3318 = vpop.f32.mrb[0].mxu0
        %v3319 = vadd.f32 0.0, %v3318
        %v3320 = vpop.f32.mrb[0].mxu0
        %3321 = vmatprep.mubr.bf16.mxu0 0
        %3322 = vmatmul.mubr.bf16.gmra.mrb[0].mxu0 %v3171
        %v3323 = vpop.f32.mrb[0].mxu0
        %v3324 = vpop.f32.mrb[0].mxu0
        %v3325 = vpop.f32.mrb[0].mxu0
        %v3326 = vadd.f32 0.0, %v3325
        %v3327 = vpop.f32.mrb[0].mxu0
        %3328 = vmatprep.mubr.bf16.mxu0 0
        %3329 = vmatmul.mubr.bf16.gmra.mrb[0].mxu0 %v3174
        %v3330 = vpop.f32.mrb[0].mxu0
        %v3331 = vadd.f32 0.0, %v3330
        %v3332 = vpop.f32.mrb[0].mxu0
        %v3333 = vpop.f32.mrb[0].mxu0
        %v3334 = vpop.f32.mrb[0].mxu0
        %3335 = vmatprep.mubr.bf16.mxu0 0
        %3336 = vmatmul.mubr.bf16.gmra.mrb[0].mxu0 %v3177
        %v3337 = vpop.f32.mrb[0].mxu0
        %v3338 = vadd.f32 0.0, %v3337
        %v3339 = vpop.f32.mrb[0].mxu0
        %v3340 = vpop.f32.mrb[0].mxu0
        %v3341 = vadd.f32 0.0, %v3340
        %v3342 = vpop.f32.mrb[0].mxu0
        %3343 = vmatprep.mubr.bf16.mxu0 0
        %3344 = vmatmul.mubr.bf16.gmra.mrb[0].mxu0 %v3180
        %v3345 = vpop.f32.mrb[0].mxu0
        %v3346 = vpop.f32.mrb[0].mxu0
        %v3347 = vpop.f32.mrb[0].mxu0
        %v3348 = vadd.f32 0.0, %v3347
        %v3349 = vpop.f32.mrb[0].mxu0
        %3350 = vmatprep.mubr.bf16.mxu0 0
        %3351 = vmatmul.mubr.bf16.gmra.mrb[0].mxu0 %v3183
        %v3352 = vpop.f32.mrb[0].mxu0
        %v3353 = vadd.f32 0.0, %v3352
        %v3354 = vpop.f32.mrb[0].mxu0
        %v3355 = vpop.f32.mrb[0].mxu0
        %v3356 = vpop.f32.mrb[0].mxu0
        %3357 = vmatprep.mubr.bf16.mxu0 0
        %3358 = vmatmul.mubr.bf16.gmra.mrb[0].mxu0 %v3186
        %v3359 = vpop.f32.mrb[0].mxu0
        %v3360 = vadd.f32 0.0, %v3359
        %v3361 = vpop.f32.mrb[0].mxu0
        %v3362 = vpop.f32.mrb[0].mxu0
        %v3363 = vadd.f32 0.0, %v3362
        %v3364 = vpop.f32.mrb[0].mxu0
        %3365 = vmatprep.mubr.bf16.mxu0 0
        %3366 = vmatmul.mubr.bf16.gmra.mrb[0].mxu0 %v3189
        %v3367 = vpop.f32.mrb[0].mxu0
        %v3368 = vpop.f32.mrb[0].mxu0
        %v3369 = vpop.f32.mrb[0].mxu0
        %v3370 = vadd.f32 0.0, %v3369
        %v3371 = vpop.f32.mrb[0].mxu0
        %3372 = vmatprep.mubr.bf16.mxu0 0
        %3373 = vmatmul.mubr.bf16.gmra.mrb[0].mxu0 %v3192
        %v3374 = vpop.f32.mrb[0].mxu0
        %v3375 = vadd.f32 0.0, %v3374
        %v3376 = vpop.f32.mrb[0].mxu0
        %v3377 = vpop.f32.mrb[0].mxu0
        %v3378 = vpop.f32.mrb[0].mxu0
        %3379 = vmatprep.mubr.bf16.mxu0 0
        %3380 = vmatmul.mubr.bf16.gmra.mrb[0].mxu0 %v3195
        %v3381 = vpop.f32.mrb[0].mxu0
        %v3382 = vadd.f32 0.0, %v3381
        %v3383 = vpop.f32.mrb[0].mxu0
        %v3384 = vpop.f32.mrb[0].mxu0
        %v3385 = vadd.f32 0.0, %v3384
        %v3386 = vpop.f32.mrb[0].mxu0
        %3387 = vmatprep.mubr.bf16.mxu0 0
        %3388 = vmatmul.mubr.bf16.gmra.mrb[0].mxu0 %v3198
        %v3389 = vpop.f32.mrb[0].mxu0
        %v3390 = vpop.f32.mrb[0].mxu0
        %v3391 = vpop.f32.mrb[0].mxu0
        %v3392 = vadd.f32 0.0, %v3391
        %v3393 = vpop.f32.mrb[0].mxu0
        %3394 = vmatprep.mubr.bf16.mxu0 0
        %3395 = vmatmul.mubr.bf16.gmra.mrb[0].mxu0 %v3201
        %v3396 = vpop.f32.mrb[0].mxu0
        %v3397 = vadd.f32 0.0, %v3396
        %v3398 = vpop.f32.mrb[0].mxu0
        %v3399 = vpop.f32.mrb[0].mxu0
        %v3400 = vpop.f32.mrb[0].mxu0
        %3401 = vmatprep.mubr.bf16.mxu0 0
        %3402 = vmatmul.mubr.bf16.gmra.mrb[0].mxu0 %v3204
        %v3403 = vpop.f32.mrb[0].mxu0
        %v3404 = vadd.f32 0.0, %v3403
        %v3405 = vpop.f32.mrb[0].mxu0
        %v3406 = vpop.f32.mrb[0].mxu0
        %v3407 = vadd.f32 0.0, %v3406
        %v3408 = vpop.f32.mrb[0].mxu0
        %3409 = vmatprep.mubr.bf16.mxu0 0
        %3410 = vmatmul.mubr.bf16.gmra.mrb[0].mxu0 %v3207
        %v3411 = vpop.f32.mrb[0].mxu0
        %v3412 = vpop.f32.mrb[0].mxu0
        %v3413 = vpop.f32.mrb[0].mxu0
        %v3414 = vadd.f32 0.0, %v3413
        %v3415 = vpop.f32.mrb[0].mxu0
        %3416 = vmatprep.mubr.bf16.mxu0 0
        %3417 = vmatmul.mubr.bf16.gmra.mrb[0].mxu0 %v3210
        %v3418 = vpop.f32.mrb[0].mxu0
        %v3419 = vadd.f32 0.0, %v3418
        %v3420 = vpop.f32.mrb[0].mxu0
        %v3421 = vpop.f32.mrb[0].mxu0
        %v3422 = vpop.f32.mrb[0].mxu0
        %3423 = vdwg.mxu0
        %v3424 = vadd.f32 %v2884, %v3250
        %v3425 = vadd.f32 %v2885, %v3253
        %v3426 = vadd.f32 %v2886, %v3260
        %v3427 = vadd.f32 %v2887, %v3265
        %v3428 = vadd.f32 %v2888, %v3272
        %v3429 = vadd.f32 %v2889, %v3275
        %v3430 = vadd.f32 %v2890, %v3282
        %v3431 = vadd.f32 %v2891, %v3287
        %v3432 = vadd.f32 %v2892, %v3294
        %v3433 = vadd.f32 %v2893, %v3297
        %v3434 = vadd.f32 %v2894, %v3304
        %v3435 = vadd.f32 %v2895, %v3309
        %v3436 = vadd.f32 %v2896, %v3316
        %v3437 = vadd.f32 %v2897, %v3319
        %v3438 = vadd.f32 %v2898, %v3326
        %v3439 = vadd.f32 %v2899, %v3331
        %v3440 = vadd.f32 %v2900, %v3338
        %v3441 = vadd.f32 %v2901, %v3341
        %v3442 = vadd.f32 %v2902, %v3348
        %v3443 = vadd.f32 %v2903, %v3353
        %v3444 = vadd.f32 %v2904, %v3360
        %v3445 = vadd.f32 %v2905, %v3363
        %v3446 = vadd.f32 %v2906, %v3370
        %v3447 = vadd.f32 %v2907, %v3375
        %v3448 = vadd.f32 %v2908, %v3382
        %v3449 = vadd.f32 %v2909, %v3385
        %v3450 = vadd.f32 %v2910, %v3392
        %v3451 = vadd.f32 %v2911, %v3397
        %v3452 = vadd.f32 %v2912, %v3404
        %v3453 = vadd.f32 %v2913, %v3407
        %v3454 = vadd.f32 %v2914, %v3414
        %v3455 = vadd.f32 %v2915, %v3419
        %v3456 = vld [vmem:[#allocation2 + $0x20] sm:$0xf8]
        %v3457 = vld [vmem:[#allocation2 + $0x28] sm:$0xff]
        %v3458 = vld [vmem:[#allocation2 + $0x30] sm:$0xff]
        %v3459 = vld [vmem:[#allocation2 + $0x38] sm:$0xff]
        %v3460 = vld [vmem:[#allocation2 + $0x40] sm:$0xff]
        %v3461 = vld [vmem:[#allocation2 + $0x48] sm:$0xff]
        %v3462 = vld [vmem:[#allocation2 + $0x50] sm:$0xff]
        %v3463 = vld [vmem:[#allocation2 + $0x58] sm:$0xff]
        %v3464 = vld [vmem:[#allocation2 + $0x60] sm:$0xff]
        %v3465 = vld [vmem:[#allocation2 + $0x68] sm:$0xff]
        %v3466 = vld [vmem:[#allocation2 + $0x70] sm:$0xff]
        %v3467 = vld [vmem:[#allocation2 + $0x78] sm:$0xff]
        %v3468 = vld [vmem:[#allocation2 + $0x80] sm:$0xff]
        %v3469 = vld [vmem:[#allocation2 + $0x88] sm:$0xff]
        %v3470 = vld [vmem:[#allocation2 + $0x90] sm:$0xff]
        %v3471 = vld [vmem:[#allocation2 + $0x98] sm:$0xff]
        %v3472 = vld [vmem:[#allocation2 + $0xa0] sm:$0xff]
        %v3473 = vld [vmem:[#allocation2 + $0xa8] sm:$0xff]
        %v3474 = vld [vmem:[#allocation2 + $0xb0] sm:$0xff]
        %v3475 = vld [vmem:[#allocation2 + $0xb8] sm:$0xff]
        %v3476 = vld [vmem:[#allocation2 + $0xc0] sm:$0xff]
        %v3477 = vld [vmem:[#allocation2 + $0xc8] sm:$0xff]
        %v3478 = vld [vmem:[#allocation2 + $0xd0] sm:$0xff]
        %v3479 = vld [vmem:[#allocation2 + $0xd8] sm:$0xff]
        %v3480 = vld [vmem:[#allocation2 + $0xe0] sm:$0xf]
        %s3481 = scalar_lea.vmem %s2, 24
        %v3482 = vld [vmem:[%s3481] sm:$0xf]
        %v3484 = vshrl.u32 %v3456, 16
        %v3486 = vrot.slane %v3484, 3
        %v3487 = vshll.u32 %v3456, 16
        %v3489 = vrot.slane %v3487, 4
        %v3490 = vor.u32 %v3486, %v3489
        %v3492 = vshrl.u32 %v3457, 16
        %v3494 = vrot.slane %v3492, 3
        %v3495 = vshll.u32 %v3457, 16
        %v3497 = vrot.slane %v3495, 4
        %v3498 = vor.u32 %v3494, %v3497
        %v3499 = vsel %vm1144, %v3490, %v3498
        %v3501 = vshrl.u32 %v3458, 16
        %v3503 = vrot.slane %v3501, 3
        %v3504 = vshll.u32 %v3458, 16
        %v3506 = vrot.slane %v3504, 4
        %v3507 = vor.u32 %v3503, %v3506
        %v3508 = vsel %vm1144, %v3498, %v3507
        %v3510 = vshrl.u32 %v3459, 16
        %v3512 = vrot.slane %v3510, 3
        %v3513 = vshll.u32 %v3459, 16
        %v3515 = vrot.slane %v3513, 4
        %v3516 = vor.u32 %v3512, %v3515
        %v3517 = vsel %vm1144, %v3507, %v3516
        %v3519 = vshrl.u32 %v3460, 16
        %v3521 = vrot.slane %v3519, 3
        %v3522 = vshll.u32 %v3460, 16
        %v3524 = vrot.slane %v3522, 4
        %v3525 = vor.u32 %v3521, %v3524
        %v3526 = vsel %vm1144, %v3516, %v3525
        %v3528 = vshrl.u32 %v3461, 16
        %v3530 = vrot.slane %v3528, 3
        %v3531 = vshll.u32 %v3461, 16
        %v3533 = vrot.slane %v3531, 4
        %v3534 = vor.u32 %v3530, %v3533
        %v3535 = vsel %vm1144, %v3525, %v3534
        %v3537 = vshrl.u32 %v3462, 16
        %v3539 = vrot.slane %v3537, 3
        %v3540 = vshll.u32 %v3462, 16
        %v3542 = vrot.slane %v3540, 4
        %v3543 = vor.u32 %v3539, %v3542
        %v3544 = vsel %vm1144, %v3534, %v3543
        %v3546 = vshrl.u32 %v3463, 16
        %v3548 = vrot.slane %v3546, 3
        %v3549 = vshll.u32 %v3463, 16
        %v3551 = vrot.slane %v3549, 4
        %v3552 = vor.u32 %v3548, %v3551
        %v3553 = vsel %vm1144, %v3543, %v3552
        %v3555 = vshrl.u32 %v3464, 16
        %v3557 = vrot.slane %v3555, 3
        %v3558 = vshll.u32 %v3464, 16
        %v3560 = vrot.slane %v3558, 4
        %v3561 = vor.u32 %v3557, %v3560
        %v3562 = vsel %vm1144, %v3552, %v3561
        %v3564 = vshrl.u32 %v3465, 16
        %v3566 = vrot.slane %v3564, 3
        %v3567 = vshll.u32 %v3465, 16
        %v3569 = vrot.slane %v3567, 4
        %v3570 = vor.u32 %v3566, %v3569
        %v3571 = vsel %vm1144, %v3561, %v3570
        %v3573 = vshrl.u32 %v3466, 16
        %v3575 = vrot.slane %v3573, 3
        %v3576 = vshll.u32 %v3466, 16
        %v3578 = vrot.slane %v3576, 4
        %v3579 = vor.u32 %v3575, %v3578
        %v3580 = vsel %vm1144, %v3570, %v3579
        %v3582 = vshrl.u32 %v3467, 16
        %v3584 = vrot.slane %v3582, 3
        %v3585 = vshll.u32 %v3467, 16
        %v3587 = vrot.slane %v3585, 4
        %v3588 = vor.u32 %v3584, %v3587
        %v3589 = vsel %vm1144, %v3579, %v3588
        %v3591 = vshrl.u32 %v3468, 16
        %v3593 = vrot.slane %v3591, 3
        %v3594 = vshll.u32 %v3468, 16
        %v3596 = vrot.slane %v3594, 4
        %v3597 = vor.u32 %v3593, %v3596
        %v3598 = vsel %vm1144, %v3588, %v3597
        %v3600 = vshrl.u32 %v3469, 16
        %v3602 = vrot.slane %v3600, 3
        %v3603 = vshll.u32 %v3469, 16
        %v3605 = vrot.slane %v3603, 4
        %v3606 = vor.u32 %v3602, %v3605
        %v3607 = vsel %vm1144, %v3597, %v3606
        %v3609 = vshrl.u32 %v3470, 16
        %v3611 = vrot.slane %v3609, 3
        %v3612 = vshll.u32 %v3470, 16
        %v3614 = vrot.slane %v3612, 4
        %v3615 = vor.u32 %v3611, %v3614
        %v3616 = vsel %vm1144, %v3606, %v3615
        %v3618 = vshrl.u32 %v3471, 16
        %v3620 = vrot.slane %v3618, 3
        %v3621 = vshll.u32 %v3471, 16
        %v3623 = vrot.slane %v3621, 4
        %v3624 = vor.u32 %v3620, %v3623
        %v3625 = vsel %vm1144, %v3615, %v3624
        %v3627 = vshrl.u32 %v3472, 16
        %v3629 = vrot.slane %v3627, 3
        %v3630 = vshll.u32 %v3472, 16
        %v3632 = vrot.slane %v3630, 4
        %v3633 = vor.u32 %v3629, %v3632
        %v3634 = vsel %vm1144, %v3624, %v3633
        %v3636 = vshrl.u32 %v3473, 16
        %v3638 = vrot.slane %v3636, 3
        %v3639 = vshll.u32 %v3473, 16
        %v3641 = vrot.slane %v3639, 4
        %v3642 = vor.u32 %v3638, %v3641
        %v3643 = vsel %vm1144, %v3633, %v3642
        %v3645 = vshrl.u32 %v3474, 16
        %v3647 = vrot.slane %v3645, 3
        %v3648 = vshll.u32 %v3474, 16
        %v3650 = vrot.slane %v3648, 4
        %v3651 = vor.u32 %v3647, %v3650
        %v3652 = vsel %vm1144, %v3642, %v3651
        %v3654 = vshrl.u32 %v3475, 16
        %v3656 = vrot.slane %v3654, 3
        %v3657 = vshll.u32 %v3475, 16
        %v3659 = vrot.slane %v3657, 4
        %v3660 = vor.u32 %v3656, %v3659
        %v3661 = vsel %vm1144, %v3651, %v3660
        %v3663 = vshrl.u32 %v3476, 16
        %v3665 = vrot.slane %v3663, 3
        %v3666 = vshll.u32 %v3476, 16
        %v3668 = vrot.slane %v3666, 4
        %v3669 = vor.u32 %v3665, %v3668
        %v3670 = vsel %vm1144, %v3660, %v3669
        %v3672 = vshrl.u32 %v3477, 16
        %v3674 = vrot.slane %v3672, 3
        %v3675 = vshll.u32 %v3477, 16
        %v3677 = vrot.slane %v3675, 4
        %v3678 = vor.u32 %v3674, %v3677
        %v3679 = vsel %vm1144, %v3669, %v3678
        %v3681 = vshrl.u32 %v3478, 16
        %v3683 = vrot.slane %v3681, 3
        %v3684 = vshll.u32 %v3478, 16
        %v3686 = vrot.slane %v3684, 4
        %v3687 = vor.u32 %v3683, %v3686
        %v3688 = vsel %vm1144, %v3678, %v3687
        %v3690 = vshrl.u32 %v3479, 16
        %v3692 = vrot.slane %v3690, 3
        %v3693 = vshll.u32 %v3479, 16
        %v3695 = vrot.slane %v3693, 4
        %v3696 = vor.u32 %v3692, %v3695
        %v3697 = vsel %vm1144, %v3687, %v3696
        %v3699 = vshrl.u32 %v3480, 16
        %v3701 = vrot.slane %v3699, 3
        %v3702 = vshll.u32 %v3480, 16
        %v3704 = vrot.slane %v3702, 4
        %v3705 = vor.u32 %v3701, %v3704
        %v3706 = vsel %vm1144, %v3696, %v3705
        %v3708 = vsel %vm627, %v3499, 0
        %v3711 = vsel %vm627, %v3508, 0
        %v3714 = vsel %vm627, %v3517, 0
        %v3717 = vsel %vm627, %v3526, 0
        %v3720 = vsel %vm627, %v3535, 0
        %v3723 = vsel %vm627, %v3544, 0
        %v3726 = vsel %vm627, %v3553, 0
        %v3729 = vsel %vm627, %v3562, 0
        %v3732 = vsel %vm627, %v3571, 0
        %v3735 = vsel %vm627, %v3580, 0
        %v3738 = vsel %vm627, %v3589, 0
        %v3741 = vsel %vm627, %v3598, 0
        %v3744 = vsel %vm627, %v3607, 0
        %v3747 = vsel %vm627, %v3616, 0
        %v3750 = vsel %vm627, %v3625, 0
        %v3753 = vsel %vm627, %v3634, 0
        %v3756 = vsel %vm627, %v3643, 0
        %v3759 = vsel %vm627, %v3652, 0
        %v3762 = vsel %vm627, %v3661, 0
        %v3765 = vsel %vm627, %v3670, 0
        %v3768 = vsel %vm627, %v3679, 0
        %v3771 = vsel %vm627, %v3688, 0
        %v3774 = vsel %vm627, %v3697, 0
        %v3777 = vsel %vm627, %v3706, 0
        %v3780 = vsel %vm931, %v3482, 0
        %3782 = vmatprep.subr.bf16.mxu0 0
        %3783 = vmatpush1.bf16.msra.mxu0 %v3780
        %3784 = vmatprep.subr.bf16.mxu0 0
        %3785 = vmatpush1.bf16.msra.mxu0 0
        %3786 = vmatprep.subr.bf16.mxu0 0
        %3787 = vmatpush1.bf16.msra.mxu0 0
        %3788 = vmatprep.subr.bf16.mxu0 0
        %3789 = vmatpush1.bf16.msra.mxu0 0
        %3790 = vmatprep.subr.bf16.mxu0 0
        %3791 = vmatpush1.bf16.msra.mxu0 0
        %3792 = vmatprep.subr.bf16.mxu0 0
        %3793 = vmatpush1.bf16.msra.mxu0 0
        %3794 = vmatprep.subr.bf16.mxu0 0
        %3795 = vmatpush1.bf16.msra.mxu0 0
        %3796 = vmatprep.subr.bf16.mxu0 0
        %3797 = vmatpush1.bf16.msra.mxu0 0
        %3798 = vmatprep.subr.bf16.mxu0 0
        %3799 = vmatpush1.bf16.msra.mxu0 0
        %3800 = vmatprep.subr.bf16.mxu0 0
        %3801 = vmatpush1.bf16.msra.mxu0 0
        %3802 = vmatprep.subr.bf16.mxu0 0
        %3803 = vmatpush1.bf16.msra.mxu0 0
        %3804 = vmatprep.subr.bf16.mxu0 0
        %3805 = vmatpush1.bf16.msra.mxu0 0
        %3806 = vmatprep.subr.bf16.mxu0 0
        %3807 = vmatpush1.bf16.msra.mxu0 0
        %3808 = vmatprep.subr.bf16.mxu0 0
        %3809 = vmatpush1.bf16.msra.mxu0 0
        %3810 = vmatprep.subr.bf16.mxu0 0
        %3811 = vmatpush1.bf16.msra.mxu0 0
        %3812 = vmatprep.subr.bf16.mxu0 0
        %3813 = vmatpush1.bf16.msra.mxu0 0
        %3814 = vmatprep.mubr.bf16.mxu0 0
        %3815 = vmatmul.mubr.bf16.gmra.mrb[0].mxu0 %v3708
        %v3816 = vpop.f32.mrb[0].mxu0
        %v3817 = vadd.f32 0.0, %v3816
        %v3818 = vpop.f32.mrb[0].mxu0
        %v3819 = vpop.f32.mrb[0].mxu0
        %v3820 = vadd.f32 0.0, %v3819
        %v3821 = vpop.f32.mrb[0].mxu0
        %3822 = vmatprep.mubr.bf16.mxu0 0
        %3823 = vmatmul.mubr.bf16.gmra.mrb[0].mxu0 %v3711
        %v3824 = vpop.f32.mrb[0].mxu0
        %v3825 = vpop.f32.mrb[0].mxu0
        %v3826 = vpop.f32.mrb[0].mxu0
        %v3827 = vadd.f32 0.0, %v3826
        %v3828 = vpop.f32.mrb[0].mxu0
        %3829 = vmatprep.mubr.bf16.mxu0 0
        %3830 = vmatmul.mubr.bf16.gmra.mrb[0].mxu0 %v3714
        %v3831 = vpop.f32.mrb[0].mxu0
        %v3832 = vadd.f32 0.0, %v3831
        %v3833 = vpop.f32.mrb[0].mxu0
        %v3834 = vpop.f32.mrb[0].mxu0
        %v3835 = vpop.f32.mrb[0].mxu0
        %3836 = vmatprep.mubr.bf16.mxu0 0
        %3837 = vmatmul.mubr.bf16.gmra.mrb[0].mxu0 %v3717
        %v3838 = vpop.f32.mrb[0].mxu0
        %v3839 = vadd.f32 0.0, %v3838
        %v3840 = vpop.f32.mrb[0].mxu0
        %v3841 = vpop.f32.mrb[0].mxu0
        %v3842 = vadd.f32 0.0, %v3841
        %v3843 = vpop.f32.mrb[0].mxu0
        %3844 = vmatprep.mubr.bf16.mxu0 0
        %3845 = vmatmul.mubr.bf16.gmra.mrb[0].mxu0 %v3720
        %v3846 = vpop.f32.mrb[0].mxu0
        %v3847 = vpop.f32.mrb[0].mxu0
        %v3848 = vpop.f32.mrb[0].mxu0
        %v3849 = vadd.f32 0.0, %v3848
        %v3850 = vpop.f32.mrb[0].mxu0
        %3851 = vmatprep.mubr.bf16.mxu0 0
        %3852 = vmatmul.mubr.bf16.gmra.mrb[0].mxu0 %v3723
        %v3853 = vpop.f32.mrb[0].mxu0
        %v3854 = vadd.f32 0.0, %v3853
        %v3855 = vpop.f32.mrb[0].mxu0
        %v3856 = vpop.f32.mrb[0].mxu0
        %v3857 = vpop.f32.mrb[0].mxu0
        %3858 = vmatprep.mubr.bf16.mxu0 0
        %3859 = vmatmul.mubr.bf16.gmra.mrb[0].mxu0 %v3726
        %v3860 = vpop.f32.mrb[0].mxu0
        %v3861 = vadd.f32 0.0, %v3860
        %v3862 = vpop.f32.mrb[0].mxu0
        %v3863 = vpop.f32.mrb[0].mxu0
        %v3864 = vadd.f32 0.0, %v3863
        %v3865 = vpop.f32.mrb[0].mxu0
        %3866 = vmatprep.mubr.bf16.mxu0 0
        %3867 = vmatmul.mubr.bf16.gmra.mrb[0].mxu0 %v3729
        %v3868 = vpop.f32.mrb[0].mxu0
        %v3869 = vpop.f32.mrb[0].mxu0
        %v3870 = vpop.f32.mrb[0].mxu0
        %v3871 = vadd.f32 0.0, %v3870
        %v3872 = vpop.f32.mrb[0].mxu0
        %3873 = vmatprep.mubr.bf16.mxu0 0
        %3874 = vmatmul.mubr.bf16.gmra.mrb[0].mxu0 %v3732
        %v3875 = vpop.f32.mrb[0].mxu0
        %v3876 = vadd.f32 0.0, %v3875
        %v3877 = vpop.f32.mrb[0].mxu0
        %v3878 = vpop.f32.mrb[0].mxu0
        %v3879 = vpop.f32.mrb[0].mxu0
        %3880 = vmatprep.mubr.bf16.mxu0 0
        %3881 = vmatmul.mubr.bf16.gmra.mrb[0].mxu0 %v3735
        %v3882 = vpop.f32.mrb[0].mxu0
        %v3883 = vadd.f32 0.0, %v3882
        %v3884 = vpop.f32.mrb[0].mxu0
        %v3885 = vpop.f32.mrb[0].mxu0
        %v3886 = vadd.f32 0.0, %v3885
        %v3887 = vpop.f32.mrb[0].mxu0
        %3888 = vmatprep.mubr.bf16.mxu0 0
        %3889 = vmatmul.mubr.bf16.gmra.mrb[0].mxu0 %v3738
        %v3890 = vpop.f32.mrb[0].mxu0
        %v3891 = vpop.f32.mrb[0].mxu0
        %v3892 = vpop.f32.mrb[0].mxu0
        %v3893 = vadd.f32 0.0, %v3892
        %v3894 = vpop.f32.mrb[0].mxu0
        %3895 = vmatprep.mubr.bf16.mxu0 0
        %3896 = vmatmul.mubr.bf16.gmra.mrb[0].mxu0 %v3741
        %v3897 = vpop.f32.mrb[0].mxu0
        %v3898 = vadd.f32 0.0, %v3897
        %v3899 = vpop.f32.mrb[0].mxu0
        %v3900 = vpop.f32.mrb[0].mxu0
        %v3901 = vpop.f32.mrb[0].mxu0
        %3902 = vmatprep.mubr.bf16.mxu0 0
        %3903 = vmatmul.mubr.bf16.gmra.mrb[0].mxu0 %v3744
        %v3904 = vpop.f32.mrb[0].mxu0
        %v3905 = vadd.f32 0.0, %v3904
        %v3906 = vpop.f32.mrb[0].mxu0
        %v3907 = vpop.f32.mrb[0].mxu0
        %v3908 = vadd.f32 0.0, %v3907
        %v3909 = vpop.f32.mrb[0].mxu0
        %3910 = vmatprep.mubr.bf16.mxu0 0
        %3911 = vmatmul.mubr.bf16.gmra.mrb[0].mxu0 %v3747
        %v3912 = vpop.f32.mrb[0].mxu0
        %v3913 = vpop.f32.mrb[0].mxu0
        %v3914 = vpop.f32.mrb[0].mxu0
        %v3915 = vadd.f32 0.0, %v3914
        %v3916 = vpop.f32.mrb[0].mxu0
        %3917 = vmatprep.mubr.bf16.mxu0 0
        %3918 = vmatmul.mubr.bf16.gmra.mrb[0].mxu0 %v3750
        %v3919 = vpop.f32.mrb[0].mxu0
        %v3920 = vadd.f32 0.0, %v3919
        %v3921 = vpop.f32.mrb[0].mxu0
        %v3922 = vpop.f32.mrb[0].mxu0
        %v3923 = vpop.f32.mrb[0].mxu0
        %3924 = vmatprep.mubr.bf16.mxu0 0
        %3925 = vmatmul.mubr.bf16.gmra.mrb[0].mxu0 %v3753
        %v3926 = vpop.f32.mrb[0].mxu0
        %v3927 = vadd.f32 0.0, %v3926
        %v3928 = vpop.f32.mrb[0].mxu0
        %v3929 = vpop.f32.mrb[0].mxu0
        %v3930 = vadd.f32 0.0, %v3929
        %v3931 = vpop.f32.mrb[0].mxu0
        %3932 = vmatprep.mubr.bf16.mxu0 0
        %3933 = vmatmul.mubr.bf16.gmra.mrb[0].mxu0 %v3756
        %v3934 = vpop.f32.mrb[0].mxu0
        %v3935 = vpop.f32.mrb[0].mxu0
        %v3936 = vpop.f32.mrb[0].mxu0
        %v3937 = vadd.f32 0.0, %v3936
        %v3938 = vpop.f32.mrb[0].mxu0
        %3939 = vmatprep.mubr.bf16.mxu0 0
        %3940 = vmatmul.mubr.bf16.gmra.mrb[0].mxu0 %v3759
        %v3941 = vpop.f32.mrb[0].mxu0
        %v3942 = vadd.f32 0.0, %v3941
        %v3943 = vpop.f32.mrb[0].mxu0
        %v3944 = vpop.f32.mrb[0].mxu0
        %v3945 = vpop.f32.mrb[0].mxu0
        %3946 = vmatprep.mubr.bf16.mxu0 0
        %3947 = vmatmul.mubr.bf16.gmra.mrb[0].mxu0 %v3762
        %v3948 = vpop.f32.mrb[0].mxu0
        %v3949 = vadd.f32 0.0, %v3948
        %v3950 = vpop.f32.mrb[0].mxu0
        %v3951 = vpop.f32.mrb[0].mxu0
        %v3952 = vadd.f32 0.0, %v3951
        %v3953 = vpop.f32.mrb[0].mxu0
        %3954 = vmatprep.mubr.bf16.mxu0 0
        %3955 = vmatmul.mubr.bf16.gmra.mrb[0].mxu0 %v3765
        %v3956 = vpop.f32.mrb[0].mxu0
        %v3957 = vpop.f32.mrb[0].mxu0
        %v3958 = vpop.f32.mrb[0].mxu0
        %v3959 = vadd.f32 0.0, %v3958
        %v3960 = vpop.f32.mrb[0].mxu0
        %3961 = vmatprep.mubr.bf16.mxu0 0
        %3962 = vmatmul.mubr.bf16.gmra.mrb[0].mxu0 %v3768
        %v3963 = vpop.f32.mrb[0].mxu0
        %v3964 = vadd.f32 0.0, %v3963
        %v3965 = vpop.f32.mrb[0].mxu0
        %v3966 = vpop.f32.mrb[0].mxu0
        %v3967 = vpop.f32.mrb[0].mxu0
        %3968 = vmatprep.mubr.bf16.mxu0 0
        %3969 = vmatmul.mubr.bf16.gmra.mrb[0].mxu0 %v3771
        %v3970 = vpop.f32.mrb[0].mxu0
        %v3971 = vadd.f32 0.0, %v3970
        %v3972 = vpop.f32.mrb[0].mxu0
        %v3973 = vpop.f32.mrb[0].mxu0
        %v3974 = vadd.f32 0.0, %v3973
        %v3975 = vpop.f32.mrb[0].mxu0
        %3976 = vmatprep.mubr.bf16.mxu0 0
        %3977 = vmatmul.mubr.bf16.gmra.mrb[0].mxu0 %v3774
        %v3978 = vpop.f32.mrb[0].mxu0
        %v3979 = vpop.f32.mrb[0].mxu0
        %v3980 = vpop.f32.mrb[0].mxu0
        %v3981 = vadd.f32 0.0, %v3980
        %v3982 = vpop.f32.mrb[0].mxu0
        %3983 = vmatprep.mubr.bf16.mxu0 0
        %3984 = vmatmul.mubr.bf16.gmra.mrb[0].mxu0 %v3777
        %v3985 = vpop.f32.mrb[0].mxu0
        %v3986 = vadd.f32 0.0, %v3985
        %v3987 = vpop.f32.mrb[0].mxu0
        %v3988 = vpop.f32.mrb[0].mxu0
        %v3989 = vpop.f32.mrb[0].mxu0
        %3990 = vdwg.mxu0
        %v3991 = vadd.f32 %v3424, %v3817
        %v3992 = vadd.f32 %v3425, %v3820
        %v3993 = vadd.f32 %v3426, %v3827
        %v3994 = vadd.f32 %v3427, %v3832
        %v3995 = vadd.f32 %v3428, %v3839
        %v3996 = vadd.f32 %v3429, %v3842
        %v3997 = vadd.f32 %v3430, %v3849
        %v3998 = vadd.f32 %v3431, %v3854
        %v3999 = vadd.f32 %v3432, %v3861
        %v4000 = vadd.f32 %v3433, %v3864
        %v4001 = vadd.f32 %v3434, %v3871
        %v4002 = vadd.f32 %v3435, %v3876
        %v4003 = vadd.f32 %v3436, %v3883
        %v4004 = vadd.f32 %v3437, %v3886
        %v4005 = vadd.f32 %v3438, %v3893
        %v4006 = vadd.f32 %v3439, %v3898
        %v4007 = vadd.f32 %v3440, %v3905
        %v4008 = vadd.f32 %v3441, %v3908
        %v4009 = vadd.f32 %v3442, %v3915
        %v4010 = vadd.f32 %v3443, %v3920
        %v4011 = vadd.f32 %v3444, %v3927
        %v4012 = vadd.f32 %v3445, %v3930
        %v4013 = vadd.f32 %v3446, %v3937
        %v4014 = vadd.f32 %v3447, %v3942
        %v4015 = vadd.f32 %v3448, %v3949
        %v4016 = vadd.f32 %v3449, %v3952
        %v4017 = vadd.f32 %v3450, %v3959
        %v4018 = vadd.f32 %v3451, %v3964
        %v4019 = vadd.f32 %v3452, %v3971
        %v4020 = vadd.f32 %v3453, %v3974
        %v4021 = vadd.f32 %v3454, %v3981
        %v4022 = vadd.f32 %v3455, %v3986
        %v4023 = vld [vmem:[#allocation2 + $0x20] sm:$0xf0]
        %s4024 = scalar_lea.vmem %s2, 28
        %v4025 = vld [vmem:[%s4024] sm:$0xf]
        %v4051 = vrot.slane %v4023, 4
        %v4052 = vrot.slane %v3457, 4
        %v4053 = vsel %vm809, %v4051, %v4052
        %v4054 = vrot.slane %v3458, 4
        %v4055 = vsel %vm809, %v4052, %v4054
        %v4056 = vrot.slane %v3459, 4
        %v4057 = vsel %vm809, %v4054, %v4056
        %v4058 = vrot.slane %v3460, 4
        %v4059 = vsel %vm809, %v4056, %v4058
        %v4060 = vrot.slane %v3461, 4
        %v4061 = vsel %vm809, %v4058, %v4060
        %v4062 = vrot.slane %v3462, 4
        %v4063 = vsel %vm809, %v4060, %v4062
        %v4064 = vrot.slane %v3463, 4
        %v4065 = vsel %vm809, %v4062, %v4064
        %v4066 = vrot.slane %v3464, 4
        %v4067 = vsel %vm809, %v4064, %v4066
        %v4068 = vrot.slane %v3465, 4
        %v4069 = vsel %vm809, %v4066, %v4068
        %v4070 = vrot.slane %v3466, 4
        %v4071 = vsel %vm809, %v4068, %v4070
        %v4072 = vrot.slane %v3467, 4
        %v4073 = vsel %vm809, %v4070, %v4072
        %v4074 = vrot.slane %v3468, 4
        %v4075 = vsel %vm809, %v4072, %v4074
        %v4076 = vrot.slane %v3469, 4
        %v4077 = vsel %vm809, %v4074, %v4076
        %v4078 = vrot.slane %v3470, 4
        %v4079 = vsel %vm809, %v4076, %v4078
        %v4080 = vrot.slane %v3471, 4
        %v4081 = vsel %vm809, %v4078, %v4080
        %v4082 = vrot.slane %v3472, 4
        %v4083 = vsel %vm809, %v4080, %v4082
        %v4084 = vrot.slane %v3473, 4
        %v4085 = vsel %vm809, %v4082, %v4084
        %v4086 = vrot.slane %v3474, 4
        %v4087 = vsel %vm809, %v4084, %v4086
        %v4088 = vrot.slane %v3475, 4
        %v4089 = vsel %vm809, %v4086, %v4088
        %v4090 = vrot.slane %v3476, 4
        %v4091 = vsel %vm809, %v4088, %v4090
        %v4092 = vrot.slane %v3477, 4
        %v4093 = vsel %vm809, %v4090, %v4092
        %v4094 = vrot.slane %v3478, 4
        %v4095 = vsel %vm809, %v4092, %v4094
        %v4096 = vrot.slane %v3479, 4
        %v4097 = vsel %vm809, %v4094, %v4096
        %v4098 = vrot.slane %v3480, 4
        %v4099 = vsel %vm809, %v4096, %v4098
        %v4101 = vsel %vm627, %v4053, 0
        %v4104 = vsel %vm627, %v4055, 0
        %v4107 = vsel %vm627, %v4057, 0
        %v4110 = vsel %vm627, %v4059, 0
        %v4113 = vsel %vm627, %v4061, 0
        %v4116 = vsel %vm627, %v4063, 0
        %v4119 = vsel %vm627, %v4065, 0
        %v4122 = vsel %vm627, %v4067, 0
        %v4125 = vsel %vm627, %v4069, 0
        %v4128 = vsel %vm627, %v4071, 0
        %v4131 = vsel %vm627, %v4073, 0
        %v4134 = vsel %vm627, %v4075, 0
        %v4137 = vsel %vm627, %v4077, 0
        %v4140 = vsel %vm627, %v4079, 0
        %v4143 = vsel %vm627, %v4081, 0
        %v4146 = vsel %vm627, %v4083, 0
        %v4149 = vsel %vm627, %v4085, 0
        %v4152 = vsel %vm627, %v4087, 0
        %v4155 = vsel %vm627, %v4089, 0
        %v4158 = vsel %vm627, %v4091, 0
        %v4161 = vsel %vm627, %v4093, 0
        %v4164 = vsel %vm627, %v4095, 0
        %v4167 = vsel %vm627, %v4097, 0
        %v4170 = vsel %vm627, %v4099, 0
        %v4173 = vsel %vm931, %v4025, 0
        %4175 = vmatprep.subr.bf16.mxu0 0
        %4176 = vmatpush1.bf16.msra.mxu0 %v4173
        %4177 = vmatprep.subr.bf16.mxu0 0
        %4178 = vmatpush1.bf16.msra.mxu0 0
        %4179 = vmatprep.subr.bf16.mxu0 0
        %4180 = vmatpush1.bf16.msra.mxu0 0
        %4181 = vmatprep.subr.bf16.mxu0 0
        %4182 = vmatpush1.bf16.msra.mxu0 0
        %4183 = vmatprep.subr.bf16.mxu0 0
        %4184 = vmatpush1.bf16.msra.mxu0 0
        %4185 = vmatprep.subr.bf16.mxu0 0
        %4186 = vmatpush1.bf16.msra.mxu0 0
        %4187 = vmatprep.subr.bf16.mxu0 0
        %4188 = vmatpush1.bf16.msra.mxu0 0
        %4189 = vmatprep.subr.bf16.mxu0 0
        %4190 = vmatpush1.bf16.msra.mxu0 0
        %4191 = vmatprep.subr.bf16.mxu0 0
        %4192 = vmatpush1.bf16.msra.mxu0 0
        %4193 = vmatprep.subr.bf16.mxu0 0
        %4194 = vmatpush1.bf16.msra.mxu0 0
        %4195 = vmatprep.subr.bf16.mxu0 0
        %4196 = vmatpush1.bf16.msra.mxu0 0
        %4197 = vmatprep.subr.bf16.mxu0 0
        %4198 = vmatpush1.bf16.msra.mxu0 0
        %4199 = vmatprep.subr.bf16.mxu0 0
        %4200 = vmatpush1.bf16.msra.mxu0 0
        %4201 = vmatprep.subr.bf16.mxu0 0
        %4202 = vmatpush1.bf16.msra.mxu0 0
        %4203 = vmatprep.subr.bf16.mxu0 0
        %4204 = vmatpush1.bf16.msra.mxu0 0
        %4205 = vmatprep.subr.bf16.mxu0 0
        %4206 = vmatpush1.bf16.msra.mxu0 0
        %4207 = vmatprep.mubr.bf16.mxu0 0
        %4208 = vmatmul.mubr.bf16.gmra.mrb[0].mxu0 %v4101
        %v4209 = vpop.f32.mrb[0].mxu0
        %v4210 = vadd.f32 0.0, %v4209
        %v4211 = vpop.f32.mrb[0].mxu0
        %v4212 = vpop.f32.mrb[0].mxu0
        %v4213 = vadd.f32 0.0, %v4212
        %v4214 = vpop.f32.mrb[0].mxu0
        %4215 = vmatprep.mubr.bf16.mxu0 0
        %4216 = vmatmul.mubr.bf16.gmra.mrb[0].mxu0 %v4104
        %v4217 = vpop.f32.mrb[0].mxu0
        %v4218 = vpop.f32.mrb[0].mxu0
        %v4219 = vpop.f32.mrb[0].mxu0
        %v4220 = vadd.f32 0.0, %v4219
        %v4221 = vpop.f32.mrb[0].mxu0
        %4222 = vmatprep.mubr.bf16.mxu0 0
        %4223 = vmatmul.mubr.bf16.gmra.mrb[0].mxu0 %v4107
        %v4224 = vpop.f32.mrb[0].mxu0
        %v4225 = vadd.f32 0.0, %v4224
        %v4226 = vpop.f32.mrb[0].mxu0
        %v4227 = vpop.f32.mrb[0].mxu0
        %v4228 = vpop.f32.mrb[0].mxu0
        %4229 = vmatprep.mubr.bf16.mxu0 0
        %4230 = vmatmul.mubr.bf16.gmra.mrb[0].mxu0 %v4110
        %v4231 = vpop.f32.mrb[0].mxu0
        %v4232 = vadd.f32 0.0, %v4231
        %v4233 = vpop.f32.mrb[0].mxu0
        %v4234 = vpop.f32.mrb[0].mxu0
        %v4235 = vadd.f32 0.0, %v4234
        %v4236 = vpop.f32.mrb[0].mxu0
        %4237 = vmatprep.mubr.bf16.mxu0 0
        %4238 = vmatmul.mubr.bf16.gmra.mrb[0].mxu0 %v4113
        %v4239 = vpop.f32.mrb[0].mxu0
        %v4240 = vpop.f32.mrb[0].mxu0
        %v4241 = vpop.f32.mrb[0].mxu0
        %v4242 = vadd.f32 0.0, %v4241
        %v4243 = vpop.f32.mrb[0].mxu0
        %4244 = vmatprep.mubr.bf16.mxu0 0
        %4245 = vmatmul.mubr.bf16.gmra.mrb[0].mxu0 %v4116
        %v4246 = vpop.f32.mrb[0].mxu0
        %v4247 = vadd.f32 0.0, %v4246
        %v4248 = vpop.f32.mrb[0].mxu0
        %v4249 = vpop.f32.mrb[0].mxu0
        %v4250 = vpop.f32.mrb[0].mxu0
        %4251 = vmatprep.mubr.bf16.mxu0 0
        %4252 = vmatmul.mubr.bf16.gmra.mrb[0].mxu0 %v4119
        %v4253 = vpop.f32.mrb[0].mxu0
        %v4254 = vadd.f32 0.0, %v4253
        %v4255 = vpop.f32.mrb[0].mxu0
        %v4256 = vpop.f32.mrb[0].mxu0
        %v4257 = vadd.f32 0.0, %v4256
        %v4258 = vpop.f32.mrb[0].mxu0
        %4259 = vmatprep.mubr.bf16.mxu0 0
        %4260 = vmatmul.mubr.bf16.gmra.mrb[0].mxu0 %v4122
        %v4261 = vpop.f32.mrb[0].mxu0
        %v4262 = vpop.f32.mrb[0].mxu0
        %v4263 = vpop.f32.mrb[0].mxu0
        %v4264 = vadd.f32 0.0, %v4263
        %v4265 = vpop.f32.mrb[0].mxu0
        %4266 = vmatprep.mubr.bf16.mxu0 0
        %4267 = vmatmul.mubr.bf16.gmra.mrb[0].mxu0 %v4125
        %v4268 = vpop.f32.mrb[0].mxu0
        %v4269 = vadd.f32 0.0, %v4268
        %v4270 = vpop.f32.mrb[0].mxu0
        %v4271 = vpop.f32.mrb[0].mxu0
        %v4272 = vpop.f32.mrb[0].mxu0
        %4273 = vmatprep.mubr.bf16.mxu0 0
        %4274 = vmatmul.mubr.bf16.gmra.mrb[0].mxu0 %v4128
        %v4275 = vpop.f32.mrb[0].mxu0
        %v4276 = vadd.f32 0.0, %v4275
        %v4277 = vpop.f32.mrb[0].mxu0
        %v4278 = vpop.f32.mrb[0].mxu0
        %v4279 = vadd.f32 0.0, %v4278
        %v4280 = vpop.f32.mrb[0].mxu0
        %4281 = vmatprep.mubr.bf16.mxu0 0
        %4282 = vmatmul.mubr.bf16.gmra.mrb[0].mxu0 %v4131
        %v4283 = vpop.f32.mrb[0].mxu0
        %v4284 = vpop.f32.mrb[0].mxu0
        %v4285 = vpop.f32.mrb[0].mxu0
        %v4286 = vadd.f32 0.0, %v4285
        %v4287 = vpop.f32.mrb[0].mxu0
        %4288 = vmatprep.mubr.bf16.mxu0 0
        %4289 = vmatmul.mubr.bf16.gmra.mrb[0].mxu0 %v4134
        %v4290 = vpop.f32.mrb[0].mxu0
        %v4291 = vadd.f32 0.0, %v4290
        %v4292 = vpop.f32.mrb[0].mxu0
        %v4293 = vpop.f32.mrb[0].mxu0
        %v4294 = vpop.f32.mrb[0].mxu0
        %4295 = vmatprep.mubr.bf16.mxu0 0
        %4296 = vmatmul.mubr.bf16.gmra.mrb[0].mxu0 %v4137
        %v4297 = vpop.f32.mrb[0].mxu0
        %v4298 = vadd.f32 0.0, %v4297
        %v4299 = vpop.f32.mrb[0].mxu0
        %v4300 = vpop.f32.mrb[0].mxu0
        %v4301 = vadd.f32 0.0, %v4300
        %v4302 = vpop.f32.mrb[0].mxu0
        %4303 = vmatprep.mubr.bf16.mxu0 0
        %4304 = vmatmul.mubr.bf16.gmra.mrb[0].mxu0 %v4140
        %v4305 = vpop.f32.mrb[0].mxu0
        %v4306 = vpop.f32.mrb[0].mxu0
        %v4307 = vpop.f32.mrb[0].mxu0
        %v4308 = vadd.f32 0.0, %v4307
        %v4309 = vpop.f32.mrb[0].mxu0
        %4310 = vmatprep.mubr.bf16.mxu0 0
        %4311 = vmatmul.mubr.bf16.gmra.mrb[0].mxu0 %v4143
        %v4312 = vpop.f32.mrb[0].mxu0
        %v4313 = vadd.f32 0.0, %v4312
        %v4314 = vpop.f32.mrb[0].mxu0
        %v4315 = vpop.f32.mrb[0].mxu0
        %v4316 = vpop.f32.mrb[0].mxu0
        %4317 = vmatprep.mubr.bf16.mxu0 0
        %4318 = vmatmul.mubr.bf16.gmra.mrb[0].mxu0 %v4146
        %v4319 = vpop.f32.mrb[0].mxu0
        %v4320 = vadd.f32 0.0, %v4319
        %v4321 = vpop.f32.mrb[0].mxu0
        %v4322 = vpop.f32.mrb[0].mxu0
        %v4323 = vadd.f32 0.0, %v4322
        %v4324 = vpop.f32.mrb[0].mxu0
        %4325 = vmatprep.mubr.bf16.mxu0 0
        %4326 = vmatmul.mubr.bf16.gmra.mrb[0].mxu0 %v4149
        %v4327 = vpop.f32.mrb[0].mxu0
        %v4328 = vpop.f32.mrb[0].mxu0
        %v4329 = vpop.f32.mrb[0].mxu0
        %v4330 = vadd.f32 0.0, %v4329
        %v4331 = vpop.f32.mrb[0].mxu0
        %4332 = vmatprep.mubr.bf16.mxu0 0
        %4333 = vmatmul.mubr.bf16.gmra.mrb[0].mxu0 %v4152
        %v4334 = vpop.f32.mrb[0].mxu0
        %v4335 = vadd.f32 0.0, %v4334
        %v4336 = vpop.f32.mrb[0].mxu0
        %v4337 = vpop.f32.mrb[0].mxu0
        %v4338 = vpop.f32.mrb[0].mxu0
        %4339 = vmatprep.mubr.bf16.mxu0 0
        %4340 = vmatmul.mubr.bf16.gmra.mrb[0].mxu0 %v4155
        %v4341 = vpop.f32.mrb[0].mxu0
        %v4342 = vadd.f32 0.0, %v4341
        %v4343 = vpop.f32.mrb[0].mxu0
        %v4344 = vpop.f32.mrb[0].mxu0
        %v4345 = vadd.f32 0.0, %v4344
        %v4346 = vpop.f32.mrb[0].mxu0
        %4347 = vmatprep.mubr.bf16.mxu0 0
        %4348 = vmatmul.mubr.bf16.gmra.mrb[0].mxu0 %v4158
        %v4349 = vpop.f32.mrb[0].mxu0
        %v4350 = vpop.f32.mrb[0].mxu0
        %v4351 = vpop.f32.mrb[0].mxu0
        %v4352 = vadd.f32 0.0, %v4351
        %v4353 = vpop.f32.mrb[0].mxu0
        %4354 = vmatprep.mubr.bf16.mxu0 0
        %4355 = vmatmul.mubr.bf16.gmra.mrb[0].mxu0 %v4161
        %v4356 = vpop.f32.mrb[0].mxu0
        %v4357 = vadd.f32 0.0, %v4356
        %v4358 = vpop.f32.mrb[0].mxu0
        %v4359 = vpop.f32.mrb[0].mxu0
        %v4360 = vpop.f32.mrb[0].mxu0
        %4361 = vmatprep.mubr.bf16.mxu0 0
        %4362 = vmatmul.mubr.bf16.gmra.mrb[0].mxu0 %v4164
        %v4363 = vpop.f32.mrb[0].mxu0
        %v4364 = vadd.f32 0.0, %v4363
        %v4365 = vpop.f32.mrb[0].mxu0
        %v4366 = vpop.f32.mrb[0].mxu0
        %v4367 = vadd.f32 0.0, %v4366
        %v4368 = vpop.f32.mrb[0].mxu0
        %4369 = vmatprep.mubr.bf16.mxu0 0
        %4370 = vmatmul.mubr.bf16.gmra.mrb[0].mxu0 %v4167
        %v4371 = vpop.f32.mrb[0].mxu0
        %v4372 = vpop.f32.mrb[0].mxu0
        %v4373 = vpop.f32.mrb[0].mxu0
        %v4374 = vadd.f32 0.0, %v4373
        %v4375 = vpop.f32.mrb[0].mxu0
        %4376 = vmatprep.mubr.bf16.mxu0 0
        %4377 = vmatmul.mubr.bf16.gmra.mrb[0].mxu0 %v4170
        %v4378 = vpop.f32.mrb[0].mxu0
        %v4379 = vadd.f32 0.0, %v4378
        %v4380 = vpop.f32.mrb[0].mxu0
        %v4381 = vpop.f32.mrb[0].mxu0
        %v4382 = vpop.f32.mrb[0].mxu0
        %4383 = vdwg.mxu0
        %v4384 = vadd.f32 %v3991, %v4210
        %v4385 = vadd.f32 %v3992, %v4213
        %v4386 = vadd.f32 %v3993, %v4220
        %v4387 = vadd.f32 %v3994, %v4225
        %v4388 = vadd.f32 %v3995, %v4232
        %v4389 = vadd.f32 %v3996, %v4235
        %v4390 = vadd.f32 %v3997, %v4242
        %v4391 = vadd.f32 %v3998, %v4247
        %v4392 = vadd.f32 %v3999, %v4254
        %v4393 = vadd.f32 %v4000, %v4257
        %v4394 = vadd.f32 %v4001, %v4264
        %v4395 = vadd.f32 %v4002, %v4269
        %v4396 = vadd.f32 %v4003, %v4276
        %v4397 = vadd.f32 %v4004, %v4279
        %v4398 = vadd.f32 %v4005, %v4286
        %v4399 = vadd.f32 %v4006, %v4291
        %v4400 = vadd.f32 %v4007, %v4298
        %v4401 = vadd.f32 %v4008, %v4301
        %v4402 = vadd.f32 %v4009, %v4308
        %v4403 = vadd.f32 %v4010, %v4313
        %v4404 = vadd.f32 %v4011, %v4320
        %v4405 = vadd.f32 %v4012, %v4323
        %v4406 = vadd.f32 %v4013, %v4330
        %v4407 = vadd.f32 %v4014, %v4335
        %v4408 = vadd.f32 %v4015, %v4342
        %v4409 = vadd.f32 %v4016, %v4345
        %v4410 = vadd.f32 %v4017, %v4352
        %v4411 = vadd.f32 %v4018, %v4357
        %v4412 = vadd.f32 %v4019, %v4364
        %v4413 = vadd.f32 %v4020, %v4367
        %v4414 = vadd.f32 %v4021, %v4374
        %v4415 = vadd.f32 %v4022, %v4379
        %v4416 = vld [vmem:[#allocation2 + $0xe0] sm:$0x1f]
        %s4417 = scalar_lea.vmem %s2, 32
        %v4418 = vld [vmem:[%s4417] sm:$0xf]
        %v4420 = vshrl.u32 %v4023, 16
        %v4422 = vrot.slane %v4420, 4
        %v4423 = vshll.u32 %v4023, 16
        %v4425 = vrot.slane %v4423, 5
        %v4426 = vor.u32 %v4422, %v4425
        %v4427 = vrot.slane %v3492, 4
        %v4428 = vrot.slane %v3495, 5
        %v4429 = vor.u32 %v4427, %v4428
        %v4430 = vsel %vm1656, %v4426, %v4429
        %v4431 = vrot.slane %v3501, 4
        %v4432 = vrot.slane %v3504, 5
        %v4433 = vor.u32 %v4431, %v4432
        %v4434 = vsel %vm1656, %v4429, %v4433
        %v4435 = vrot.slane %v3510, 4
        %v4436 = vrot.slane %v3513, 5
        %v4437 = vor.u32 %v4435, %v4436
        %v4438 = vsel %vm1656, %v4433, %v4437
        %v4439 = vrot.slane %v3519, 4
        %v4440 = vrot.slane %v3522, 5
        %v4441 = vor.u32 %v4439, %v4440
        %v4442 = vsel %vm1656, %v4437, %v4441
        %v4443 = vrot.slane %v3528, 4
        %v4444 = vrot.slane %v3531, 5
        %v4445 = vor.u32 %v4443, %v4444
        %v4446 = vsel %vm1656, %v4441, %v4445
        %v4447 = vrot.slane %v3537, 4
        %v4448 = vrot.slane %v3540, 5
        %v4449 = vor.u32 %v4447, %v4448
        %v4450 = vsel %vm1656, %v4445, %v4449
        %v4451 = vrot.slane %v3546, 4
        %v4452 = vrot.slane %v3549, 5
        %v4453 = vor.u32 %v4451, %v4452
        %v4454 = vsel %vm1656, %v4449, %v4453
        %v4455 = vrot.slane %v3555, 4
        %v4456 = vrot.slane %v3558, 5
        %v4457 = vor.u32 %v4455, %v4456
        %v4458 = vsel %vm1656, %v4453, %v4457
        %v4459 = vrot.slane %v3564, 4
        %v4460 = vrot.slane %v3567, 5
        %v4461 = vor.u32 %v4459, %v4460
        %v4462 = vsel %vm1656, %v4457, %v4461
        %v4463 = vrot.slane %v3573, 4
        %v4464 = vrot.slane %v3576, 5
        %v4465 = vor.u32 %v4463, %v4464
        %v4466 = vsel %vm1656, %v4461, %v4465
        %v4467 = vrot.slane %v3582, 4
        %v4468 = vrot.slane %v3585, 5
        %v4469 = vor.u32 %v4467, %v4468
        %v4470 = vsel %vm1656, %v4465, %v4469
        %v4471 = vrot.slane %v3591, 4
        %v4472 = vrot.slane %v3594, 5
        %v4473 = vor.u32 %v4471, %v4472
        %v4474 = vsel %vm1656, %v4469, %v4473
        %v4475 = vrot.slane %v3600, 4
        %v4476 = vrot.slane %v3603, 5
        %v4477 = vor.u32 %v4475, %v4476
        %v4478 = vsel %vm1656, %v4473, %v4477
        %v4479 = vrot.slane %v3609, 4
        %v4480 = vrot.slane %v3612, 5
        %v4481 = vor.u32 %v4479, %v4480
        %v4482 = vsel %vm1656, %v4477, %v4481
        %v4483 = vrot.slane %v3618, 4
        %v4484 = vrot.slane %v3621, 5
        %v4485 = vor.u32 %v4483, %v4484
        %v4486 = vsel %vm1656, %v4481, %v4485
        %v4487 = vrot.slane %v3627, 4
        %v4488 = vrot.slane %v3630, 5
        %v4489 = vor.u32 %v4487, %v4488
        %v4490 = vsel %vm1656, %v4485, %v4489
        %v4491 = vrot.slane %v3636, 4
        %v4492 = vrot.slane %v3639, 5
        %v4493 = vor.u32 %v4491, %v4492
        %v4494 = vsel %vm1656, %v4489, %v4493
        %v4495 = vrot.slane %v3645, 4
        %v4496 = vrot.slane %v3648, 5
        %v4497 = vor.u32 %v4495, %v4496
        %v4498 = vsel %vm1656, %v4493, %v4497
        %v4499 = vrot.slane %v3654, 4
        %v4500 = vrot.slane %v3657, 5
        %v4501 = vor.u32 %v4499, %v4500
        %v4502 = vsel %vm1656, %v4497, %v4501
        %v4503 = vrot.slane %v3663, 4
        %v4504 = vrot.slane %v3666, 5
        %v4505 = vor.u32 %v4503, %v4504
        %v4506 = vsel %vm1656, %v4501, %v4505
        %v4507 = vrot.slane %v3672, 4
        %v4508 = vrot.slane %v3675, 5
        %v4509 = vor.u32 %v4507, %v4508
        %v4510 = vsel %vm1656, %v4505, %v4509
        %v4511 = vrot.slane %v3681, 4
        %v4512 = vrot.slane %v3684, 5
        %v4513 = vor.u32 %v4511, %v4512
        %v4514 = vsel %vm1656, %v4509, %v4513
        %v4515 = vrot.slane %v3690, 4
        %v4516 = vrot.slane %v3693, 5
        %v4517 = vor.u32 %v4515, %v4516
        %v4518 = vsel %vm1656, %v4513, %v4517
        %v4520 = vshrl.u32 %v4416, 16
        %v4522 = vrot.slane %v4520, 4
        %v4523 = vshll.u32 %v4416, 16
        %v4525 = vrot.slane %v4523, 5
        %v4526 = vor.u32 %v4522, %v4525
        %v4527 = vsel %vm1656, %v4517, %v4526
        %v4529 = vsel %vm627, %v4430, 0
        %v4532 = vsel %vm627, %v4434, 0
        %v4535 = vsel %vm627, %v4438, 0
        %v4538 = vsel %vm627, %v4442, 0
        %v4541 = vsel %vm627, %v4446, 0
        %v4544 = vsel %vm627, %v4450, 0
        %v4547 = vsel %vm627, %v4454, 0
        %v4550 = vsel %vm627, %v4458, 0
        %v4553 = vsel %vm627, %v4462, 0
        %v4556 = vsel %vm627, %v4466, 0
        %v4559 = vsel %vm627, %v4470, 0
        %v4562 = vsel %vm627, %v4474, 0
        %v4565 = vsel %vm627, %v4478, 0
        %v4568 = vsel %vm627, %v4482, 0
        %v4571 = vsel %vm627, %v4486, 0
        %v4574 = vsel %vm627, %v4490, 0
        %v4577 = vsel %vm627, %v4494, 0
        %v4580 = vsel %vm627, %v4498, 0
        %v4583 = vsel %vm627, %v4502, 0
        %v4586 = vsel %vm627, %v4506, 0
        %v4589 = vsel %vm627, %v4510, 0
        %v4592 = vsel %vm627, %v4514, 0
        %v4595 = vsel %vm627, %v4518, 0
        %v4598 = vsel %vm627, %v4527, 0
        %v4601 = vsel %vm931, %v4418, 0
        %4603 = vmatprep.subr.bf16.mxu0 0
        %4604 = vmatpush1.bf16.msra.mxu0 %v4601
        %4605 = vmatprep.subr.bf16.mxu0 0
        %4606 = vmatpush1.bf16.msra.mxu0 0
        %4607 = vmatprep.subr.bf16.mxu0 0
        %4608 = vmatpush1.bf16.msra.mxu0 0
        %4609 = vmatprep.subr.bf16.mxu0 0
        %4610 = vmatpush1.bf16.msra.mxu0 0
        %4611 = vmatprep.subr.bf16.mxu0 0
        %4612 = vmatpush1.bf16.msra.mxu0 0
        %4613 = vmatprep.subr.bf16.mxu0 0
        %4614 = vmatpush1.bf16.msra.mxu0 0
        %4615 = vmatprep.subr.bf16.mxu0 0
        %4616 = vmatpush1.bf16.msra.mxu0 0
        %4617 = vmatprep.subr.bf16.mxu0 0
        %4618 = vmatpush1.bf16.msra.mxu0 0
        %4619 = vmatprep.subr.bf16.mxu0 0
        %4620 = vmatpush1.bf16.msra.mxu0 0
        %4621 = vmatprep.subr.bf16.mxu0 0
        %4622 = vmatpush1.bf16.msra.mxu0 0
        %4623 = vmatprep.subr.bf16.mxu0 0
        %4624 = vmatpush1.bf16.msra.mxu0 0
        %4625 = vmatprep.subr.bf16.mxu0 0
        %4626 = vmatpush1.bf16.msra.mxu0 0
        %4627 = vmatprep.subr.bf16.mxu0 0
        %4628 = vmatpush1.bf16.msra.mxu0 0
        %4629 = vmatprep.subr.bf16.mxu0 0
        %4630 = vmatpush1.bf16.msra.mxu0 0
        %4631 = vmatprep.subr.bf16.mxu0 0
        %4632 = vmatpush1.bf16.msra.mxu0 0
        %4633 = vmatprep.subr.bf16.mxu0 0
        %4634 = vmatpush1.bf16.msra.mxu0 0
        %4635 = vmatprep.mubr.bf16.mxu0 0
        %4636 = vmatmul.mubr.bf16.gmra.mrb[0].mxu0 %v4529
        %v4637 = vpop.f32.mrb[0].mxu0
        %v4638 = vadd.f32 0.0, %v4637
        %v4639 = vpop.f32.mrb[0].mxu0
        %v4640 = vpop.f32.mrb[0].mxu0
        %v4641 = vadd.f32 0.0, %v4640
        %v4642 = vpop.f32.mrb[0].mxu0
        %4643 = vmatprep.mubr.bf16.mxu0 0
        %4644 = vmatmul.mubr.bf16.gmra.mrb[0].mxu0 %v4532
        %v4645 = vpop.f32.mrb[0].mxu0
        %v4646 = vpop.f32.mrb[0].mxu0
        %v4647 = vpop.f32.mrb[0].mxu0
        %v4648 = vadd.f32 0.0, %v4647
        %v4649 = vpop.f32.mrb[0].mxu0
        %4650 = vmatprep.mubr.bf16.mxu0 0
        %4651 = vmatmul.mubr.bf16.gmra.mrb[0].mxu0 %v4535
        %v4652 = vpop.f32.mrb[0].mxu0
        %v4653 = vadd.f32 0.0, %v4652
        %v4654 = vpop.f32.mrb[0].mxu0
        %v4655 = vpop.f32.mrb[0].mxu0
        %v4656 = vpop.f32.mrb[0].mxu0
        %4657 = vmatprep.mubr.bf16.mxu0 0
        %4658 = vmatmul.mubr.bf16.gmra.mrb[0].mxu0 %v4538
        %v4659 = vpop.f32.mrb[0].mxu0
        %v4660 = vadd.f32 0.0, %v4659
        %v4661 = vpop.f32.mrb[0].mxu0
        %v4662 = vpop.f32.mrb[0].mxu0
        %v4663 = vadd.f32 0.0, %v4662
        %v4664 = vpop.f32.mrb[0].mxu0
        %4665 = vmatprep.mubr.bf16.mxu0 0
        %4666 = vmatmul.mubr.bf16.gmra.mrb[0].mxu0 %v4541
        %v4667 = vpop.f32.mrb[0].mxu0
        %v4668 = vpop.f32.mrb[0].mxu0
        %v4669 = vpop.f32.mrb[0].mxu0
        %v4670 = vadd.f32 0.0, %v4669
        %v4671 = vpop.f32.mrb[0].mxu0
        %4672 = vmatprep.mubr.bf16.mxu0 0
        %4673 = vmatmul.mubr.bf16.gmra.mrb[0].mxu0 %v4544
        %v4674 = vpop.f32.mrb[0].mxu0
        %v4675 = vadd.f32 0.0, %v4674
        %v4676 = vpop.f32.mrb[0].mxu0
        %v4677 = vpop.f32.mrb[0].mxu0
        %v4678 = vpop.f32.mrb[0].mxu0
        %4679 = vmatprep.mubr.bf16.mxu0 0
        %4680 = vmatmul.mubr.bf16.gmra.mrb[0].mxu0 %v4547
        %v4681 = vpop.f32.mrb[0].mxu0
        %v4682 = vadd.f32 0.0, %v4681
        %v4683 = vpop.f32.mrb[0].mxu0
        %v4684 = vpop.f32.mrb[0].mxu0
        %v4685 = vadd.f32 0.0, %v4684
        %v4686 = vpop.f32.mrb[0].mxu0
        %4687 = vmatprep.mubr.bf16.mxu0 0
        %4688 = vmatmul.mubr.bf16.gmra.mrb[0].mxu0 %v4550
        %v4689 = vpop.f32.mrb[0].mxu0
        %v4690 = vpop.f32.mrb[0].mxu0
        %v4691 = vpop.f32.mrb[0].mxu0
        %v4692 = vadd.f32 0.0, %v4691
        %v4693 = vpop.f32.mrb[0].mxu0
        %4694 = vmatprep.mubr.bf16.mxu0 0
        %4695 = vmatmul.mubr.bf16.gmra.mrb[0].mxu0 %v4553
        %v4696 = vpop.f32.mrb[0].mxu0
        %v4697 = vadd.f32 0.0, %v4696
        %v4698 = vpop.f32.mrb[0].mxu0
        %v4699 = vpop.f32.mrb[0].mxu0
        %v4700 = vpop.f32.mrb[0].mxu0
        %4701 = vmatprep.mubr.bf16.mxu0 0
        %4702 = vmatmul.mubr.bf16.gmra.mrb[0].mxu0 %v4556
        %v4703 = vpop.f32.mrb[0].mxu0
        %v4704 = vadd.f32 0.0, %v4703
        %v4705 = vpop.f32.mrb[0].mxu0
        %v4706 = vpop.f32.mrb[0].mxu0
        %v4707 = vadd.f32 0.0, %v4706
        %v4708 = vpop.f32.mrb[0].mxu0
        %4709 = vmatprep.mubr.bf16.mxu0 0
        %4710 = vmatmul.mubr.bf16.gmra.mrb[0].mxu0 %v4559
        %v4711 = vpop.f32.mrb[0].mxu0
        %v4712 = vpop.f32.mrb[0].mxu0
        %v4713 = vpop.f32.mrb[0].mxu0
        %v4714 = vadd.f32 0.0, %v4713
        %v4715 = vpop.f32.mrb[0].mxu0
        %4716 = vmatprep.mubr.bf16.mxu0 0
        %4717 = vmatmul.mubr.bf16.gmra.mrb[0].mxu0 %v4562
        %v4718 = vpop.f32.mrb[0].mxu0
        %v4719 = vadd.f32 0.0, %v4718
        %v4720 = vpop.f32.mrb[0].mxu0
        %v4721 = vpop.f32.mrb[0].mxu0
        %v4722 = vpop.f32.mrb[0].mxu0
        %4723 = vmatprep.mubr.bf16.mxu0 0
        %4724 = vmatmul.mubr.bf16.gmra.mrb[0].mxu0 %v4565
        %v4725 = vpop.f32.mrb[0].mxu0
        %v4726 = vadd.f32 0.0, %v4725
        %v4727 = vpop.f32.mrb[0].mxu0
        %v4728 = vpop.f32.mrb[0].mxu0
        %v4729 = vadd.f32 0.0, %v4728
        %v4730 = vpop.f32.mrb[0].mxu0
        %4731 = vmatprep.mubr.bf16.mxu0 0
        %4732 = vmatmul.mubr.bf16.gmra.mrb[0].mxu0 %v4568
        %v4733 = vpop.f32.mrb[0].mxu0
        %v4734 = vpop.f32.mrb[0].mxu0
        %v4735 = vpop.f32.mrb[0].mxu0
        %v4736 = vadd.f32 0.0, %v4735
        %v4737 = vpop.f32.mrb[0].mxu0
        %4738 = vmatprep.mubr.bf16.mxu0 0
        %4739 = vmatmul.mubr.bf16.gmra.mrb[0].mxu0 %v4571
        %v4740 = vpop.f32.mrb[0].mxu0
        %v4741 = vadd.f32 0.0, %v4740
        %v4742 = vpop.f32.mrb[0].mxu0
        %v4743 = vpop.f32.mrb[0].mxu0
        %v4744 = vpop.f32.mrb[0].mxu0
        %4745 = vmatprep.mubr.bf16.mxu0 0
        %4746 = vmatmul.mubr.bf16.gmra.mrb[0].mxu0 %v4574
        %v4747 = vpop.f32.mrb[0].mxu0
        %v4748 = vadd.f32 0.0, %v4747
        %v4749 = vpop.f32.mrb[0].mxu0
        %v4750 = vpop.f32.mrb[0].mxu0
        %v4751 = vadd.f32 0.0, %v4750
        %v4752 = vpop.f32.mrb[0].mxu0
        %4753 = vmatprep.mubr.bf16.mxu0 0
        %4754 = vmatmul.mubr.bf16.gmra.mrb[0].mxu0 %v4577
        %v4755 = vpop.f32.mrb[0].mxu0
        %v4756 = vpop.f32.mrb[0].mxu0
        %v4757 = vpop.f32.mrb[0].mxu0
        %v4758 = vadd.f32 0.0, %v4757
        %v4759 = vpop.f32.mrb[0].mxu0
        %4760 = vmatprep.mubr.bf16.mxu0 0
        %4761 = vmatmul.mubr.bf16.gmra.mrb[0].mxu0 %v4580
        %v4762 = vpop.f32.mrb[0].mxu0
        %v4763 = vadd.f32 0.0, %v4762
        %v4764 = vpop.f32.mrb[0].mxu0
        %v4765 = vpop.f32.mrb[0].mxu0
        %v4766 = vpop.f32.mrb[0].mxu0
        %4767 = vmatprep.mubr.bf16.mxu0 0
        %4768 = vmatmul.mubr.bf16.gmra.mrb[0].mxu0 %v4583
        %v4769 = vpop.f32.mrb[0].mxu0
        %v4770 = vadd.f32 0.0, %v4769
        %v4771 = vpop.f32.mrb[0].mxu0
        %v4772 = vpop.f32.mrb[0].mxu0
        %v4773 = vadd.f32 0.0, %v4772
        %v4774 = vpop.f32.mrb[0].mxu0
        %4775 = vmatprep.mubr.bf16.mxu0 0
        %4776 = vmatmul.mubr.bf16.gmra.mrb[0].mxu0 %v4586
        %v4777 = vpop.f32.mrb[0].mxu0
        %v4778 = vpop.f32.mrb[0].mxu0
        %v4779 = vpop.f32.mrb[0].mxu0
        %v4780 = vadd.f32 0.0, %v4779
        %v4781 = vpop.f32.mrb[0].mxu0
        %4782 = vmatprep.mubr.bf16.mxu0 0
        %4783 = vmatmul.mubr.bf16.gmra.mrb[0].mxu0 %v4589
        %v4784 = vpop.f32.mrb[0].mxu0
        %v4785 = vadd.f32 0.0, %v4784
        %v4786 = vpop.f32.mrb[0].mxu0
        %v4787 = vpop.f32.mrb[0].mxu0
        %v4788 = vpop.f32.mrb[0].mxu0
        %4789 = vmatprep.mubr.bf16.mxu0 0
        %4790 = vmatmul.mubr.bf16.gmra.mrb[0].mxu0 %v4592
        %v4791 = vpop.f32.mrb[0].mxu0
        %v4792 = vadd.f32 0.0, %v4791
        %v4793 = vpop.f32.mrb[0].mxu0
        %v4794 = vpop.f32.mrb[0].mxu0
        %v4795 = vadd.f32 0.0, %v4794
        %v4796 = vpop.f32.mrb[0].mxu0
        %4797 = vmatprep.mubr.bf16.mxu0 0
        %4798 = vmatmul.mubr.bf16.gmra.mrb[0].mxu0 %v4595
        %v4799 = vpop.f32.mrb[0].mxu0
        %v4800 = vpop.f32.mrb[0].mxu0
        %v4801 = vpop.f32.mrb[0].mxu0
        %v4802 = vadd.f32 0.0, %v4801
        %v4803 = vpop.f32.mrb[0].mxu0
        %4804 = vmatprep.mubr.bf16.mxu0 0
        %4805 = vmatmul.mubr.bf16.gmra.mrb[0].mxu0 %v4598
        %v4806 = vpop.f32.mrb[0].mxu0
        %v4807 = vadd.f32 0.0, %v4806
        %v4808 = vpop.f32.mrb[0].mxu0
        %v4809 = vpop.f32.mrb[0].mxu0
        %v4810 = vpop.f32.mrb[0].mxu0
        %4811 = vdwg.mxu0
        %v4812 = vadd.f32 %v4384, %v4638
        %v4813 = vadd.f32 %v4385, %v4641
        %v4814 = vadd.f32 %v4386, %v4648
        %v4815 = vadd.f32 %v4387, %v4653
        %v4816 = vadd.f32 %v4388, %v4660
        %v4817 = vadd.f32 %v4389, %v4663
        %v4818 = vadd.f32 %v4390, %v4670
        %v4819 = vadd.f32 %v4391, %v4675
        %v4820 = vadd.f32 %v4392, %v4682
        %v4821 = vadd.f32 %v4393, %v4685
        %v4822 = vadd.f32 %v4394, %v4692
        %v4823 = vadd.f32 %v4395, %v4697
        %v4824 = vadd.f32 %v4396, %v4704
        %v4825 = vadd.f32 %v4397, %v4707
        %v4826 = vadd.f32 %v4398, %v4714
        %v4827 = vadd.f32 %v4399, %v4719
        %v4828 = vadd.f32 %v4400, %v4726
        %v4829 = vadd.f32 %v4401, %v4729
        %v4830 = vadd.f32 %v4402, %v4736
        %v4831 = vadd.f32 %v4403, %v4741
        %v4832 = vadd.f32 %v4404, %v4748
        %v4833 = vadd.f32 %v4405, %v4751
        %v4834 = vadd.f32 %v4406, %v4758
        %v4835 = vadd.f32 %v4407, %v4763
        %v4836 = vadd.f32 %v4408, %v4770
        %v4837 = vadd.f32 %v4409, %v4773
        %v4838 = vadd.f32 %v4410, %v4780
        %v4839 = vadd.f32 %v4411, %v4785
        %v4840 = vadd.f32 %v4412, %v4792
        %v4841 = vadd.f32 %v4413, %v4795
        %v4842 = vadd.f32 %v4414, %v4802
        %v4843 = vadd.f32 %v4415, %v4807
        %v4844 = vld [vmem:[%s5] sm:$0x1]
        %v4846 = vlaneseq
        %v4847 = vshrl.u32 %v4846, 7
        %v4848 = vsub.s32 0, %v4847
        %v4849 = vrot.slane %v4844, %v4848
        %v4851 = vadd.f32 %v4812, %v4849
        %v4852 = vadd.f32 %v4813, %v4849
        %v4853 = vadd.f32 %v4814, %v4849
        %v4854 = vadd.f32 %v4815, %v4849
        %v4855 = vadd.f32 %v4816, %v4849
        %v4856 = vadd.f32 %v4817, %v4849
        %v4857 = vadd.f32 %v4818, %v4849
        %v4858 = vadd.f32 %v4819, %v4849
        %v4859 = vadd.f32 %v4820, %v4849
        %v4860 = vadd.f32 %v4821, %v4849
        %v4861 = vadd.f32 %v4822, %v4849
        %v4862 = vadd.f32 %v4823, %v4849
        %v4863 = vadd.f32 %v4824, %v4849
        %v4864 = vadd.f32 %v4825, %v4849
        %v4865 = vadd.f32 %v4826, %v4849
        %v4866 = vadd.f32 %v4827, %v4849
        %v4867 = vadd.f32 %v4828, %v4849
        %v4868 = vadd.f32 %v4829, %v4849
        %v4869 = vadd.f32 %v4830, %v4849
        %v4870 = vadd.f32 %v4831, %v4849
        %v4871 = vadd.f32 %v4832, %v4849
        %v4872 = vadd.f32 %v4833, %v4849
        %v4873 = vadd.f32 %v4834, %v4849
        %v4874 = vadd.f32 %v4835, %v4849
        %v4875 = vadd.f32 %v4836, %v4849
        %v4876 = vadd.f32 %v4837, %v4849
        %v4877 = vadd.f32 %v4838, %v4849
        %v4878 = vadd.f32 %v4839, %v4849
        %v4879 = vadd.f32 %v4840, %v4849
        %v4880 = vadd.f32 %v4841, %v4849
        %v4881 = vadd.f32 %v4842, %v4849
        %v4882 = vadd.f32 %v4843, %v4849
        %v4883 = vmax.f32 %v4851, 0.0
        %v4884 = vmax.f32 %v4852, 0.0
        %v4885 = vmax.f32 %v4853, 0.0
        %v4886 = vmax.f32 %v4854, 0.0
        %v4887 = vmax.f32 %v4855, 0.0
        %v4888 = vmax.f32 %v4856, 0.0
        %v4889 = vmax.f32 %v4857, 0.0
        %v4890 = vmax.f32 %v4858, 0.0
        %v4891 = vmax.f32 %v4859, 0.0
        %v4892 = vmax.f32 %v4860, 0.0
        %v4893 = vmax.f32 %v4861, 0.0
        %v4894 = vmax.f32 %v4862, 0.0
        %v4895 = vmax.f32 %v4863, 0.0
        %v4896 = vmax.f32 %v4864, 0.0
        %v4897 = vmax.f32 %v4865, 0.0
        %v4898 = vmax.f32 %v4866, 0.0
        %v4899 = vmax.f32 %v4867, 0.0
        %v4900 = vmax.f32 %v4868, 0.0
        %v4901 = vmax.f32 %v4869, 0.0
        %v4902 = vmax.f32 %v4870, 0.0
        %v4903 = vmax.f32 %v4871, 0.0
        %v4904 = vmax.f32 %v4872, 0.0
        %v4905 = vmax.f32 %v4873, 0.0
        %v4906 = vmax.f32 %v4874, 0.0
        %v4907 = vmax.f32 %v4875, 0.0
        %v4908 = vmax.f32 %v4876, 0.0
        %v4909 = vmax.f32 %v4877, 0.0
        %v4910 = vmax.f32 %v4878, 0.0
        %v4911 = vmax.f32 %v4879, 0.0
        %v4912 = vmax.f32 %v4880, 0.0
        %v4913 = vmax.f32 %v4881, 0.0
        %v4914 = vmax.f32 %v4882, 0.0
        %v4915 = vpack.c.bf16 %v4884, %v4883
        %v4916 = vpack.c.bf16 %v4886, %v4885
        %v4917 = vpack.c.bf16 %v4888, %v4887
        %v4918 = vpack.c.bf16 %v4890, %v4889
        %v4919 = vpack.c.bf16 %v4892, %v4891
        %v4920 = vpack.c.bf16 %v4894, %v4893
        %v4921 = vpack.c.bf16 %v4896, %v4895
        %v4922 = vpack.c.bf16 %v4898, %v4897
        %v4923 = vpack.c.bf16 %v4900, %v4899
        %v4924 = vpack.c.bf16 %v4902, %v4901
        %v4925 = vpack.c.bf16 %v4904, %v4903
        %v4926 = vpack.c.bf16 %v4906, %v4905
        %v4927 = vpack.c.bf16 %v4908, %v4907
        %v4928 = vpack.c.bf16 %v4910, %v4909
        %v4929 = vpack.c.bf16 %v4912, %v4911
        %v4930 = vpack.c.bf16 %v4914, %v4913
        %v4931 = vld [vmem:[%s3] sm:$0xf]
        %v4932 = vld [vmem:[%s6] sm:$0x1]
        %v4934 = vlaneseq
        %v4935 = vshrl.u32 %v4934, 7
        %v4936 = vsub.s32 0, %v4935
        %v4937 = vrot.slane %v4932, %v4936
        %v4940 = vsel %vm627, %v4915, 0
        %v4943 = vsel %vm627, %v4916, 0
        %v4946 = vsel %vm627, %v4917, 0
        %v4949 = vsel %vm627, %v4918, 0
        %v4952 = vsel %vm627, %v4919, 0
        %v4955 = vsel %vm627, %v4920, 0
        %v4958 = vsel %vm627, %v4921, 0
        %v4961 = vsel %vm627, %v4922, 0
        %v4964 = vsel %vm627, %v4923, 0
        %v4967 = vsel %vm627, %v4924, 0
        %v4970 = vsel %vm627, %v4925, 0
        %v4973 = vsel %vm627, %v4926, 0
        %v4976 = vsel %vm627, %v4927, 0
        %v4979 = vsel %vm627, %v4928, 0
        %v4982 = vsel %vm627, %v4929, 0
        %v4985 = vsel %vm627, %v4930, 0
        %v4988 = vsel %vm931, %v4931, 0
        %4990 = vmatprep.subr.bf16.mxu0 0
        %4991 = vmatpush1.bf16.msra.mxu0 %v4988
        %4992 = vmatprep.subr.bf16.mxu0 0
        %4993 = vmatpush1.bf16.msra.mxu0 0
        %4994 = vmatprep.subr.bf16.mxu0 0
        %4995 = vmatpush1.bf16.msra.mxu0 0
        %4996 = vmatprep.subr.bf16.mxu0 0
        %4997 = vmatpush1.bf16.msra.mxu0 0
        %4998 = vmatprep.subr.bf16.mxu0 0
        %4999 = vmatpush1.bf16.msra.mxu0 0
        %5000 = vmatprep.subr.bf16.mxu0 0
        %5001 = vmatpush1.bf16.msra.mxu0 0
        %5002 = vmatprep.subr.bf16.mxu0 0
        %5003 = vmatpush1.bf16.msra.mxu0 0
        %5004 = vmatprep.subr.bf16.mxu0 0
        %5005 = vmatpush1.bf16.msra.mxu0 0
        %5006 = vmatprep.subr.bf16.mxu0 0
        %5007 = vmatpush1.bf16.msra.mxu0 0
        %5008 = vmatprep.subr.bf16.mxu0 0
        %5009 = vmatpush1.bf16.msra.mxu0 0
        %5010 = vmatprep.subr.bf16.mxu0 0
        %5011 = vmatpush1.bf16.msra.mxu0 0
        %5012 = vmatprep.subr.bf16.mxu0 0
        %5013 = vmatpush1.bf16.msra.mxu0 0
        %5014 = vmatprep.subr.bf16.mxu0 0
        %5015 = vmatpush1.bf16.msra.mxu0 0
        %5016 = vmatprep.subr.bf16.mxu0 0
        %5017 = vmatpush1.bf16.msra.mxu0 0
        %5018 = vmatprep.subr.bf16.mxu0 0
        %5019 = vmatpush1.bf16.msra.mxu0 0
        %5020 = vmatprep.subr.bf16.mxu0 0
        %5021 = vmatpush1.bf16.msra.mxu0 0
        %5022 = vmatprep.mubr.bf16.mxu0 0
        %5023 = vmatmul.mubr.bf16.gmra.mrb[0].mxu0 %v4940
        %v5024 = vpop.f32.mrb[0].mxu0
        %v5025 = vadd.f32 %v4937, %v5024
        %v5026 = vpop.f32.mrb[0].mxu0
        %v5027 = vpop.f32.mrb[0].mxu0
        %v5028 = vadd.f32 %v4937, %v5027
        %v5029 = vpop.f32.mrb[0].mxu0
        %5030 = vmatprep.mubr.bf16.mxu0 0
        %5031 = vmatmul.mubr.bf16.gmra.mrb[0].mxu0 %v4943
        %v5032 = vpop.f32.mrb[0].mxu0
        %v5033 = vadd.f32 %v4937, %v5032
        %v5034 = vpop.f32.mrb[0].mxu0
        %v5035 = vpop.f32.mrb[0].mxu0
        %v5036 = vadd.f32 %v4937, %v5035
        %v5037 = vpop.f32.mrb[0].mxu0
        %5038 = vmatprep.mubr.bf16.mxu0 0
        %5039 = vmatmul.mubr.bf16.gmra.mrb[0].mxu0 %v4946
        %v5040 = vpop.f32.mrb[0].mxu0
        %v5041 = vadd.f32 %v4937, %v5040
        %v5042 = vpop.f32.mrb[0].mxu0
        %v5043 = vpop.f32.mrb[0].mxu0
        %v5044 = vadd.f32 %v4937, %v5043
        %v5045 = vpop.f32.mrb[0].mxu0
        %5046 = vmatprep.mubr.bf16.mxu0 0
        %5047 = vmatmul.mubr.bf16.gmra.mrb[0].mxu0 %v4949
        %v5048 = vpop.f32.mrb[0].mxu0
        %v5049 = vadd.f32 %v4937, %v5048
        %v5050 = vpop.f32.mrb[0].mxu0
        %v5051 = vpop.f32.mrb[0].mxu0
        %v5052 = vadd.f32 %v4937, %v5051
        %v5053 = vpop.f32.mrb[0].mxu0
        %5054 = vmatprep.mubr.bf16.mxu0 0
        %5055 = vmatmul.mubr.bf16.gmra.mrb[0].mxu0 %v4952
        %v5056 = vpop.f32.mrb[0].mxu0
        %v5057 = vadd.f32 %v4937, %v5056
        %v5058 = vpop.f32.mrb[0].mxu0
        %v5059 = vpop.f32.mrb[0].mxu0
        %v5060 = vadd.f32 %v4937, %v5059
        %v5061 = vpop.f32.mrb[0].mxu0
        %5062 = vmatprep.mubr.bf16.mxu0 0
        %5063 = vmatmul.mubr.bf16.gmra.mrb[0].mxu0 %v4955
        %v5064 = vpop.f32.mrb[0].mxu0
        %v5065 = vadd.f32 %v4937, %v5064
        %v5066 = vpop.f32.mrb[0].mxu0
        %v5067 = vpop.f32.mrb[0].mxu0
        %v5068 = vadd.f32 %v4937, %v5067
        %v5069 = vpop.f32.mrb[0].mxu0
        %5070 = vmatprep.mubr.bf16.mxu0 0
        %5071 = vmatmul.mubr.bf16.gmra.mrb[0].mxu0 %v4958
        %v5072 = vpop.f32.mrb[0].mxu0
        %v5073 = vadd.f32 %v4937, %v5072
        %v5074 = vpop.f32.mrb[0].mxu0
        %v5075 = vpop.f32.mrb[0].mxu0
        %v5076 = vadd.f32 %v4937, %v5075
        %v5077 = vpop.f32.mrb[0].mxu0
        %5078 = vmatprep.mubr.bf16.mxu0 0
        %5079 = vmatmul.mubr.bf16.gmra.mrb[0].mxu0 %v4961
        %v5080 = vpop.f32.mrb[0].mxu0
        %v5081 = vadd.f32 %v4937, %v5080
        %v5082 = vpop.f32.mrb[0].mxu0
        %v5083 = vpop.f32.mrb[0].mxu0
        %v5084 = vadd.f32 %v4937, %v5083
        %v5085 = vpop.f32.mrb[0].mxu0
        %5086 = vmatprep.mubr.bf16.mxu0 0
        %5087 = vmatmul.mubr.bf16.gmra.mrb[0].mxu0 %v4964
        %v5088 = vpop.f32.mrb[0].mxu0
        %v5089 = vadd.f32 %v4937, %v5088
        %v5090 = vpop.f32.mrb[0].mxu0
        %v5091 = vpop.f32.mrb[0].mxu0
        %v5092 = vadd.f32 %v4937, %v5091
        %v5093 = vpop.f32.mrb[0].mxu0
        %5094 = vmatprep.mubr.bf16.mxu0 0
        %5095 = vmatmul.mubr.bf16.gmra.mrb[0].mxu0 %v4967
        %v5096 = vpop.f32.mrb[0].mxu0
        %v5097 = vadd.f32 %v4937, %v5096
        %v5098 = vpop.f32.mrb[0].mxu0
        %v5099 = vpop.f32.mrb[0].mxu0
        %v5100 = vadd.f32 %v4937, %v5099
        %v5101 = vpop.f32.mrb[0].mxu0
        %5102 = vmatprep.mubr.bf16.mxu0 0
        %5103 = vmatmul.mubr.bf16.gmra.mrb[0].mxu0 %v4970
        %v5104 = vpop.f32.mrb[0].mxu0
        %v5105 = vadd.f32 %v4937, %v5104
        %v5106 = vpop.f32.mrb[0].mxu0
        %v5107 = vpop.f32.mrb[0].mxu0
        %v5108 = vadd.f32 %v4937, %v5107
        %v5109 = vpop.f32.mrb[0].mxu0
        %5110 = vmatprep.mubr.bf16.mxu0 0
        %5111 = vmatmul.mubr.bf16.gmra.mrb[0].mxu0 %v4973
        %v5112 = vpop.f32.mrb[0].mxu0
        %v5113 = vadd.f32 %v4937, %v5112
        %v5114 = vpop.f32.mrb[0].mxu0
        %v5115 = vpop.f32.mrb[0].mxu0
        %v5116 = vadd.f32 %v4937, %v5115
        %v5117 = vpop.f32.mrb[0].mxu0
        %5118 = vmatprep.mubr.bf16.mxu0 0
        %5119 = vmatmul.mubr.bf16.gmra.mrb[0].mxu0 %v4976
        %v5120 = vpop.f32.mrb[0].mxu0
        %v5121 = vadd.f32 %v4937, %v5120
        %v5122 = vpop.f32.mrb[0].mxu0
        %v5123 = vpop.f32.mrb[0].mxu0
        %v5124 = vadd.f32 %v4937, %v5123
        %v5125 = vpop.f32.mrb[0].mxu0
        %5126 = vmatprep.mubr.bf16.mxu0 0
        %5127 = vmatmul.mubr.bf16.gmra.mrb[0].mxu0 %v4979
        %v5128 = vpop.f32.mrb[0].mxu0
        %v5129 = vadd.f32 %v4937, %v5128
        %v5130 = vpop.f32.mrb[0].mxu0
        %v5131 = vpop.f32.mrb[0].mxu0
        %v5132 = vadd.f32 %v4937, %v5131
        %v5133 = vpop.f32.mrb[0].mxu0
        %5134 = vmatprep.mubr.bf16.mxu0 0
        %5135 = vmatmul.mubr.bf16.gmra.mrb[0].mxu0 %v4982
        %v5136 = vpop.f32.mrb[0].mxu0
        %v5137 = vadd.f32 %v4937, %v5136
        %v5138 = vpop.f32.mrb[0].mxu0
        %v5139 = vpop.f32.mrb[0].mxu0
        %v5140 = vadd.f32 %v4937, %v5139
        %v5141 = vpop.f32.mrb[0].mxu0
        %5142 = vmatprep.mubr.bf16.mxu0 0
        %5143 = vmatmul.mubr.bf16.gmra.mrb[0].mxu0 %v4985
        %v5144 = vpop.f32.mrb[0].mxu0
        %v5145 = vadd.f32 %v4937, %v5144
        %v5146 = vpop.f32.mrb[0].mxu0
        %v5147 = vpop.f32.mrb[0].mxu0
        %v5148 = vadd.f32 %v4937, %v5147
        %v5149 = vpop.f32.mrb[0].mxu0
        %5150 = vdwg.mxu0
        %v5151 = vunpack.c.l.bf16 %v330
        %v5152 = vunpack.c.h.bf16 %v330
        %v5153 = vunpack.c.l.bf16 %v331
        %v5154 = vunpack.c.h.bf16 %v331
        %v5155 = vunpack.c.l.bf16 %v332
        %v5156 = vunpack.c.h.bf16 %v332
        %v5157 = vunpack.c.l.bf16 %v333
        %v5158 = vunpack.c.h.bf16 %v333
        %v5159 = vunpack.c.l.bf16 %v334
        %v5160 = vunpack.c.h.bf16 %v334
        %v5161 = vunpack.c.l.bf16 %v335
        %v5162 = vunpack.c.h.bf16 %v335
        %v5163 = vunpack.c.l.bf16 %v336
        %v5164 = vunpack.c.h.bf16 %v336
        %v5165 = vunpack.c.l.bf16 %v337
        %v5166 = vunpack.c.h.bf16 %v337
        %v5167 = vunpack.c.l.bf16 %v338
        %v5168 = vunpack.c.h.bf16 %v338
        %v5169 = vunpack.c.l.bf16 %v339
        %v5170 = vunpack.c.h.bf16 %v339
        %v5171 = vunpack.c.l.bf16 %v340
        %v5172 = vunpack.c.h.bf16 %v340
        %v5173 = vunpack.c.l.bf16 %v341
        %v5174 = vunpack.c.h.bf16 %v341
        %v5175 = vunpack.c.l.bf16 %v342
        %v5176 = vunpack.c.h.bf16 %v342
        %v5177 = vunpack.c.l.bf16 %v343
        %v5178 = vunpack.c.h.bf16 %v343
        %v5179 = vunpack.c.l.bf16 %v344
        %v5180 = vunpack.c.h.bf16 %v344
        %v5181 = vunpack.c.l.bf16 %v345
        %v5182 = vunpack.c.h.bf16 %v345
        %v5183 = vadd.f32 %v5025, %v5151
        %v5184 = vadd.f32 %v5028, %v5152
        %v5185 = vadd.f32 %v5033, %v5153
        %v5186 = vadd.f32 %v5036, %v5154
        %v5187 = vadd.f32 %v5041, %v5155
        %v5188 = vadd.f32 %v5044, %v5156
        %v5189 = vadd.f32 %v5049, %v5157
        %v5190 = vadd.f32 %v5052, %v5158
        %v5191 = vadd.f32 %v5057, %v5159
        %v5192 = vadd.f32 %v5060, %v5160
        %v5193 = vadd.f32 %v5065, %v5161
        %v5194 = vadd.f32 %v5068, %v5162
        %v5195 = vadd.f32 %v5073, %v5163
        %v5196 = vadd.f32 %v5076, %v5164
        %v5197 = vadd.f32 %v5081, %v5165
        %v5198 = vadd.f32 %v5084, %v5166
        %v5199 = vadd.f32 %v5089, %v5167
        %v5200 = vadd.f32 %v5092, %v5168
        %v5201 = vadd.f32 %v5097, %v5169
        %v5202 = vadd.f32 %v5100, %v5170
        %v5203 = vadd.f32 %v5105, %v5171
        %v5204 = vadd.f32 %v5108, %v5172
        %v5205 = vadd.f32 %v5113, %v5173
        %v5206 = vadd.f32 %v5116, %v5174
        %v5207 = vadd.f32 %v5121, %v5175
        %v5208 = vadd.f32 %v5124, %v5176
        %v5209 = vadd.f32 %v5129, %v5177
        %v5210 = vadd.f32 %v5132, %v5178
        %v5211 = vadd.f32 %v5137, %v5179
        %v5212 = vadd.f32 %v5140, %v5180
        %v5213 = vadd.f32 %v5145, %v5181
        %v5214 = vadd.f32 %v5148, %v5182
        %v5215 = vmax.f32 %v5183, 0.0
        %v5216 = vmax.f32 %v5184, 0.0
        %v5217 = vmax.f32 %v5185, 0.0
        %v5218 = vmax.f32 %v5186, 0.0
        %v5219 = vmax.f32 %v5187, 0.0
        %v5220 = vmax.f32 %v5188, 0.0
        %v5221 = vmax.f32 %v5189, 0.0
        %v5222 = vmax.f32 %v5190, 0.0
        %v5223 = vmax.f32 %v5191, 0.0
        %v5224 = vmax.f32 %v5192, 0.0
        %v5225 = vmax.f32 %v5193, 0.0
        %v5226 = vmax.f32 %v5194, 0.0
        %v5227 = vmax.f32 %v5195, 0.0
        %v5228 = vmax.f32 %v5196, 0.0
        %v5229 = vmax.f32 %v5197, 0.0
        %v5230 = vmax.f32 %v5198, 0.0
        %v5231 = vmax.f32 %v5199, 0.0
        %v5232 = vmax.f32 %v5200, 0.0
        %v5233 = vmax.f32 %v5201, 0.0
        %v5234 = vmax.f32 %v5202, 0.0
        %v5235 = vmax.f32 %v5203, 0.0
        %v5236 = vmax.f32 %v5204, 0.0
        %v5237 = vmax.f32 %v5205, 0.0
        %v5238 = vmax.f32 %v5206, 0.0
        %v5239 = vmax.f32 %v5207, 0.0
        %v5240 = vmax.f32 %v5208, 0.0
        %v5241 = vmax.f32 %v5209, 0.0
        %v5242 = vmax.f32 %v5210, 0.0
        %v5243 = vmax.f32 %v5211, 0.0
        %v5244 = vmax.f32 %v5212, 0.0
        %v5245 = vmax.f32 %v5213, 0.0
        %v5246 = vmax.f32 %v5214, 0.0
        %v5247 = vpack.c.bf16 %v5216, %v5215
        %v5248 = vpack.c.bf16 %v5218, %v5217
        %v5249 = vpack.c.bf16 %v5220, %v5219
        %v5250 = vpack.c.bf16 %v5222, %v5221
        %v5251 = vpack.c.bf16 %v5224, %v5223
        %v5252 = vpack.c.bf16 %v5226, %v5225
        %v5253 = vpack.c.bf16 %v5228, %v5227
        %v5254 = vpack.c.bf16 %v5230, %v5229
        %v5255 = vpack.c.bf16 %v5232, %v5231
        %v5256 = vpack.c.bf16 %v5234, %v5233
        %v5257 = vpack.c.bf16 %v5236, %v5235
        %v5258 = vpack.c.bf16 %v5238, %v5237
        %v5259 = vpack.c.bf16 %v5240, %v5239
        %v5260 = vpack.c.bf16 %v5242, %v5241
        %v5261 = vpack.c.bf16 %v5244, %v5243
        %v5262 = vpack.c.bf16 %v5246, %v5245
        %v5279 = vunpack.c.l.b16 %v5247
        %v5280 = vunpack.c.h.b16 %v5247
        %v5281 = vunpack.c.l.b16 %v5248
        %v5282 = vunpack.c.h.b16 %v5248
        %v5283 = vunpack.c.l.b16 %v5249
        %v5284 = vunpack.c.h.b16 %v5249
        %v5285 = vunpack.c.l.b16 %v5250
        %v5286 = vunpack.c.h.b16 %v5250
        %v5287 = vunpack.c.l.b16 %v5251
        %v5288 = vunpack.c.h.b16 %v5251
        %v5289 = vunpack.c.l.b16 %v5252
        %v5290 = vunpack.c.h.b16 %v5252
        %v5291 = vunpack.c.l.b16 %v5253
        %v5292 = vunpack.c.h.b16 %v5253
        %v5293 = vunpack.c.l.b16 %v5254
        %v5294 = vunpack.c.h.b16 %v5254
        %v5295 = vunpack.c.l.b16 %v5255
        %v5296 = vunpack.c.h.b16 %v5255
        %v5297 = vunpack.c.l.b16 %v5256
        %v5298 = vunpack.c.h.b16 %v5256
        %v5299 = vunpack.c.l.b16 %v5257
        %v5300 = vunpack.c.h.b16 %v5257
        %v5301 = vunpack.c.l.b16 %v5258
        %v5302 = vunpack.c.h.b16 %v5258
        %v5303 = vunpack.c.l.b16 %v5259
        %v5304 = vunpack.c.h.b16 %v5259
        %v5305 = vunpack.c.l.b16 %v5260
        %v5306 = vunpack.c.h.b16 %v5260
        %v5307 = vunpack.c.l.b16 %v5261
        %v5308 = vunpack.c.h.b16 %v5261
        %v5309 = vunpack.c.l.b16 %v5262
        %v5310 = vunpack.c.h.b16 %v5262
        %v5311 = vpack.c.b16 %v5279, %v5279
        %v5312 = vpack.c.b16 %v5280, %v5280
        %v5313 = vpack.c.b16 %v5281, %v5281
        %v5314 = vpack.c.b16 %v5282, %v5282
        %v5315 = vpack.c.b16 %v5283, %v5283
        %v5316 = vpack.c.b16 %v5284, %v5284
        %v5317 = vpack.c.b16 %v5285, %v5285
        %v5318 = vpack.c.b16 %v5286, %v5286
        %v5319 = vpack.c.b16 %v5287, %v5287
        %v5320 = vpack.c.b16 %v5288, %v5288
        %v5321 = vpack.c.b16 %v5289, %v5289
        %v5322 = vpack.c.b16 %v5290, %v5290
        %v5323 = vpack.c.b16 %v5291, %v5291
        %v5324 = vpack.c.b16 %v5292, %v5292
        %v5325 = vpack.c.b16 %v5293, %v5293
        %v5326 = vpack.c.b16 %v5294, %v5294
        %v5327 = vpack.c.b16 %v5295, %v5295
        %v5328 = vpack.c.b16 %v5296, %v5296
        %v5329 = vpack.c.b16 %v5297, %v5297
        %v5330 = vpack.c.b16 %v5298, %v5298
        %v5331 = vpack.c.b16 %v5299, %v5299
        %v5332 = vpack.c.b16 %v5300, %v5300
        %v5333 = vpack.c.b16 %v5301, %v5301
        %v5334 = vpack.c.b16 %v5302, %v5302
        %v5335 = vpack.c.b16 %v5303, %v5303
        %v5336 = vpack.c.b16 %v5304, %v5304
        %v5337 = vpack.c.b16 %v5305, %v5305
        %v5338 = vpack.c.b16 %v5306, %v5306
        %v5339 = vpack.c.b16 %v5307, %v5307
        %v5340 = vpack.c.b16 %v5308, %v5308
        %v5341 = vpack.c.b16 %v5309, %v5309
        %v5342 = vpack.c.b16 %v5310, %v5310
        %vm5375 = vcmask 257024
        %5376 = vst.msk [vmem:[%s296] sm:$0xf] %vm5375, %v5311
        %5377 = vst.msk [vmem:[%s296 + $0x4] sm:$0xf] %vm5375, %v5312
        %5378 = vst.msk [vmem:[%s296 + $0x8] sm:$0xf] %vm5375, %v5313
        %5379 = vst.msk [vmem:[%s296 + $0xc] sm:$0xf] %vm5375, %v5314
        %5380 = vst.msk [vmem:[%s296 + $0x10] sm:$0xf] %vm5375, %v5315
        %5381 = vst.msk [vmem:[%s296 + $0x14] sm:$0xf] %vm5375, %v5316
        %5382 = vst.msk [vmem:[%s296 + $0x18] sm:$0xf] %vm5375, %v5317
        %5383 = vst.msk [vmem:[%s296 + $0x1c] sm:$0xf] %vm5375, %v5318
        %5384 = vst.msk [vmem:[%s296 + $0x20] sm:$0xf] %vm5375, %v5319
        %5385 = vst.msk [vmem:[%s296 + $0x24] sm:$0xf] %vm5375, %v5320
        %5386 = vst.msk [vmem:[%s296 + $0x28] sm:$0xf] %vm5375, %v5321
        %5387 = vst.msk [vmem:[%s296 + $0x2c] sm:$0xf] %vm5375, %v5322
        %5388 = vst.msk [vmem:[%s296 + $0x30] sm:$0xf] %vm5375, %v5323
        %5389 = vst.msk [vmem:[%s296 + $0x34] sm:$0xf] %vm5375, %v5324
        %5390 = vst.msk [vmem:[%s296 + $0x38] sm:$0xf] %vm5375, %v5325
        %5391 = vst.msk [vmem:[%s296 + $0x3c] sm:$0xf] %vm5375, %v5326
        %5392 = vst.msk [vmem:[%s296 + $0x40] sm:$0xf] %vm5375, %v5327
        %5393 = vst.msk [vmem:[%s296 + $0x44] sm:$0xf] %vm5375, %v5328
        %5394 = vst.msk [vmem:[%s296 + $0x48] sm:$0xf] %vm5375, %v5329
        %5395 = vst.msk [vmem:[%s296 + $0x4c] sm:$0xf] %vm5375, %v5330
        %5396 = vst.msk [vmem:[%s296 + $0x50] sm:$0xf] %vm5375, %v5331
        %5397 = vst.msk [vmem:[%s296 + $0x54] sm:$0xf] %vm5375, %v5332
        %5398 = vst.msk [vmem:[%s296 + $0x58] sm:$0xf] %vm5375, %v5333
        %5399 = vst.msk [vmem:[%s296 + $0x5c] sm:$0xf] %vm5375, %v5334
        %5400 = vst.msk [vmem:[%s296 + $0x60] sm:$0xf] %vm5375, %v5335
        %5401 = vst.msk [vmem:[%s296 + $0x64] sm:$0xf] %vm5375, %v5336
        %5402 = vst.msk [vmem:[%s296 + $0x68] sm:$0xf] %vm5375, %v5337
        %5403 = vst.msk [vmem:[%s296 + $0x6c] sm:$0xf] %vm5375, %v5338
        %5404 = vst.msk [vmem:[%s296 + $0x70] sm:$0xf] %vm5375, %v5339
        %5405 = vst.msk [vmem:[%s296 + $0x74] sm:$0xf] %vm5375, %v5340
        %5406 = vst.msk [vmem:[%s296 + $0x78] sm:$0xf] %vm5375, %v5341
        %5407 = vst.msk [vmem:[%s296 + $0x7c] sm:$0xf] %vm5375, %v5342
        %s5408 = sand.u32 %s184, 1
        %s5409 = scalar_lea.sflag [#allocation5], %s5408
        %s5410 = sand.u32 %s184, 1
        %s5411 = smul.addr %s5410, 128
        %s5412 = scalar_lea.vmem [#allocation6], %s5411
        // Predicated region
        $region53: #{tpu_custom_call.1} parent=47 // pred_check
          %p5413 = pneg %p194
        $region54: #{tpu_custom_call.1} parent=47 // pred_check_branch
          %5415 = sbr.rel (%p5413) target = $region56
        $region55: #{tpu_custom_call.1} parent=47 // pred_region
          %s5417 = ssub.s32 2048, 2048
          %5418 = vsyncadd %s5409, %s5417
          %s5419 = smul.addr %s24, 32
          %s5420 = smul.addr %s5419, 64
          %s5421 = scalar_lea.hbm %s7, %s5420
          %s5422 = sshll.u32 %s5412, 4
          %s5423 = int_to_ptr.vmem [resolvable:$true] %s5422
          %5428 = dma.vmem_to_hbm [thread:$0]  %s5423, 2048, %s5421, %s5409, 64, 64, 4
        $region56: #{tpu_custom_call.1} parent=47 // pred_fallthru
          _
      $region48: #{tpu_custom_call.1} parent=5 // pred_fallthru
        _
      %p5429 = scmp.le.s32.totalorder 2, %s19
      // Predicated region
      $region57: #{tpu_custom_call.1} parent=5 // pred_check
        %p5430 = pneg %p5429
      $region58: #{tpu_custom_call.1} parent=5 // pred_check_branch
        %5432 = sbr.rel (%p5430) target = $region60
      $region59: #{tpu_custom_call.1} parent=5 // pred_region
        %s5433 = ssub.s32 %s19, 2
        // Predicated region
        $region61: #{tpu_custom_call.1} parent=59 // pred_check
          %p5434 = pneg %p200
        $region62: #{tpu_custom_call.1} parent=59 // pred_check_branch
          %5436 = sbr.rel (%p5434) target = $region64
        $region63: #{tpu_custom_call.1} parent=59 // pred_region
          %s5437 = sand.u32 %s185, 1
          %s5438 = scalar_lea.sflag [#allocation5], %s5437
          %s5439 = sand.u32 %s185, 1
          %s5440 = smul.addr %s5439, 128
          %s5441 = scalar_lea.vmem [#allocation6], %s5440
          %5442 = dma.done %s5438, 2048
        $region64: #{tpu_custom_call.1} parent=59 // pred_fallthru
          _
      $region60: #{tpu_custom_call.1} parent=5 // pred_fallthru
        _
    $region6: #{tpu_custom_call.1} parent=1 // loop_footer
      %s23 = sadd.s32 1, %s19
    $region7: #{tpu_custom_call.1} parent=1 // loop_footer_branch
      %18 = sbr.rel target = $region3
    $region8: #{tpu_custom_call.1} parent=1 // loop_exit
      _
    %5443 = vsyncpa [#allocation4], 1
    %s5444 = scalar_lea.sflag [#allocation4], 1
    %5445 = vsyncpa %s5444, 1
    %5446 = vsyncpa [#allocation5], 1
    %s5447 = scalar_lea.sflag [#allocation5], 1
    %5448 = vsyncpa %s5447, 1

</llo_original>
